<compile_context>
chip_gen: v7x
topology: tpu7x:2x2x1
jax: 0.10.0
libtpu: 0.0.40
codegen_flags: <defaults>
</compile_context>

<pallas_src>
import jax
import jax.numpy as jnp
from jax import lax
from jax.experimental import pallas as pl
from jax.experimental.pallas import tpu as pltpu


def res_eg_kernel(x_ref, src_ref, dst_ref, ef_ref, ea_ref,
                  we_s_ref, we_d_ref, we_f_ref, we_a_ref, be_ref,
                  wn_x_ref, wn_a_ref, bn_ref,
                  x1_ref, e1_ref,
                  xs_ref, xd_ref, xwn_ref, agg_ref):
    t = pl.program_id(0)
    n_pad = agg_ref.shape[0]      # padded node count (lane-dense)
    te = ef_ref.shape[0]          # edge tile size

    # One-time prologue (hoisted out of the edge loop): node projections for the
    # edge MLP and for the node update, plus accumulator init.  Exact: one-hot
    # selection commutes with the projection.
    @pl.when(t == 0)
    def _init():
        x0 = x_ref[...]
        xs_ref[...] = jnp.dot(x0, we_s_ref[...],
                              preferred_element_type=jnp.float32).astype(jnp.bfloat16)
        xd_ref[...] = jnp.dot(x0, we_d_ref[...],
                              preferred_element_type=jnp.float32).astype(jnp.bfloat16)
        xwn_ref[...] = jnp.dot(x0, wn_x_ref[...],
                               preferred_element_type=jnp.float32)
        agg_ref[...] = jnp.zeros_like(agg_ref)

    # Build transposed one-hot gather/scatter matrices in-kernel from the int32
    # index tiles (no O(E*N) HBM traffic).  Padded edges carry idx = -1, which
    # never matches the iota -> all-zero column (no gather, no scatter).
    node_iota = lax.broadcasted_iota(jnp.int32, (n_pad, te), 0)     # [N_pad, TE]
    src_oh_t = (node_iota == src_ref[...]).astype(jnp.bfloat16)     # [N_pad, TE]
    dst_oh_t = (node_iota == dst_ref[...]).astype(jnp.bfloat16)     # [N_pad, TE]

    # Gather projected node features per edge (transposed-lhs MXU feed, bf16 in,
    # f32 accumulate): gs[e] = xs[src[e]], gd[e] = xd[dst[e]].
    gs = lax.dot_general(src_oh_t, xs_ref[...],
                         dimension_numbers=(((0,), (0,)), ((), ())),
                         preferred_element_type=jnp.float32)        # [TE, Fe_pad]
    gd = lax.dot_general(dst_oh_t, xd_ref[...],
                         dimension_numbers=(((0,), (0,)), ((), ())),
                         preferred_element_type=jnp.float32)        # [TE, Fe_pad]

    ef = ef_ref[...]                                                # [TE, Fe_pad] f32
    ea = ea_ref[...]                                                # [TE, Fe_pad] f32
    pre_e = (gs + gd
             + jnp.dot(ef, we_f_ref[...], preferred_element_type=jnp.float32)
             + jnp.dot(ea, we_a_ref[...], preferred_element_type=jnp.float32)
             + be_ref[...])
    m = jnp.maximum(pre_e, 0.0)                                     # [TE, Fe_pad]

    # Residual edge update, streamed out per tile (aliased onto edge_attr; the
    # e1 out_spec MUST stay identical to the edge_attr in_spec for this alias).
    e1_ref[...] = ea + m

    # Scatter-add to destination nodes: plain MXU dot, bf16 feed, f32 accumulate.
    agg_ref[...] += jnp.dot(dst_oh_t, m.astype(jnp.bfloat16),
                            preferred_element_type=jnp.float32)     # [N_pad, Fe_pad]

    # Node update at the last edge tile (x @ Wn_x was hoisted to t == 0).
    @pl.when(t == pl.num_programs(0) - 1)
    def _finalize():
        pre_n = (xwn_ref[...]
                 + jnp.dot(agg_ref[...], wn_a_ref[...],
                           preferred_element_type=jnp.float32)
                 + bn_ref[...])
        x1_ref[...] = x_ref[...] + jnp.maximum(pre_n, 0.0)


def _round_up(v, m):
    return (v + m - 1) // m * m


def _pad2(a, rows, cols):
    r, c = a.shape
    return jnp.pad(a.astype(jnp.float32), ((0, rows - r), (0, cols - c)))


def res_eg_forward(x, edge_index, edge_f, edge_attr, params, *, edge_tile=512):
    """Wrapper mirroring ResEG.forward: returns (x_1, e_1)."""
    assert edge_tile % 128 == 0, "edge tile must be lane/sublane aligned"
    N, F = x.shape
    E, Fe = edge_attr.shape

    TE = edge_tile
    F_pad = _round_up(F, 128)          # lane-dense feature dims
    Fe_pad = _round_up(Fe, 128)
    N_pad = _round_up(N, 128)
    E_pad = _round_up(E, TE)
    n_tiles = E_pad // TE

    edge_index = edge_index.astype(jnp.int32)          # .long() in torch
    pad_e = E_pad - E
    neg = -jnp.ones((pad_e,), jnp.int32)               # pad edges -> idx -1 (no-op rows)
    src_p = jnp.concatenate([edge_index[0], neg]).reshape(1, E_pad)
    dst_p = jnp.concatenate([edge_index[1], neg]).reshape(1, E_pad)

    x_p = _pad2(x, N_pad, F_pad)
    ef_p = _pad2(edge_f, E_pad, Fe_pad)
    ea_p = _pad2(edge_attr, E_pad, Fe_pad)

    we_s = _pad2(params["we_s"], F_pad, Fe_pad)
    we_d = _pad2(params["we_d"], F_pad, Fe_pad)
    we_f = _pad2(params["we_f"], Fe_pad, Fe_pad)
    we_a = _pad2(params["we_a"], Fe_pad, Fe_pad)
    be_p = _pad2(params["be"], 1, Fe_pad)
    wn_x = _pad2(params["wn_x"], F_pad, F_pad)
    wn_a = _pad2(params["wn_a"], Fe_pad, F_pad)
    bn_p = _pad2(params["bn"], 1, F_pad)

    idx_spec = pl.BlockSpec((1, TE), lambda t: (0, t))          # lane-dense index tiles
    edge_spec = pl.BlockSpec((TE, Fe_pad), lambda t: (t, 0))    # streamed edge tiles

    def const(shape):
        # Grid-invariant operand (constant block index -> stays resident).
        return pl.BlockSpec(shape, lambda t: (0, 0))

    in_specs = [
        const((N_pad, F_pad)),     # x (resident)
        idx_spec,                  # src indices
        idx_spec,                  # dst indices
        edge_spec,                 # edge_f
        edge_spec,                 # edge_attr  (input #4, aliased onto e1)
        const((F_pad, Fe_pad)),    # we_s
        const((F_pad, Fe_pad)),    # we_d
        const((Fe_pad, Fe_pad)),   # we_f
        const((Fe_pad, Fe_pad)),   # we_a
        const((1, Fe_pad)),        # be
        const((F_pad, F_pad)),     # wn_x
        const((Fe_pad, F_pad)),    # wn_a
        const((1, F_pad)),         # bn
    ]
    out_specs = (const((N_pad, F_pad)),   # x1 (written at last edge tile)
                 edge_spec)               # e1 (same spec as edge_attr -> alias safe)

    # Advisory cost estimate.
    flops = (n_tiles * (2 * 2 * N_pad * TE * Fe_pad        # one-hot gathers
                        + 2 * 2 * TE * Fe_pad * Fe_pad     # ef/ea MLP terms
                        + 2 * N_pad * TE * Fe_pad)         # scatter
             + 2 * 2 * N_pad * F_pad * Fe_pad              # xs, xd prologue
             + 2 * N_pad * F_pad * F_pad                   # x @ wn_x prologue
             + 2 * N_pad * Fe_pad * F_pad)                 # agg @ wn_a finalize
    bytes_accessed = ((x_p.size + ef_p.size + ea_p.size
                       + we_s.size + we_d.size + we_f.size + we_a.size
                       + wn_x.size + wn_a.size + be_p.size + bn_p.size) * 4
                      + (src_p.size + dst_p.size) * 4
                      + (N_pad * F_pad + E_pad * Fe_pad) * 4)
    cost = pl.CostEstimate(flops=int(flops), transcendentals=0,
                           bytes_accessed=int(bytes_accessed))

    # VMEM budget (correct column dims), with headroom below the physical limit.
    resident = (N_pad * F_pad                 # x
                + 2 * F_pad * Fe_pad          # we_s, we_d
                + 2 * Fe_pad * Fe_pad         # we_f, we_a
                + F_pad * F_pad               # wn_x
                + Fe_pad * F_pad              # wn_a
                + 8 * Fe_pad + 8 * F_pad      # biases (sublane-padded)
                + N_pad * F_pad) * 4          # x1 out
    scratch = (2 * N_pad * Fe_pad * 2         # xs, xd (bf16)
               + N_pad * F_pad * 4            # xwn
               + N_pad * Fe_pad * 4)          # agg
    streamed = 2 * (2 * 8 * TE * 4            # src/dst idx tiles (double-buffered)
                    + 3 * TE * Fe_pad * 4)    # ef/ea in + e1 out tiles (double-buffered)
    vmem_bytes = int(1.25 * (2 * resident + scratch + streamed))
    try:
        phys_vmem = int(pltpu.get_tpu_info().vmem_capacity_bytes)
    except Exception:
        phys_vmem = 64 * 1024 * 1024
    vmem_cap = int(0.75 * phys_vmem)          # headroom for compiler-internal scratch
    vmem_bytes = max(4 * 1024 * 1024, min(vmem_bytes, vmem_cap))

    x1_p, e1_p = pl.pallas_call(
        res_eg_kernel,
        out_shape=(jax.ShapeDtypeStruct((N_pad, F_pad), jnp.float32),
                   jax.ShapeDtypeStruct((E_pad, Fe_pad), jnp.float32)),
        grid_spec=pltpu.PrefetchScalarGridSpec(
            num_scalar_prefetch=0,
            grid=(n_tiles,),
            in_specs=in_specs,
            out_specs=out_specs,
            scratch_shapes=[pltpu.VMEM((N_pad, Fe_pad), jnp.bfloat16),   # xs
                            pltpu.VMEM((N_pad, Fe_pad), jnp.bfloat16),   # xd
                            pltpu.VMEM((N_pad, F_pad), jnp.float32),     # x @ wn_x
                            pltpu.VMEM((N_pad, Fe_pad), jnp.float32)]),  # agg
        compiler_params=pltpu.CompilerParams(
            dimension_semantics=("arbitrary",),    # edge axis is a reduction (agg)
            vmem_limit_bytes=vmem_bytes),
        cost_estimate=cost,
        input_output_aliases={4: 1},               # edge_attr -> e1 (read-modify-write)
    )(x_p, src_p, dst_p, ef_p, ea_p, we_s, we_d, we_f, we_a, be_p,
      wn_x, wn_a, bn_p)

    return x1_p[:N, :F], e1_p[:E, :Fe]


def reference_forward(x, edge_index, edge_f, edge_attr, params):
    """Pure-JAX f32 reference (same math) for a correctness check."""
    src, dst = edge_index[0], edge_index[1]
    pre_e = (x[src] @ params["we_s"] + x[dst] @ params["we_d"]
             + edge_f @ params["we_f"] + edge_attr @ params["we_a"]
             + params["be"])
    m = jnp.maximum(pre_e, 0.0)
    e1 = edge_attr + m
    agg = jax.ops.segment_sum(m, dst, num_segments=x.shape[0])
    pre_n = x @ params["wn_x"] + agg @ params["wn_a"] + params["bn"]
    x1 = x + jnp.maximum(pre_n, 0.0)
    return x1, e1


if __name__ == "__main__":
    # Small, deliberately non-128-aligned shapes; E spans two 512-edge tiles so
    # the multi-tile accumulation / finalize path is exercised.
    N, F = 96, 96      # nodes, node feature dim
    E, Fe = 768, 80    # edges, edge feature dim

    key = jax.random.PRNGKey(0)
    keys = jax.random.split(key, 11)

    x = jax.random.normal(keys[0], (N, F), dtype=jnp.float32)
    src = jax.random.randint(keys[1], (E,), 0, N, dtype=jnp.int32)
    dst = jax.random.randint(keys[2], (E,), 0, N, dtype=jnp.int32)
    edge_index = jnp.stack([src, dst], axis=0)               # [2, E]
    edge_f = jax.random.normal(keys[3], (E, Fe), dtype=jnp.float32)
    edge_attr = jax.random.normal(keys[4], (E, Fe), dtype=jnp.float32)

    scale = 0.1
    params = {
        "we_s": scale * jax.random.normal(keys[5], (F, Fe), jnp.float32),
        "we_d": scale * jax.random.normal(keys[6], (F, Fe), jnp.float32),
        "we_f": scale * jax.random.normal(keys[7], (Fe, Fe), jnp.float32),
        "we_a": scale * jax.random.normal(keys[8], (Fe, Fe), jnp.float32),
        "be": 0.01 * jnp.ones((1, Fe), jnp.float32),
        "wn_x": scale * jax.random.normal(keys[9], (F, F), jnp.float32),
        "wn_a": scale * jax.random.normal(keys[10], (Fe, F), jnp.float32),
        "bn": 0.01 * jnp.ones((1, F), jnp.float32),
    }

    x1, e1 = jax.block_until_ready(
        res_eg_forward(x, edge_index, edge_f, edge_attr, params))

    x1_ref, e1_ref = reference_forward(x, edge_index, edge_f, edge_attr, params)
    assert x1.shape == (N, F) and e1.shape == (E, Fe)
    # Tolerance note: per the perf review the gather/scatter MXU feeds are bf16
    # (xs/xd and m are bf16-rounded before the dots, f32 accumulation).  At these
    # scales that bounds |err| well below 5e-2 for both outputs; everything else
    # (ef/ea path, residuals, node update) is exact f32.
    assert jnp.allclose(x1, x1_ref, atol=5e-2, rtol=5e-2), \
        float(jnp.max(jnp.abs(x1 - x1_ref)))
    assert jnp.allclose(e1, e1_ref, atol=5e-2, rtol=5e-2), \
        float(jnp.max(jnp.abs(e1 - e1_ref)))

    print("KERNEL_OK")
</pallas_src>

<mosaic_0001>
module attributes {stable_mosaic.version = 11 : i64} {
  func.func @res_eg_kernel(%arg0: i32, %arg1: memref<128x128xf32, #tpu.memory_space<vmem>>, %arg2: memref<1x512xi32, #tpu.memory_space<vmem>>, %arg3: memref<1x512xi32, #tpu.memory_space<vmem>>, %arg4: memref<512x128xf32, #tpu.memory_space<vmem>>, %arg5: memref<512x128xf32, #tpu.memory_space<vmem>>, %arg6: memref<128x128xf32, #tpu.memory_space<vmem>>, %arg7: memref<128x128xf32, #tpu.memory_space<vmem>>, %arg8: memref<128x128xf32, #tpu.memory_space<vmem>>, %arg9: memref<128x128xf32, #tpu.memory_space<vmem>>, %arg10: memref<1x128xf32, #tpu.memory_space<vmem>>, %arg11: memref<128x128xf32, #tpu.memory_space<vmem>>, %arg12: memref<128x128xf32, #tpu.memory_space<vmem>>, %arg13: memref<1x128xf32, #tpu.memory_space<vmem>>, %arg14: memref<128x128xf32, #tpu.memory_space<vmem>>, %arg15: memref<512x128xf32, #tpu.memory_space<vmem>>, %arg16: memref<128x128xbf16, #tpu.memory_space<vmem>>, %arg17: memref<128x128xbf16, #tpu.memory_space<vmem>>, %arg18: memref<128x128xf32, #tpu.memory_space<vmem>>, %arg19: memref<128x128xf32, #tpu.memory_space<vmem>>) attributes {dimension_semantics = [#tpu.dimension_semantics<arbitrary>], iteration_bounds = array<i64: 2>, scalar_prefetch = 0 : i64, scratch_operands = 4 : i64, tpu.core_type = #tpu.core_type<tc>, window_params = [{pipeline_mode = #tpu.pipeline_mode<synchronous>, transform_indices = @transform_0, window_bounds = array<i64: 128, 128>}, {transform_indices = @transform_1, window_bounds = array<i64: 1, 512>}, {transform_indices = @transform_2, window_bounds = array<i64: 1, 512>}, {transform_indices = @transform_3, window_bounds = array<i64: 512, 128>}, {transform_indices = @transform_4, window_bounds = array<i64: 512, 128>}, {pipeline_mode = #tpu.pipeline_mode<synchronous>, transform_indices = @transform_5, window_bounds = array<i64: 128, 128>}, {pipeline_mode = #tpu.pipeline_mode<synchronous>, transform_indices = @transform_6, window_bounds = array<i64: 128, 128>}, {pipeline_mode = #tpu.pipeline_mode<synchronous>, transform_indices = @transform_7, window_bounds = array<i64: 128, 128>}, {pipeline_mode = #tpu.pipeline_mode<synchronous>, transform_indices = @transform_8, window_bounds = array<i64: 128, 128>}, {pipeline_mode = #tpu.pipeline_mode<synchronous>, transform_indices = @transform_9, window_bounds = array<i64: 1, 128>}, {pipeline_mode = #tpu.pipeline_mode<synchronous>, transform_indices = @transform_10, window_bounds = array<i64: 128, 128>}, {pipeline_mode = #tpu.pipeline_mode<synchronous>, transform_indices = @transform_11, window_bounds = array<i64: 128, 128>}, {pipeline_mode = #tpu.pipeline_mode<synchronous>, transform_indices = @transform_12, window_bounds = array<i64: 1, 128>}, {pipeline_mode = #tpu.pipeline_mode<synchronous>, transform_indices = @transform_13, window_bounds = array<i64: 128, 128>}, {transform_indices = @transform_14, window_bounds = array<i64: 512, 128>}]} {
    %c0_i32 = arith.constant 0 : i32
    %0 = arith.cmpi eq, %arg0, %c0_i32 : i32
    %1 = arith.extui %0 : i1 to i32
    %c0_i32_0 = arith.constant 0 : i32
    %2 = arith.cmpi ne, %1, %c0_i32_0 : i32
    scf.if %2 {
      %c0_30 = arith.constant 0 : index
      %c0_31 = arith.constant 0 : index
      %44 = vector.load %arg1[%c0_30, %c0_31] : memref<128x128xf32, #tpu.memory_space<vmem>>, vector<128x128xf32>
      %c0_32 = arith.constant 0 : index
      %c0_33 = arith.constant 0 : index
      %45 = vector.load %arg6[%c0_32, %c0_33] : memref<128x128xf32, #tpu.memory_space<vmem>>, vector<128x128xf32>
      %cst_34 = arith.constant dense<0.000000e+00> : vector<128x128xf32>
      %46 = tpu.matmul %44, %45, %cst_34 {dimension_numbers = #tpu.dot_dimension_numbers<[1], [0], [0], [1], [0, 0, 1, 1], [], []>} : vector<128x128xf32>, vector<128x128xf32>, vector<128x128xf32> -> vector<128x128xf32>
      %47 = arith.truncf %46 : vector<128x128xf32> to vector<128x128xbf16>
      %c0_35 = arith.constant 0 : index
      %c0_36 = arith.constant 0 : index
      %48 = vector.load %arg16[%c0_35, %c0_36] : memref<128x128xbf16, #tpu.memory_space<vmem>>, vector<128x128xbf16>
      tpu.vector_store %arg16[%c0_35, %c0_36], %47 {strides = array<i32>} : memref<128x128xbf16, #tpu.memory_space<vmem>>, vector<128x128xbf16>,
      %c0_37 = arith.constant 0 : index
      %c0_38 = arith.constant 0 : index
      %49 = vector.load %arg7[%c0_37, %c0_38] : memref<128x128xf32, #tpu.memory_space<vmem>>, vector<128x128xf32>
      %cst_39 = arith.constant dense<0.000000e+00> : vector<128x128xf32>
      %50 = tpu.matmul %44, %49, %cst_39 {dimension_numbers = #tpu.dot_dimension_numbers<[1], [0], [0], [1], [0, 0, 1, 1], [], []>} : vector<128x128xf32>, vector<128x128xf32>, vector<128x128xf32> -> vector<128x128xf32>
      %51 = arith.truncf %50 : vector<128x128xf32> to vector<128x128xbf16>
      %c0_40 = arith.constant 0 : index
      %c0_41 = arith.constant 0 : index
      %52 = vector.load %arg17[%c0_40, %c0_41] : memref<128x128xbf16, #tpu.memory_space<vmem>>, vector<128x128xbf16>
      tpu.vector_store %arg17[%c0_40, %c0_41], %51 {strides = array<i32>} : memref<128x128xbf16, #tpu.memory_space<vmem>>, vector<128x128xbf16>,
      %c0_42 = arith.constant 0 : index
      %c0_43 = arith.constant 0 : index
      %53 = vector.load %arg11[%c0_42, %c0_43] : memref<128x128xf32, #tpu.memory_space<vmem>>, vector<128x128xf32>
      %cst_44 = arith.constant dense<0.000000e+00> : vector<128x128xf32>
      %54 = tpu.matmul %44, %53, %cst_44 {dimension_numbers = #tpu.dot_dimension_numbers<[1], [0], [0], [1], [0, 0, 1, 1], [], []>} : vector<128x128xf32>, vector<128x128xf32>, vector<128x128xf32> -> vector<128x128xf32>
      %c0_45 = arith.constant 0 : index
      %c0_46 = arith.constant 0 : index
      %55 = vector.load %arg18[%c0_45, %c0_46] : memref<128x128xf32, #tpu.memory_space<vmem>>, vector<128x128xf32>
      tpu.vector_store %arg18[%c0_45, %c0_46], %54 {strides = array<i32>} : memref<128x128xf32, #tpu.memory_space<vmem>>, vector<128x128xf32>,
      %cst_47 = arith.constant 0.000000e+00 : f32
      %56 = vector.broadcast %cst_47 : f32 to vector<128x128xf32>
      %c0_48 = arith.constant 0 : index
      %c0_49 = arith.constant 0 : index
      %57 = vector.load %arg19[%c0_48, %c0_49] : memref<128x128xf32, #tpu.memory_space<vmem>>, vector<128x128xf32>
      tpu.vector_store %arg19[%c0_48, %c0_49], %56 {strides = array<i32>} : memref<128x128xf32, #tpu.memory_space<vmem>>, vector<128x128xf32>,
    } else {
    }
    %3 = tpu.iota {dimensions = array<i32: 0>} : vector<128x512xi32>
    %c0 = arith.constant 0 : index
    %c0_1 = arith.constant 0 : index
    %4 = vector.load %arg2[%c0, %c0_1] : memref<1x512xi32, #tpu.memory_space<vmem>>, vector<1x512xi32>
    %5 = vector.broadcast %4 : vector<1x512xi32> to vector<128x512xi32>
    %6 = arith.cmpi eq, %3, %5 : vector<128x512xi32>
    %7 = arith.extui %6 : vector<128x512xi1> to vector<128x512xi32>
    %8 = arith.sitofp %7 : vector<128x512xi32> to vector<128x512xf32>
    %9 = arith.truncf %8 : vector<128x512xf32> to vector<128x512xbf16>
    %c0_2 = arith.constant 0 : index
    %c0_3 = arith.constant 0 : index
    %10 = vector.load %arg3[%c0_2, %c0_3] : memref<1x512xi32, #tpu.memory_space<vmem>>, vector<1x512xi32>
    %11 = vector.broadcast %10 : vector<1x512xi32> to vector<128x512xi32>
    %12 = arith.cmpi eq, %3, %11 : vector<128x512xi32>
    %13 = arith.extui %12 : vector<128x512xi1> to vector<128x512xi32>
    %14 = arith.sitofp %13 : vector<128x512xi32> to vector<128x512xf32>
    %15 = arith.truncf %14 : vector<128x512xf32> to vector<128x512xbf16>
    %c0_4 = arith.constant 0 : index
    %c0_5 = arith.constant 0 : index
    %16 = vector.load %arg16[%c0_4, %c0_5] : memref<128x128xbf16, #tpu.memory_space<vmem>>, vector<128x128xbf16>
    %cst = arith.constant dense<0.000000e+00> : vector<512x128xf32>
    %17 = tpu.matmul %9, %16, %cst {dimension_numbers = #tpu.dot_dimension_numbers<[0], [0], [1], [1], [0, 1, 1, 1], [], []>} : vector<128x512xbf16>, vector<128x128xbf16>, vector<512x128xf32> -> vector<512x128xf32>
    %c0_6 = arith.constant 0 : index
    %c0_7 = arith.constant 0 : index
    %18 = vector.load %arg17[%c0_6, %c0_7] : memref<128x128xbf16, #tpu.memory_space<vmem>>, vector<128x128xbf16>
    %cst_8 = arith.constant dense<0.000000e+00> : vector<512x128xf32>
    %19 = tpu.matmul %15, %18, %cst_8 {dimension_numbers = #tpu.dot_dimension_numbers<[0], [0], [1], [1], [0, 1, 1, 1], [], []>} : vector<128x512xbf16>, vector<128x128xbf16>, vector<512x128xf32> -> vector<512x128xf32>
    %c0_9 = arith.constant 0 : index
    %c0_10 = arith.constant 0 : index
    %20 = vector.load %arg4[%c0_9, %c0_10] : memref<512x128xf32, #tpu.memory_space<vmem>>, vector<512x128xf32>
    %c0_11 = arith.constant 0 : index
    %c0_12 = arith.constant 0 : index
    %21 = vector.load %arg5[%c0_11, %c0_12] : memref<512x128xf32, #tpu.memory_space<vmem>>, vector<512x128xf32>
    %22 = arith.addf %17, %19 : vector<512x128xf32>
    %c0_13 = arith.constant 0 : index
    %c0_14 = arith.constant 0 : index
    %23 = vector.load %arg8[%c0_13, %c0_14] : memref<128x128xf32, #tpu.memory_space<vmem>>, vector<128x128xf32>
    %cst_15 = arith.constant dense<0.000000e+00> : vector<512x128xf32>
    %24 = tpu.matmul %20, %23, %cst_15 {dimension_numbers = #tpu.dot_dimension_numbers<[1], [0], [0], [1], [0, 0, 1, 1], [], []>} : vector<512x128xf32>, vector<128x128xf32>, vector<512x128xf32> -> vector<512x128xf32>
    %25 = arith.addf %22, %24 : vector<512x128xf32>
    %c0_16 = arith.constant 0 : index
    %c0_17 = arith.constant 0 : index
    %26 = vector.load %arg9[%c0_16, %c0_17] : memref<128x128xf32, #tpu.memory_space<vmem>>, vector<128x128xf32>
    %cst_18 = arith.constant dense<0.000000e+00> : vector<512x128xf32>
    %27 = tpu.matmul %21, %26, %cst_18 {dimension_numbers = #tpu.dot_dimension_numbers<[1], [0], [0], [1], [0, 0, 1, 1], [], []>} : vector<512x128xf32>, vector<128x128xf32>, vector<512x128xf32> -> vector<512x128xf32>
    %28 = arith.addf %25, %27 : vector<512x128xf32>
    %c0_19 = arith.constant 0 : index
    %c0_20 = arith.constant 0 : index
    %29 = vector.load %arg10[%c0_19, %c0_20] : memref<1x128xf32, #tpu.memory_space<vmem>>, vector<1x128xf32>
    %30 = vector.broadcast %29 : vector<1x128xf32> to vector<512x128xf32>
    %31 = arith.addf %28, %30 : vector<512x128xf32>
    %cst_21 = arith.constant 0.000000e+00 : f32
    %32 = vector.broadcast %cst_21 : f32 to vector<512x128xf32>
    %33 = arith.maximumf %31, %32 : vector<512x128xf32>
    %34 = arith.addf %21, %33 : vector<512x128xf32>
    %c0_22 = arith.constant 0 : index
    %c0_23 = arith.constant 0 : index
    %35 = vector.load %arg15[%c0_22, %c0_23] : memref<512x128xf32, #tpu.memory_space<vmem>>, vector<512x128xf32>
    tpu.vector_store %arg15[%c0_22, %c0_23], %34 {strides = array<i32>} : memref<512x128xf32, #tpu.memory_space<vmem>>, vector<512x128xf32>,
    %c0_24 = arith.constant 0 : index
    %c0_25 = arith.constant 0 : index
    %36 = vector.load %arg19[%c0_24, %c0_25] : memref<128x128xf32, #tpu.memory_space<vmem>>, vector<128x128xf32>
    %37 = arith.truncf %33 : vector<512x128xf32> to vector<512x128xbf16>
    %cst_26 = arith.constant dense<0.000000e+00> : vector<128x128xf32>
    %38 = tpu.matmul %15, %37, %cst_26 {dimension_numbers = #tpu.dot_dimension_numbers<[1], [0], [0], [1], [0, 0, 1, 1], [], []>} : vector<128x512xbf16>, vector<512x128xbf16>, vector<128x128xf32> -> vector<128x128xf32>
    %39 = arith.addf %36, %38 : vector<128x128xf32>
    %c0_27 = arith.constant 0 : index
    %c0_28 = arith.constant 0 : index
    %40 = vector.load %arg19[%c0_27, %c0_28] : memref<128x128xf32, #tpu.memory_space<vmem>>, vector<128x128xf32>
    tpu.vector_store %arg19[%c0_27, %c0_28], %39 {strides = array<i32>} : memref<128x128xf32, #tpu.memory_space<vmem>>, vector<128x128xf32>,
    %c1_i32 = arith.constant 1 : i32
    %41 = arith.cmpi eq, %arg0, %c1_i32 : i32
    %42 = arith.extui %41 : i1 to i32
    %c0_i32_29 = arith.constant 0 : i32
    %43 = arith.cmpi ne, %42, %c0_i32_29 : i32
    scf.if %43 {
      %c0_30 = arith.constant 0 : index
      %c0_31 = arith.constant 0 : index
      %44 = vector.load %arg18[%c0_30, %c0_31] : memref<128x128xf32, #tpu.memory_space<vmem>>, vector<128x128xf32>
      %c0_32 = arith.constant 0 : index
      %c0_33 = arith.constant 0 : index
      %45 = vector.load %arg19[%c0_32, %c0_33] : memref<128x128xf32, #tpu.memory_space<vmem>>, vector<128x128xf32>
      %c0_34 = arith.constant 0 : index
      %c0_35 = arith.constant 0 : index
      %46 = vector.load %arg12[%c0_34, %c0_35] : memref<128x128xf32, #tpu.memory_space<vmem>>, vector<128x128xf32>
      %cst_36 = arith.constant dense<0.000000e+00> : vector<128x128xf32>
      %47 = tpu.matmul %45, %46, %cst_36 {dimension_numbers = #tpu.dot_dimension_numbers<[1], [0], [0], [1], [0, 0, 1, 1], [], []>} : vector<128x128xf32>, vector<128x128xf32>, vector<128x128xf32> -> vector<128x128xf32>
      %48 = arith.addf %44, %47 : vector<128x128xf32>
      %c0_37 = arith.constant 0 : index
      %c0_38 = arith.constant 0 : index
      %49 = vector.load %arg13[%c0_37, %c0_38] : memref<1x128xf32, #tpu.memory_space<vmem>>, vector<1x128xf32>
      %50 = vector.broadcast %49 : vector<1x128xf32> to vector<128x128xf32>
      %51 = arith.addf %48, %50 : vector<128x128xf32>
      %c0_39 = arith.constant 0 : index
      %c0_40 = arith.constant 0 : index
      %52 = vector.load %arg1[%c0_39, %c0_40] : memref<128x128xf32, #tpu.memory_space<vmem>>, vector<128x128xf32>
      %cst_41 = arith.constant 0.000000e+00 : f32
      %53 = vector.broadcast %cst_41 : f32 to vector<128x128xf32>
      %54 = arith.maximumf %51, %53 : vector<128x128xf32>
      %55 = arith.addf %52, %54 : vector<128x128xf32>
      %c0_42 = arith.constant 0 : index
      %c0_43 = arith.constant 0 : index
      %56 = vector.load %arg14[%c0_42, %c0_43] : memref<128x128xf32, #tpu.memory_space<vmem>>, vector<128x128xf32>
      tpu.vector_store %arg14[%c0_42, %c0_43], %55 {strides = array<i32>} : memref<128x128xf32, #tpu.memory_space<vmem>>, vector<128x128xf32>,
    } else {
    }
    return
  }
  func.func @transform_0(%arg0: i32) -> (i32, i32) {
    %c0_i32 = arith.constant 0 : i32
    %c0_i32_0 = arith.constant 0 : i32
    %c0_i32_1 = arith.constant 0 : i32
    return %c0_i32, %c0_i32_0 : i32, i32
  }
  func.func @transform_1(%arg0: i32) -> (i32, i32) {
    %c0_i32 = arith.constant 0 : i32
    %c0_i32_0 = arith.constant 0 : i32
    return %c0_i32, %arg0 : i32, i32
  }
  func.func @transform_2(%arg0: i32) -> (i32, i32) {
    %c0_i32 = arith.constant 0 : i32
    %c0_i32_0 = arith.constant 0 : i32
    return %c0_i32, %arg0 : i32, i32
  }
  func.func @transform_3(%arg0: i32) -> (i32, i32) {
    %c0_i32 = arith.constant 0 : i32
    %c0_i32_0 = arith.constant 0 : i32
    return %arg0, %c0_i32 : i32, i32
  }
  func.func @transform_4(%arg0: i32) -> (i32, i32) {
    %c0_i32 = arith.constant 0 : i32
    %c0_i32_0 = arith.constant 0 : i32
    return %arg0, %c0_i32 : i32, i32
  }
  func.func @transform_5(%arg0: i32) -> (i32, i32) {
    %c0_i32 = arith.constant 0 : i32
    %c0_i32_0 = arith.constant 0 : i32
    %c0_i32_1 = arith.constant 0 : i32
    return %c0_i32, %c0_i32_0 : i32, i32
  }
  func.func @transform_6(%arg0: i32) -> (i32, i32) {
    %c0_i32 = arith.constant 0 : i32
    %c0_i32_0 = arith.constant 0 : i32
    %c0_i32_1 = arith.constant 0 : i32
    return %c0_i32, %c0_i32_0 : i32, i32
  }
  func.func @transform_7(%arg0: i32) -> (i32, i32) {
    %c0_i32 = arith.constant 0 : i32
    %c0_i32_0 = arith.constant 0 : i32
    %c0_i32_1 = arith.constant 0 : i32
    return %c0_i32, %c0_i32_0 : i32, i32
  }
  func.func @transform_8(%arg0: i32) -> (i32, i32) {
    %c0_i32 = arith.constant 0 : i32
    %c0_i32_0 = arith.constant 0 : i32
    %c0_i32_1 = arith.constant 0 : i32
    return %c0_i32, %c0_i32_0 : i32, i32
  }
  func.func @transform_9(%arg0: i32) -> (i32, i32) {
    %c0_i32 = arith.constant 0 : i32
    %c0_i32_0 = arith.constant 0 : i32
    %c0_i32_1 = arith.constant 0 : i32
    return %c0_i32, %c0_i32_0 : i32, i32
  }
  func.func @transform_10(%arg0: i32) -> (i32, i32) {
    %c0_i32 = arith.constant 0 : i32
    %c0_i32_0 = arith.constant 0 : i32
    %c0_i32_1 = arith.constant 0 : i32
    return %c0_i32, %c0_i32_0 : i32, i32
  }
  func.func @transform_11(%arg0: i32) -> (i32, i32) {
    %c0_i32 = arith.constant 0 : i32
    %c0_i32_0 = arith.constant 0 : i32
    %c0_i32_1 = arith.constant 0 : i32
    return %c0_i32, %c0_i32_0 : i32, i32
  }
  func.func @transform_12(%arg0: i32) -> (i32, i32) {
    %c0_i32 = arith.constant 0 : i32
    %c0_i32_0 = arith.constant 0 : i32
    %c0_i32_1 = arith.constant 0 : i32
    return %c0_i32, %c0_i32_0 : i32, i32
  }
  func.func @transform_13(%arg0: i32) -> (i32, i32) {
    %c0_i32 = arith.constant 0 : i32
    %c0_i32_0 = arith.constant 0 : i32
    %c0_i32_1 = arith.constant 0 : i32
    return %c0_i32, %c0_i32_0 : i32, i32
  }
  func.func @transform_14(%arg0: i32) -> (i32, i32) {
    %c0_i32 = arith.constant 0 : i32
    %c0_i32_0 = arith.constant 0 : i32
    return %arg0, %c0_i32 : i32, i32
  }
}

</mosaic_0001>

<llo_original>
// kernel: tpu_custom_call.1
$region0: #{tpu_custom_call.1}
  #allocation0 [shape = 'u32[]', space=smem, size = 0x4, offset = 0x4, fixed_abs, tag = 'smem constant byte address 0x4 - core index']
  #allocation1 [shape = 'u32[144,128]{1,0:T(1,128)}', space=vmem, size = 0x12000, scoped, tag = 'internal scratch']
  #allocation2 [shape = 'bf16[128,128]{1,0:T(16,128)(2,1)}', space=vmem, size = 0x8000, scoped, tag = 'scratch operand']
  #allocation3 [shape = 'bf16[128,128]{1,0:T(16,128)(2,1)}', space=vmem, size = 0x8000, scoped, tag = 'scratch operand']
  #allocation4 [shape = 'f32[128,128]{1,0:T(8,128)}', space=vmem, size = 0x10000, scoped, tag = 'scratch operand']
  #allocation5 [shape = 'f32[128,128]{1,0:T(8,128)}', space=vmem, size = 0x10000, scoped, tag = 'scratch operand']
  %s0 = inlined_call_operand.vmem [shape: f32[128,128], index: 0, kind: input, shape index: {}]
  %s1 = inlined_call_operand.vmem [shape: s32[1,1024], index: 1, kind: input, shape index: {}]
  %s2 = inlined_call_operand.vmem [shape: s32[1,1024], index: 2, kind: input, shape index: {}]
  %s3 = inlined_call_operand.vmem [shape: f32[1024,128], index: 3, kind: input, shape index: {}]
  %s4 = inlined_call_operand.hbm [shape: f32[1024,128], index: 4, kind: input, shape index: {}, may-alias: {4,14}]
  %s5 = inlined_call_operand.vmem [shape: f32[128,128], index: 5, kind: input, shape index: {}]
  %s6 = inlined_call_operand.vmem [shape: f32[128,128], index: 6, kind: input, shape index: {}]
  %s7 = inlined_call_operand.vmem [shape: f32[128,128], index: 7, kind: input, shape index: {}]
  %s8 = inlined_call_operand.vmem [shape: f32[128,128], index: 8, kind: input, shape index: {}]
  %s9 = inlined_call_operand.vmem [shape: f32[1,128], index: 9, kind: input, shape index: {}]
  %s10 = inlined_call_operand.vmem [shape: f32[128,128], index: 10, kind: input, shape index: {}]
  %s11 = inlined_call_operand.vmem [shape: f32[128,128], index: 11, kind: input, shape index: {}]
  %s12 = inlined_call_operand.vmem [shape: f32[1,128], index: 12, kind: input, shape index: {}]
  %s13 = inlined_call_operand.hbm [shape: f32[128,128], index: 13, kind: output, shape index: {0}]
  %s14 = inlined_call_operand.hbm [shape: f32[1024,128], index: 14, kind: output, shape index: {1}, may-alias: {4,14}]
  %15 = xla_tuple %s13, %s14
  %s16 = sld [smem:[#allocation0]]
  $region105: #{tpu_custom_call.1} parent=0
    _
  %s18 = ssub.s32 1, %s16
  %s19 = scalar_select 0, %s18, %s16
  $region1: #{tpu_custom_call.1} parent=0
    #allocation6 [shape = 'u8[524288]{0}', space=vmem, size = 0x80000, scoped, tag = 'input window, operand 4']
    #allocation7 [shape = 's32[2]{0}', space=sflag, size = 0x8, scoped, tag = 'scoped memory for tpu_custom_call.1']
    #allocation8 [shape = 's32[2]{0}', space=sflag, size = 0x8, scoped, tag = 'scoped memory for tpu_custom_call.1']
    #allocation9 [shape = 'u8[65536]{0}', space=vmem, size = 0x10000, scoped, tag = 'output window, operand 0, single buffered']
    #allocation10 [shape = 'u8[524288]{0}', space=vmem, size = 0x80000, scoped, tag = 'output window, operand 1']
    #allocation11 [shape = 's32[2]{0}', space=sflag, size = 0x8, scoped, tag = 'scoped memory for tpu_custom_call.1']
    %20 = vsyncpa [#allocation7], 0
    %s21 = scalar_lea.sflag [#allocation7], 1
    %22 = vsyncpa %s21, 0
    %23 = vsyncpa [#allocation8], 0
    %24 = vsyncpa [#allocation11], 0
    %s25 = scalar_lea.sflag [#allocation11], 1
    %26 = vsyncpa %s25, 0
    loop: start=0, step=1, limit=4
    $region2: #{tpu_custom_call.1} parent=1 // loop_pre_header
      _
    $region3: #{tpu_custom_call.1} parent=1 // loop_header
      %s28 = sphi 0, %s32
      %p29 = scmp.ge.s32.totalorder %s28, 4
      %s36 = sphi 0, %s36
      %s38 = sphi 0, %s36
      %s39 = sphi 0, %s38
      %s53 = sphi 0, %s39
      %s59 = sphi 0, %s61
      %s62 = sphi 0, %s59
      %s63 = sphi 0, %s62
      %s79 = sphi 0, %s63
      %s85 = sphi 0, %s87
      %s88 = sphi 0, %s85
      %s89 = sphi 0, %s88
      %s105 = sphi 0, %s89
      %s111 = sphi 0, %s113
      %s114 = sphi 0, %s111
      %s115 = sphi 0, %s114
      %s131 = sphi 0, %s115
      %s137 = sphi 0, %s139
      %s140 = sphi 0, %s137
      %s141 = sphi 0, %s140
      %s157 = sphi 0, %s141
      %s161 = sphi 0, %s161
      %s163 = sphi 0, %s161
      %s164 = sphi 0, %s163
      %s178 = sphi 0, %s164
      %s182 = sphi 0, %s182
      %s184 = sphi 0, %s182
      %s185 = sphi 0, %s184
      %s199 = sphi 0, %s185
      %s203 = sphi 0, %s203
      %s205 = sphi 0, %s203
      %s206 = sphi 0, %s205
      %s220 = sphi 0, %s206
      %s224 = sphi 0, %s224
      %s226 = sphi 0, %s224
      %s227 = sphi 0, %s226
      %s241 = sphi 0, %s227
      %s245 = sphi 0, %s245
      %s247 = sphi 0, %s245
      %s248 = sphi 0, %s247
      %s262 = sphi 0, %s248
      %s266 = sphi 0, %s266
      %s268 = sphi 0, %s266
      %s269 = sphi 0, %s268
      %s283 = sphi 0, %s269
      %s287 = sphi 0, %s287
      %s289 = sphi 0, %s287
      %s290 = sphi 0, %s289
      %s304 = sphi 0, %s290
      %s308 = sphi 0, %s308
      %s310 = sphi 0, %s308
      %s311 = sphi 0, %s310
      %s325 = sphi 0, %s311
      %s329 = sphi 0, %s329
      %s331 = sphi 0, %s329
      %s332 = sphi 0, %s331
      %s346 = sphi 0, %s332
      %s352 = sphi 0, %s354
      %s355 = sphi 0, %s352
      %s356 = sphi 0, %s355
      %s372 = sphi 0, %s356
    $region4: #{tpu_custom_call.1} parent=1 // loop_header_branch
      %31 = sbr.rel (%p29) target = $region8
    $region5: #{tpu_custom_call.1} parent=1 // loop_body
      %s33 = ssub.s32 %s28, 1
      %s34 = ssub.s32 %s28, 2
      %s35 = sadd.s32 %s28, 1
      %s37 = sadd.s32 %s36, 1
      %p40 = scmp.eq.s32.totalorder %s28, 1
      %p41 = scmp.ne.s32.totalorder %s36, %s38
      %p42 = scmp.eq.s32.totalorder %s28, 0
      %p43 = por %p41, %p42
      %p44 = scmp.ne.s32.totalorder %s36, %s38
      %p45 = scmp.eq.s32.totalorder %s33, 1
      %p46 = por %p44, %p45
      %p47 = scmp.ne.s32.totalorder %s38, %s39
      %p48 = scmp.eq.s32.totalorder %s33, 0
      %p49 = por %p47, %p48
      %p50 = scmp.ne.s32.totalorder %s38, %s39
      %p51 = scmp.eq.s32.totalorder %s34, 1
      %p52 = por %p50, %p51
      %p54 = scmp.ne.s32.totalorder %s39, %s53
      %p55 = scmp.eq.s32.totalorder %s34, 0
      %p56 = por %p54, %p55
      %s57 = ssub.s32 %s28, %s35
      %p58 = scmp.eq.s32.totalorder %s57, 0
      %s60 = sadd.s32 %s59, 1
      %s61 = scalar_select %p58, %s59, %s60
      %p64 = pneg %p58
      %p65 = scmp.eq.s32.totalorder %s28, 1
      %p66 = por %p64, %p65
      %p67 = scmp.ne.s32.totalorder %s59, %s62
      %p68 = scmp.eq.s32.totalorder %s28, 0
      %p69 = por %p67, %p68
      %p70 = scmp.ne.s32.totalorder %s59, %s62
      %p71 = scmp.eq.s32.totalorder %s33, 1
      %p72 = por %p70, %p71
      %p73 = scmp.ne.s32.totalorder %s62, %s63
      %p74 = scmp.eq.s32.totalorder %s33, 0
      %p75 = por %p73, %p74
      %p76 = scmp.ne.s32.totalorder %s62, %s63
      %p77 = scmp.eq.s32.totalorder %s34, 1
      %p78 = por %p76, %p77
      %p80 = scmp.ne.s32.totalorder %s63, %s79
      %p81 = scmp.eq.s32.totalorder %s34, 0
      %p82 = por %p80, %p81
      %s83 = ssub.s32 %s28, %s35
      %p84 = scmp.eq.s32.totalorder %s83, 0
      %s86 = sadd.s32 %s85, 1
      %s87 = scalar_select %p84, %s85, %s86
      %p90 = pneg %p84
      %p91 = scmp.eq.s32.totalorder %s28, 1
      %p92 = por %p90, %p91
      %p93 = scmp.ne.s32.totalorder %s85, %s88
      %p94 = scmp.eq.s32.totalorder %s28, 0
      %p95 = por %p93, %p94
      %p96 = scmp.ne.s32.totalorder %s85, %s88
      %p97 = scmp.eq.s32.totalorder %s33, 1
      %p98 = por %p96, %p97
      %p99 = scmp.ne.s32.totalorder %s88, %s89
      %p100 = scmp.eq.s32.totalorder %s33, 0
      %p101 = por %p99, %p100
      %p102 = scmp.ne.s32.totalorder %s88, %s89
      %p103 = scmp.eq.s32.totalorder %s34, 1
      %p104 = por %p102, %p103
      %p106 = scmp.ne.s32.totalorder %s89, %s105
      %p107 = scmp.eq.s32.totalorder %s34, 0
      %p108 = por %p106, %p107
      %s109 = ssub.s32 %s28, %s35
      %p110 = scmp.eq.s32.totalorder %s109, 0
      %s112 = sadd.s32 %s111, 1
      %s113 = scalar_select %p110, %s111, %s112
      %p116 = pneg %p110
      %p117 = scmp.eq.s32.totalorder %s28, 1
      %p118 = por %p116, %p117
      %p119 = scmp.ne.s32.totalorder %s111, %s114
      %p120 = scmp.eq.s32.totalorder %s28, 0
      %p121 = por %p119, %p120
      %p122 = scmp.ne.s32.totalorder %s111, %s114
      %p123 = scmp.eq.s32.totalorder %s33, 1
      %p124 = por %p122, %p123
      %p125 = scmp.ne.s32.totalorder %s114, %s115
      %p126 = scmp.eq.s32.totalorder %s33, 0
      %p127 = por %p125, %p126
      %p128 = scmp.ne.s32.totalorder %s114, %s115
      %p129 = scmp.eq.s32.totalorder %s34, 1
      %p130 = por %p128, %p129
      %p132 = scmp.ne.s32.totalorder %s115, %s131
      %p133 = scmp.eq.s32.totalorder %s34, 0
      %p134 = por %p132, %p133
      %s135 = ssub.s32 %s28, %s35
      %p136 = scmp.eq.s32.totalorder %s135, 0
      %s138 = sadd.s32 %s137, 1
      %s139 = scalar_select %p136, %s137, %s138
      %p142 = pneg %p136
      %p143 = scmp.eq.s32.totalorder %s28, 1
      %p144 = por %p142, %p143
      %p145 = scmp.ne.s32.totalorder %s137, %s140
      %p146 = scmp.eq.s32.totalorder %s28, 0
      %p147 = por %p145, %p146
      %p148 = scmp.ne.s32.totalorder %s137, %s140
      %p149 = scmp.eq.s32.totalorder %s33, 1
      %p150 = por %p148, %p149
      %p151 = scmp.ne.s32.totalorder %s140, %s141
      %p152 = scmp.eq.s32.totalorder %s33, 0
      %p153 = por %p151, %p152
      %p154 = scmp.ne.s32.totalorder %s140, %s141
      %p155 = scmp.eq.s32.totalorder %s34, 1
      %p156 = por %p154, %p155
      %p158 = scmp.ne.s32.totalorder %s141, %s157
      %p159 = scmp.eq.s32.totalorder %s34, 0
      %p160 = por %p158, %p159
      %s162 = sadd.s32 %s161, 1
      %p165 = scmp.eq.s32.totalorder %s28, 1
      %p166 = scmp.ne.s32.totalorder %s161, %s163
      %p167 = scmp.eq.s32.totalorder %s28, 0
      %p168 = por %p166, %p167
      %p169 = scmp.ne.s32.totalorder %s161, %s163
      %p170 = scmp.eq.s32.totalorder %s33, 1
      %p171 = por %p169, %p170
      %p172 = scmp.ne.s32.totalorder %s163, %s164
      %p173 = scmp.eq.s32.totalorder %s33, 0
      %p174 = por %p172, %p173
      %p175 = scmp.ne.s32.totalorder %s163, %s164
      %p176 = scmp.eq.s32.totalorder %s34, 1
      %p177 = por %p175, %p176
      %p179 = scmp.ne.s32.totalorder %s164, %s178
      %p180 = scmp.eq.s32.totalorder %s34, 0
      %p181 = por %p179, %p180
      %s183 = sadd.s32 %s182, 1
      %p186 = scmp.eq.s32.totalorder %s28, 1
      %p187 = scmp.ne.s32.totalorder %s182, %s184
      %p188 = scmp.eq.s32.totalorder %s28, 0
      %p189 = por %p187, %p188
      %p190 = scmp.ne.s32.totalorder %s182, %s184
      %p191 = scmp.eq.s32.totalorder %s33, 1
      %p192 = por %p190, %p191
      %p193 = scmp.ne.s32.totalorder %s184, %s185
      %p194 = scmp.eq.s32.totalorder %s33, 0
      %p195 = por %p193, %p194
      %p196 = scmp.ne.s32.totalorder %s184, %s185
      %p197 = scmp.eq.s32.totalorder %s34, 1
      %p198 = por %p196, %p197
      %p200 = scmp.ne.s32.totalorder %s185, %s199
      %p201 = scmp.eq.s32.totalorder %s34, 0
      %p202 = por %p200, %p201
      %s204 = sadd.s32 %s203, 1
      %p207 = scmp.eq.s32.totalorder %s28, 1
      %p208 = scmp.ne.s32.totalorder %s203, %s205
      %p209 = scmp.eq.s32.totalorder %s28, 0
      %p210 = por %p208, %p209
      %p211 = scmp.ne.s32.totalorder %s203, %s205
      %p212 = scmp.eq.s32.totalorder %s33, 1
      %p213 = por %p211, %p212
      %p214 = scmp.ne.s32.totalorder %s205, %s206
      %p215 = scmp.eq.s32.totalorder %s33, 0
      %p216 = por %p214, %p215
      %p217 = scmp.ne.s32.totalorder %s205, %s206
      %p218 = scmp.eq.s32.totalorder %s34, 1
      %p219 = por %p217, %p218
      %p221 = scmp.ne.s32.totalorder %s206, %s220
      %p222 = scmp.eq.s32.totalorder %s34, 0
      %p223 = por %p221, %p222
      %s225 = sadd.s32 %s224, 1
      %p228 = scmp.eq.s32.totalorder %s28, 1
      %p229 = scmp.ne.s32.totalorder %s224, %s226
      %p230 = scmp.eq.s32.totalorder %s28, 0
      %p231 = por %p229, %p230
      %p232 = scmp.ne.s32.totalorder %s224, %s226
      %p233 = scmp.eq.s32.totalorder %s33, 1
      %p234 = por %p232, %p233
      %p235 = scmp.ne.s32.totalorder %s226, %s227
      %p236 = scmp.eq.s32.totalorder %s33, 0
      %p237 = por %p235, %p236
      %p238 = scmp.ne.s32.totalorder %s226, %s227
      %p239 = scmp.eq.s32.totalorder %s34, 1
      %p240 = por %p238, %p239
      %p242 = scmp.ne.s32.totalorder %s227, %s241
      %p243 = scmp.eq.s32.totalorder %s34, 0
      %p244 = por %p242, %p243
      %s246 = sadd.s32 %s245, 1
      %p249 = scmp.eq.s32.totalorder %s28, 1
      %p250 = scmp.ne.s32.totalorder %s245, %s247
      %p251 = scmp.eq.s32.totalorder %s28, 0
      %p252 = por %p250, %p251
      %p253 = scmp.ne.s32.totalorder %s245, %s247
      %p254 = scmp.eq.s32.totalorder %s33, 1
      %p255 = por %p253, %p254
      %p256 = scmp.ne.s32.totalorder %s247, %s248
      %p257 = scmp.eq.s32.totalorder %s33, 0
      %p258 = por %p256, %p257
      %p259 = scmp.ne.s32.totalorder %s247, %s248
      %p260 = scmp.eq.s32.totalorder %s34, 1
      %p261 = por %p259, %p260
      %p263 = scmp.ne.s32.totalorder %s248, %s262
      %p264 = scmp.eq.s32.totalorder %s34, 0
      %p265 = por %p263, %p264
      %s267 = sadd.s32 %s266, 1
      %p270 = scmp.eq.s32.totalorder %s28, 1
      %p271 = scmp.ne.s32.totalorder %s266, %s268
      %p272 = scmp.eq.s32.totalorder %s28, 0
      %p273 = por %p271, %p272
      %p274 = scmp.ne.s32.totalorder %s266, %s268
      %p275 = scmp.eq.s32.totalorder %s33, 1
      %p276 = por %p274, %p275
      %p277 = scmp.ne.s32.totalorder %s268, %s269
      %p278 = scmp.eq.s32.totalorder %s33, 0
      %p279 = por %p277, %p278
      %p280 = scmp.ne.s32.totalorder %s268, %s269
      %p281 = scmp.eq.s32.totalorder %s34, 1
      %p282 = por %p280, %p281
      %p284 = scmp.ne.s32.totalorder %s269, %s283
      %p285 = scmp.eq.s32.totalorder %s34, 0
      %p286 = por %p284, %p285
      %s288 = sadd.s32 %s287, 1
      %p291 = scmp.eq.s32.totalorder %s28, 1
      %p292 = scmp.ne.s32.totalorder %s287, %s289
      %p293 = scmp.eq.s32.totalorder %s28, 0
      %p294 = por %p292, %p293
      %p295 = scmp.ne.s32.totalorder %s287, %s289
      %p296 = scmp.eq.s32.totalorder %s33, 1
      %p297 = por %p295, %p296
      %p298 = scmp.ne.s32.totalorder %s289, %s290
      %p299 = scmp.eq.s32.totalorder %s33, 0
      %p300 = por %p298, %p299
      %p301 = scmp.ne.s32.totalorder %s289, %s290
      %p302 = scmp.eq.s32.totalorder %s34, 1
      %p303 = por %p301, %p302
      %p305 = scmp.ne.s32.totalorder %s290, %s304
      %p306 = scmp.eq.s32.totalorder %s34, 0
      %p307 = por %p305, %p306
      %s309 = sadd.s32 %s308, 1
      %p312 = scmp.eq.s32.totalorder %s28, 1
      %p313 = scmp.ne.s32.totalorder %s308, %s310
      %p314 = scmp.eq.s32.totalorder %s28, 0
      %p315 = por %p313, %p314
      %p316 = scmp.ne.s32.totalorder %s308, %s310
      %p317 = scmp.eq.s32.totalorder %s33, 1
      %p318 = por %p316, %p317
      %p319 = scmp.ne.s32.totalorder %s310, %s311
      %p320 = scmp.eq.s32.totalorder %s33, 0
      %p321 = por %p319, %p320
      %p322 = scmp.ne.s32.totalorder %s310, %s311
      %p323 = scmp.eq.s32.totalorder %s34, 1
      %p324 = por %p322, %p323
      %p326 = scmp.ne.s32.totalorder %s311, %s325
      %p327 = scmp.eq.s32.totalorder %s34, 0
      %p328 = por %p326, %p327
      %s330 = sadd.s32 %s329, 1
      %p333 = scmp.eq.s32.totalorder %s28, 1
      %p334 = scmp.ne.s32.totalorder %s329, %s331
      %p335 = scmp.eq.s32.totalorder %s28, 0
      %p336 = por %p334, %p335
      %p337 = scmp.ne.s32.totalorder %s329, %s331
      %p338 = scmp.eq.s32.totalorder %s33, 1
      %p339 = por %p337, %p338
      %p340 = scmp.ne.s32.totalorder %s331, %s332
      %p341 = scmp.eq.s32.totalorder %s33, 0
      %p342 = por %p340, %p341
      %p343 = scmp.ne.s32.totalorder %s331, %s332
      %p344 = scmp.eq.s32.totalorder %s34, 1
      %p345 = por %p343, %p344
      %p347 = scmp.ne.s32.totalorder %s332, %s346
      %p348 = scmp.eq.s32.totalorder %s34, 0
      %p349 = por %p347, %p348
      %s350 = ssub.s32 %s28, %s35
      %p351 = scmp.eq.s32.totalorder %s350, 0
      %s353 = sadd.s32 %s352, 1
      %s354 = scalar_select %p351, %s352, %s353
      %p357 = pneg %p351
      %p358 = scmp.eq.s32.totalorder %s28, 1
      %p359 = por %p357, %p358
      %p360 = scmp.ne.s32.totalorder %s352, %s355
      %p361 = scmp.eq.s32.totalorder %s28, 0
      %p362 = por %p360, %p361
      %p363 = scmp.ne.s32.totalorder %s352, %s355
      %p364 = scmp.eq.s32.totalorder %s33, 1
      %p365 = por %p363, %p364
      %p366 = scmp.ne.s32.totalorder %s355, %s356
      %p367 = scmp.eq.s32.totalorder %s33, 0
      %p368 = por %p366, %p367
      %p369 = scmp.ne.s32.totalorder %s355, %s356
      %p370 = scmp.eq.s32.totalorder %s34, 1
      %p371 = por %p369, %p370
      %p373 = scmp.ne.s32.totalorder %s356, %s372
      %p374 = scmp.eq.s32.totalorder %s34, 0
      %p375 = por %p373, %p374
      %p376 = scmp.le.s32.totalorder 1, %s28
      %p377 = scmp.lt.s32.totalorder %s28, 3
      %p378 = pnand %p376, %p377
      %p379 = pneg %p378
      // Predicated region
      $region9: #{tpu_custom_call.1} parent=5 // pred_check
        _
      $region10: #{tpu_custom_call.1} parent=5 // pred_check_branch
        %381 = sbr.rel (%p378) target = $region12
      $region11: #{tpu_custom_call.1} parent=5 // pred_region
        %s382 = ssub.s32 %s28, 1
        // Predicated region
        $region13: #{tpu_custom_call.1} parent=11 // pred_check
          %p383 = pneg %p49
        $region14: #{tpu_custom_call.1} parent=11 // pred_check_branch
          %385 = sbr.rel (%p383) target = $region16
        $region15: #{tpu_custom_call.1} parent=11 // pred_region
          _
        $region16: #{tpu_custom_call.1} parent=11 // pred_fallthru
          _
        // Predicated region
        $region17: #{tpu_custom_call.1} parent=11 // pred_check
          %p386 = pneg %p174
        $region18: #{tpu_custom_call.1} parent=11 // pred_check_branch
          %388 = sbr.rel (%p386) target = $region20
        $region19: #{tpu_custom_call.1} parent=11 // pred_region
          _
        $region20: #{tpu_custom_call.1} parent=11 // pred_fallthru
          _
        // Predicated region
        $region21: #{tpu_custom_call.1} parent=11 // pred_check
          %p389 = pneg %p195
        $region22: #{tpu_custom_call.1} parent=11 // pred_check_branch
          %391 = sbr.rel (%p389) target = $region24
        $region23: #{tpu_custom_call.1} parent=11 // pred_region
          _
        $region24: #{tpu_custom_call.1} parent=11 // pred_fallthru
          _
        // Predicated region
        $region25: #{tpu_custom_call.1} parent=11 // pred_check
          %p392 = pneg %p216
        $region26: #{tpu_custom_call.1} parent=11 // pred_check_branch
          %394 = sbr.rel (%p392) target = $region28
        $region27: #{tpu_custom_call.1} parent=11 // pred_region
          _
        $region28: #{tpu_custom_call.1} parent=11 // pred_fallthru
          _
        // Predicated region
        $region29: #{tpu_custom_call.1} parent=11 // pred_check
          %p395 = pneg %p237
        $region30: #{tpu_custom_call.1} parent=11 // pred_check_branch
          %397 = sbr.rel (%p395) target = $region32
        $region31: #{tpu_custom_call.1} parent=11 // pred_region
          _
        $region32: #{tpu_custom_call.1} parent=11 // pred_fallthru
          _
        // Predicated region
        $region33: #{tpu_custom_call.1} parent=11 // pred_check
          %p398 = pneg %p258
        $region34: #{tpu_custom_call.1} parent=11 // pred_check_branch
          %400 = sbr.rel (%p398) target = $region36
        $region35: #{tpu_custom_call.1} parent=11 // pred_region
          _
        $region36: #{tpu_custom_call.1} parent=11 // pred_fallthru
          _
        // Predicated region
        $region37: #{tpu_custom_call.1} parent=11 // pred_check
          %p401 = pneg %p279
        $region38: #{tpu_custom_call.1} parent=11 // pred_check_branch
          %403 = sbr.rel (%p401) target = $region40
        $region39: #{tpu_custom_call.1} parent=11 // pred_region
          _
        $region40: #{tpu_custom_call.1} parent=11 // pred_fallthru
          _
        // Predicated region
        $region41: #{tpu_custom_call.1} parent=11 // pred_check
          %p404 = pneg %p300
        $region42: #{tpu_custom_call.1} parent=11 // pred_check_branch
          %406 = sbr.rel (%p404) target = $region44
        $region43: #{tpu_custom_call.1} parent=11 // pred_region
          _
        $region44: #{tpu_custom_call.1} parent=11 // pred_fallthru
          _
        // Predicated region
        $region45: #{tpu_custom_call.1} parent=11 // pred_check
          %p407 = pneg %p321
        $region46: #{tpu_custom_call.1} parent=11 // pred_check_branch
          %409 = sbr.rel (%p407) target = $region48
        $region47: #{tpu_custom_call.1} parent=11 // pred_region
          _
        $region48: #{tpu_custom_call.1} parent=11 // pred_fallthru
          _
      $region12: #{tpu_custom_call.1} parent=5 // pred_fallthru
        _
      %p410 = scmp.lt.s32.totalorder %s28, 2
      // Predicated region
      $region49: #{tpu_custom_call.1} parent=5 // pred_check
        %p411 = pneg %p410
      $region50: #{tpu_custom_call.1} parent=5 // pred_check_branch
        %413 = sbr.rel (%p411) target = $region52
      $region51: #{tpu_custom_call.1} parent=5 // pred_region
        // Predicated region
        $region53: #{tpu_custom_call.1} parent=51 // pred_check
          %p414 = pneg %p69
        $region54: #{tpu_custom_call.1} parent=51 // pred_check_branch
          %416 = sbr.rel (%p414) target = $region56
        $region55: #{tpu_custom_call.1} parent=51 // pred_region
          %s417 = smul.u32 4, %s28
          %p418 = scmp.lt.s32.totalorder %s417, 7
          %s419 = scalar_select %p418, %s417, 7
          %s420 = scalar_lea.vmem %s1, %s419
          %s421 = smul.u32 4, %s28
        $region56: #{tpu_custom_call.1} parent=51 // pred_fallthru
          _
        // Predicated region
        $region57: #{tpu_custom_call.1} parent=51 // pred_check
          %p422 = pneg %p95
        $region58: #{tpu_custom_call.1} parent=51 // pred_check_branch
          %424 = sbr.rel (%p422) target = $region60
        $region59: #{tpu_custom_call.1} parent=51 // pred_region
          %s425 = smul.u32 4, %s28
          %p426 = scmp.lt.s32.totalorder %s425, 7
          %s427 = scalar_select %p426, %s425, 7
          %s428 = scalar_lea.vmem %s2, %s427
          %s429 = smul.u32 4, %s28
        $region60: #{tpu_custom_call.1} parent=51 // pred_fallthru
          _
        // Predicated region
        $region61: #{tpu_custom_call.1} parent=51 // pred_check
          %p430 = pneg %p121
        $region62: #{tpu_custom_call.1} parent=51 // pred_check_branch
          %432 = sbr.rel (%p430) target = $region64
        $region63: #{tpu_custom_call.1} parent=51 // pred_region
          %s433 = smul.u32 64, %s28
          %p434 = scmp.lt.s32.totalorder %s433, 127
          %s435 = scalar_select %p434, %s433, 127
          %s436 = smul.addr %s435, 8
          %s437 = scalar_lea.vmem %s3, %s436
          %s438 = smul.u32 64, %s28
        $region64: #{tpu_custom_call.1} parent=51 // pred_fallthru
          _
        // Predicated region
        $region65: #{tpu_custom_call.1} parent=51 // pred_check
          %p439 = pneg %p147
        $region66: #{tpu_custom_call.1} parent=51 // pred_check_branch
          %441 = sbr.rel (%p439) target = $region68
        $region67: #{tpu_custom_call.1} parent=51 // pred_region
          %s442 = sand.u32 %s137, 1
          %s443 = scalar_lea.sflag [#allocation7], %s442
          %s444 = sand.u32 %s137, 1
          %s445 = smul.addr %s444, 512
          %s446 = scalar_lea.vmem [#allocation6], %s445
          %s447 = smul.u32 64, %s28
          %s449 = ssub.s32 8192, 8192
          %450 = vsyncadd %s443, %s449
          %s451 = smul.addr %s447, 128
          %s452 = scalar_lea.hbm %s4, %s451
          %s453 = sshll.u32 %s446, 4
          %s454 = int_to_ptr.vmem [resolvable:$true] %s453
          %459 = dma.hbm_to_vmem [thread:$0]  %s452, 8192, %s454, %s443, 128, 128, 8
        $region68: #{tpu_custom_call.1} parent=51 // pred_fallthru
          _
      $region52: #{tpu_custom_call.1} parent=5 // pred_fallthru
        _
      %p460 = scmp.le.s32.totalorder 1, %s28
      %p461 = scmp.lt.s32.totalorder %s28, 3
      %p462 = pnand %p460, %p461
      %p463 = pneg %p462
      // Predicated region
      $region69: #{tpu_custom_call.1} parent=5 // pred_check
        _
      $region70: #{tpu_custom_call.1} parent=5 // pred_check_branch
        %465 = sbr.rel (%p462) target = $region72
      $region71: #{tpu_custom_call.1} parent=5 // pred_region
        %s466 = ssub.s32 %s28, 1
        %s467 = sand.u32 %s140, 1
        %s468 = scalar_lea.sflag [#allocation7], %s467
        %s469 = sand.u32 %s140, 1
        %s470 = smul.addr %s469, 512
        %s471 = scalar_lea.vmem [#allocation6], %s470
        // Predicated region
        $region73: #{tpu_custom_call.1} parent=71 // pred_check
          %p472 = pneg %p153
        $region74: #{tpu_custom_call.1} parent=71 // pred_check_branch
          %474 = sbr.rel (%p472) target = $region76
        $region75: #{tpu_custom_call.1} parent=71 // pred_region
          %475 = dma.done %s468, 8192
        $region76: #{tpu_custom_call.1} parent=71 // pred_fallthru
          _
        %p476 = pneg %p49
        %p477 = pneg %p46
        %s478 = smul.u32 4, %s33
        %p479 = scmp.lt.s32.totalorder %s478, 7
        %s480 = scalar_select %p479, %s478, 7
        %s481 = scalar_lea.vmem %s1, %s480
        %p482 = pneg %p75
        %p483 = pneg %p72
        %s484 = smul.u32 4, %s33
        %p485 = scmp.lt.s32.totalorder %s484, 7
        %s486 = scalar_select %p485, %s484, 7
        %s487 = scalar_lea.vmem %s2, %s486
        %p488 = pneg %p101
        %p489 = pneg %p98
        %s490 = smul.u32 64, %s33
        %p491 = scmp.lt.s32.totalorder %s490, 127
        %s492 = scalar_select %p491, %s490, 127
        %s493 = smul.addr %s492, 8
        %s494 = scalar_lea.vmem %s3, %s493
        %p495 = pneg %p127
        %p496 = pneg %p124
        %s497 = sand.u32 %s140, 1
        %s498 = scalar_lea.sflag [#allocation7], %s497
        %s499 = sand.u32 %s140, 1
        %s500 = smul.addr %s499, 512
        %s501 = scalar_lea.vmem [#allocation6], %s500
        %p502 = pneg %p153
        %p503 = pneg %p150
        %p504 = pneg %p174
        %p505 = pneg %p171
        %p506 = pneg %p195
        %p507 = pneg %p192
        %p508 = pneg %p216
        %p509 = pneg %p213
        %p510 = pneg %p237
        %p511 = pneg %p234
        %p512 = pneg %p258
        %p513 = pneg %p255
        %p514 = pneg %p279
        %p515 = pneg %p276
        %p516 = pneg %p300
        %p517 = pneg %p297
        %p518 = pneg %p321
        %p519 = pneg %p318
        %p520 = pneg %p342
        %p521 = pneg %p339
        %p522 = pneg %p368
        %p523 = pneg %p365
        %s524 = sand.u32 %s355, 1
        %s525 = scalar_lea.sflag [#allocation11], %s524
        %s526 = sand.u32 %s355, 1
        %s527 = smul.addr %s526, 512
        %s528 = scalar_lea.vmem [#allocation10], %s527
        %s529 = smul.u32 4, %s33
        %p530 = scmp.lt.s32.totalorder %s529, 7
        %s531 = scalar_select %p530, %s529, 7
        %s532 = scalar_lea.vmem %s1, %s531
        %s533 = smul.u32 4, %s33
        %s534 = smul.u32 4, %s33
        %p535 = scmp.lt.s32.totalorder %s534, 7
        %s536 = scalar_select %p535, %s534, 7
        %s537 = scalar_lea.vmem %s2, %s536
        %s538 = smul.u32 4, %s33
        %s539 = smul.u32 64, %s33
        %p540 = scmp.lt.s32.totalorder %s539, 127
        %s541 = scalar_select %p540, %s539, 127
        %s542 = smul.addr %s541, 8
        %s543 = scalar_lea.vmem %s3, %s542
        %s544 = smul.u32 64, %s33
        %s545 = smul.u32 64, %s33
        %s546 = smul.u32 64, %s33
        %p548 = scmp.eq.s32.totalorder %s33, 0
        // Predicated region
        $region77: #{tpu_custom_call.1} parent=71 // pred_check
          %p549 = pneg %p548
        $region78: #{tpu_custom_call.1} parent=71 // pred_check_branch
          %551 = sbr.rel (%p549) target = $region80
        $region79: #{tpu_custom_call.1} parent=71 // pred_region
          %v552 = vld [vmem:[%s0] sm:$0xff]
          %v553 = vld [vmem:[%s0 + $0x8] sm:$0xff]
          %v554 = vld [vmem:[%s0 + $0x10] sm:$0xff]
          %v555 = vld [vmem:[%s0 + $0x18] sm:$0xff]
          %v556 = vld [vmem:[%s0 + $0x20] sm:$0xff]
          %v557 = vld [vmem:[%s0 + $0x28] sm:$0xff]
          %v558 = vld [vmem:[%s0 + $0x30] sm:$0xff]
          %v559 = vld [vmem:[%s0 + $0x38] sm:$0xff]
          %v560 = vld [vmem:[%s0 + $0x40] sm:$0xff]
          %v561 = vld [vmem:[%s0 + $0x48] sm:$0xff]
          %v562 = vld [vmem:[%s0 + $0x50] sm:$0xff]
          %v563 = vld [vmem:[%s0 + $0x58] sm:$0xff]
          %v564 = vld [vmem:[%s0 + $0x60] sm:$0xff]
          %v565 = vld [vmem:[%s0 + $0x68] sm:$0xff]
          %v566 = vld [vmem:[%s0 + $0x70] sm:$0xff]
          %v567 = vld [vmem:[%s0 + $0x78] sm:$0xff]
          %v568 = vld [vmem:[%s5] sm:$0xff]
          %v569 = vld [vmem:[%s5 + $0x8] sm:$0xff]
          %v570 = vld [vmem:[%s5 + $0x10] sm:$0xff]
          %v571 = vld [vmem:[%s5 + $0x18] sm:$0xff]
          %v572 = vld [vmem:[%s5 + $0x20] sm:$0xff]
          %v573 = vld [vmem:[%s5 + $0x28] sm:$0xff]
          %v574 = vld [vmem:[%s5 + $0x30] sm:$0xff]
          %v575 = vld [vmem:[%s5 + $0x38] sm:$0xff]
          %v576 = vld [vmem:[%s5 + $0x40] sm:$0xff]
          %v577 = vld [vmem:[%s5 + $0x48] sm:$0xff]
          %v578 = vld [vmem:[%s5 + $0x50] sm:$0xff]
          %v579 = vld [vmem:[%s5 + $0x58] sm:$0xff]
          %v580 = vld [vmem:[%s5 + $0x60] sm:$0xff]
          %v581 = vld [vmem:[%s5 + $0x68] sm:$0xff]
          %v582 = vld [vmem:[%s5 + $0x70] sm:$0xff]
          %v583 = vld [vmem:[%s5 + $0x78] sm:$0xff]
          %584 = vmatprep.subr.mxu0 0.0
          %585 = vmatpush1.msra.mxu0 %v568
          %586 = vmatprep.subr.mxu0 0.0
          %587 = vmatpush1.msra.mxu0 %v569
          %588 = vmatprep.subr.mxu0 0.0
          %589 = vmatpush1.msra.mxu0 %v570
          %590 = vmatprep.subr.mxu0 0.0
          %591 = vmatpush1.msra.mxu0 %v571
          %592 = vmatprep.subr.mxu0 0.0
          %593 = vmatpush1.msra.mxu0 %v572
          %594 = vmatprep.subr.mxu0 0.0
          %595 = vmatpush1.msra.mxu0 %v573
          %596 = vmatprep.subr.mxu0 0.0
          %597 = vmatpush1.msra.mxu0 %v574
          %598 = vmatprep.subr.mxu0 0.0
          %599 = vmatpush1.msra.mxu0 %v575
          %600 = vmatprep.subr.mxu0 0.0
          %601 = vmatpush1.msra.mxu0 %v576
          %602 = vmatprep.subr.mxu0 0.0
          %603 = vmatpush1.msra.mxu0 %v577
          %604 = vmatprep.subr.mxu0 0.0
          %605 = vmatpush1.msra.mxu0 %v578
          %606 = vmatprep.subr.mxu0 0.0
          %607 = vmatpush1.msra.mxu0 %v579
          %608 = vmatprep.subr.mxu0 0.0
          %609 = vmatpush1.msra.mxu0 %v580
          %610 = vmatprep.subr.mxu0 0.0
          %611 = vmatpush1.msra.mxu0 %v581
          %612 = vmatprep.subr.mxu0 0.0
          %613 = vmatpush1.msra.mxu0 %v582
          %614 = vmatprep.subr.mxu0 0.0
          %615 = vmatpush1.msra.mxu0 %v583
          %616 = vmatprep.subr.mxu0 0.0
          %617 = vmatpush1.msra.mxu0 0.0
          %618 = vmatprep.subr.mxu0 0.0
          %619 = vmatpush1.msra.mxu0 0.0
          %620 = vmatprep.subr.mxu0 0.0
          %621 = vmatpush1.msra.mxu0 0.0
          %622 = vmatprep.subr.mxu0 0.0
          %623 = vmatpush1.msra.mxu0 0.0
          %624 = vmatprep.subr.mxu0 0.0
          %625 = vmatpush1.msra.mxu0 0.0
          %626 = vmatprep.subr.mxu0 0.0
          %627 = vmatpush1.msra.mxu0 0.0
          %628 = vmatprep.subr.mxu0 0.0
          %629 = vmatpush1.msra.mxu0 0.0
          %630 = vmatprep.subr.mxu0 0.0
          %631 = vmatpush1.msra.mxu0 0.0
          %632 = vmatprep.subr.mxu0 0.0
          %633 = vmatpush1.msra.mxu0 0.0
          %634 = vmatprep.subr.mxu0 0.0
          %635 = vmatpush1.msra.mxu0 0.0
          %636 = vmatprep.subr.mxu0 0.0
          %637 = vmatpush1.msra.mxu0 0.0
          %638 = vmatprep.subr.mxu0 0.0
          %639 = vmatpush1.msra.mxu0 0.0
          %640 = vmatprep.subr.mxu0 0.0
          %641 = vmatpush1.msra.mxu0 0.0
          %642 = vmatprep.subr.mxu0 0.0
          %643 = vmatpush1.msra.mxu0 0.0
          %644 = vmatprep.subr.mxu0 0.0
          %645 = vmatpush1.msra.mxu0 0.0
          %646 = vmatprep.subr.mxu0 0.0
          %647 = vmatpush1.msra.mxu0 0.0
          %648 = vmatprep.mubr.f32.mxu0 0.0
          %649 = vmatmul.mubr.f32.gmra.mrb[0].mxu0 %v552
          %v650 = vpop.f32.mrb[0].mxu0
          %v651 = vadd.f32 0.0, %v650
          %v652 = vpop.f32.mrb[0].mxu0
          %653 = vmatprep.mubr.f32.mxu0 0.0
          %654 = vmatmul.mubr.f32.gmra.mrb[0].mxu0 %v553
          %v655 = vpop.f32.mrb[0].mxu0
          %v656 = vadd.f32 0.0, %v655
          %v657 = vpop.f32.mrb[0].mxu0
          %658 = vmatprep.mubr.f32.mxu0 0.0
          %659 = vmatmul.mubr.f32.gmra.mrb[0].mxu0 %v554
          %v660 = vpop.f32.mrb[0].mxu0
          %v661 = vadd.f32 0.0, %v660
          %v662 = vpop.f32.mrb[0].mxu0
          %663 = vmatprep.mubr.f32.mxu0 0.0
          %664 = vmatmul.mubr.f32.gmra.mrb[0].mxu0 %v555
          %v665 = vpop.f32.mrb[0].mxu0
          %v666 = vadd.f32 0.0, %v665
          %v667 = vpop.f32.mrb[0].mxu0
          %668 = vmatprep.mubr.f32.mxu0 0.0
          %669 = vmatmul.mubr.f32.gmra.mrb[0].mxu0 %v556
          %v670 = vpop.f32.mrb[0].mxu0
          %v671 = vadd.f32 0.0, %v670
          %v672 = vpop.f32.mrb[0].mxu0
          %673 = vmatprep.mubr.f32.mxu0 0.0
          %674 = vmatmul.mubr.f32.gmra.mrb[0].mxu0 %v557
          %v675 = vpop.f32.mrb[0].mxu0
          %v676 = vadd.f32 0.0, %v675
          %v677 = vpop.f32.mrb[0].mxu0
          %678 = vmatprep.mubr.f32.mxu0 0.0
          %679 = vmatmul.mubr.f32.gmra.mrb[0].mxu0 %v558
          %v680 = vpop.f32.mrb[0].mxu0
          %v681 = vadd.f32 0.0, %v680
          %v682 = vpop.f32.mrb[0].mxu0
          %683 = vmatprep.mubr.f32.mxu0 0.0
          %684 = vmatmul.mubr.f32.gmra.mrb[0].mxu0 %v559
          %v685 = vpop.f32.mrb[0].mxu0
          %v686 = vadd.f32 0.0, %v685
          %v687 = vpop.f32.mrb[0].mxu0
          %688 = vmatprep.mubr.f32.mxu0 0.0
          %689 = vmatmul.mubr.f32.gmra.mrb[0].mxu0 %v560
          %v690 = vpop.f32.mrb[0].mxu0
          %v691 = vadd.f32 0.0, %v690
          %v692 = vpop.f32.mrb[0].mxu0
          %693 = vmatprep.mubr.f32.mxu0 0.0
          %694 = vmatmul.mubr.f32.gmra.mrb[0].mxu0 %v561
          %v695 = vpop.f32.mrb[0].mxu0
          %v696 = vadd.f32 0.0, %v695
          %v697 = vpop.f32.mrb[0].mxu0
          %698 = vmatprep.mubr.f32.mxu0 0.0
          %699 = vmatmul.mubr.f32.gmra.mrb[0].mxu0 %v562
          %v700 = vpop.f32.mrb[0].mxu0
          %v701 = vadd.f32 0.0, %v700
          %v702 = vpop.f32.mrb[0].mxu0
          %703 = vmatprep.mubr.f32.mxu0 0.0
          %704 = vmatmul.mubr.f32.gmra.mrb[0].mxu0 %v563
          %v705 = vpop.f32.mrb[0].mxu0
          %v706 = vadd.f32 0.0, %v705
          %v707 = vpop.f32.mrb[0].mxu0
          %708 = vmatprep.mubr.f32.mxu0 0.0
          %709 = vmatmul.mubr.f32.gmra.mrb[0].mxu0 %v564
          %v710 = vpop.f32.mrb[0].mxu0
          %v711 = vadd.f32 0.0, %v710
          %v712 = vpop.f32.mrb[0].mxu0
          %713 = vmatprep.mubr.f32.mxu0 0.0
          %714 = vmatmul.mubr.f32.gmra.mrb[0].mxu0 %v565
          %v715 = vpop.f32.mrb[0].mxu0
          %v716 = vadd.f32 0.0, %v715
          %v717 = vpop.f32.mrb[0].mxu0
          %718 = vmatprep.mubr.f32.mxu0 0.0
          %719 = vmatmul.mubr.f32.gmra.mrb[0].mxu0 %v566
          %v720 = vpop.f32.mrb[0].mxu0
          %v721 = vadd.f32 0.0, %v720
          %v722 = vpop.f32.mrb[0].mxu0
          %723 = vmatprep.mubr.f32.mxu0 0.0
          %724 = vmatmul.mubr.f32.gmra.mrb[0].mxu0 %v567
          %v725 = vpop.f32.mrb[0].mxu0
          %v726 = vadd.f32 0.0, %v725
          %v727 = vpop.f32.mrb[0].mxu0
          %728 = vdwg.mxu0
          %v729 = vpack.c.bf16 %v656, %v651
          %v730 = vpack.c.bf16 %v666, %v661
          %v731 = vpack.c.bf16 %v676, %v671
          %v732 = vpack.c.bf16 %v686, %v681
          %v733 = vpack.c.bf16 %v696, %v691
          %v734 = vpack.c.bf16 %v706, %v701
          %v735 = vpack.c.bf16 %v716, %v711
          %v736 = vpack.c.bf16 %v726, %v721
          %737 = vst [vmem:[#allocation2] sm:$0xff] %v729
          %738 = vst [vmem:[#allocation2 + $0x8] sm:$0xff] %v730
          %739 = vst [vmem:[#allocation2 + $0x10] sm:$0xff] %v731
          %740 = vst [vmem:[#allocation2 + $0x18] sm:$0xff] %v732
          %741 = vst [vmem:[#allocation2 + $0x20] sm:$0xff] %v733
          %742 = vst [vmem:[#allocation2 + $0x28] sm:$0xff] %v734
          %743 = vst [vmem:[#allocation2 + $0x30] sm:$0xff] %v735
          %744 = vst [vmem:[#allocation2 + $0x38] sm:$0xff] %v736
          %v745 = vld [vmem:[%s6] sm:$0xff]
          %v746 = vld [vmem:[%s6 + $0x8] sm:$0xff]
          %v747 = vld [vmem:[%s6 + $0x10] sm:$0xff]
          %v748 = vld [vmem:[%s6 + $0x18] sm:$0xff]
          %v749 = vld [vmem:[%s6 + $0x20] sm:$0xff]
          %v750 = vld [vmem:[%s6 + $0x28] sm:$0xff]
          %v751 = vld [vmem:[%s6 + $0x30] sm:$0xff]
          %v752 = vld [vmem:[%s6 + $0x38] sm:$0xff]
          %v753 = vld [vmem:[%s6 + $0x40] sm:$0xff]
          %v754 = vld [vmem:[%s6 + $0x48] sm:$0xff]
          %v755 = vld [vmem:[%s6 + $0x50] sm:$0xff]
          %v756 = vld [vmem:[%s6 + $0x58] sm:$0xff]
          %v757 = vld [vmem:[%s6 + $0x60] sm:$0xff]
          %v758 = vld [vmem:[%s6 + $0x68] sm:$0xff]
          %v759 = vld [vmem:[%s6 + $0x70] sm:$0xff]
          %v760 = vld [vmem:[%s6 + $0x78] sm:$0xff]
          %761 = vmatprep.subr.mxu0 0.0
          %762 = vmatpush1.msra.mxu0 %v745
          %763 = vmatprep.subr.mxu0 0.0
          %764 = vmatpush1.msra.mxu0 %v746
          %765 = vmatprep.subr.mxu0 0.0
          %766 = vmatpush1.msra.mxu0 %v747
          %767 = vmatprep.subr.mxu0 0.0
          %768 = vmatpush1.msra.mxu0 %v748
          %769 = vmatprep.subr.mxu0 0.0
          %770 = vmatpush1.msra.mxu0 %v749
          %771 = vmatprep.subr.mxu0 0.0
          %772 = vmatpush1.msra.mxu0 %v750
          %773 = vmatprep.subr.mxu0 0.0
          %774 = vmatpush1.msra.mxu0 %v751
          %775 = vmatprep.subr.mxu0 0.0
          %776 = vmatpush1.msra.mxu0 %v752
          %777 = vmatprep.subr.mxu0 0.0
          %778 = vmatpush1.msra.mxu0 %v753
          %779 = vmatprep.subr.mxu0 0.0
          %780 = vmatpush1.msra.mxu0 %v754
          %781 = vmatprep.subr.mxu0 0.0
          %782 = vmatpush1.msra.mxu0 %v755
          %783 = vmatprep.subr.mxu0 0.0
          %784 = vmatpush1.msra.mxu0 %v756
          %785 = vmatprep.subr.mxu0 0.0
          %786 = vmatpush1.msra.mxu0 %v757
          %787 = vmatprep.subr.mxu0 0.0
          %788 = vmatpush1.msra.mxu0 %v758
          %789 = vmatprep.subr.mxu0 0.0
          %790 = vmatpush1.msra.mxu0 %v759
          %791 = vmatprep.subr.mxu0 0.0
          %792 = vmatpush1.msra.mxu0 %v760
          %793 = vmatprep.subr.mxu0 0.0
          %794 = vmatpush1.msra.mxu0 0.0
          %795 = vmatprep.subr.mxu0 0.0
          %796 = vmatpush1.msra.mxu0 0.0
          %797 = vmatprep.subr.mxu0 0.0
          %798 = vmatpush1.msra.mxu0 0.0
          %799 = vmatprep.subr.mxu0 0.0
          %800 = vmatpush1.msra.mxu0 0.0
          %801 = vmatprep.subr.mxu0 0.0
          %802 = vmatpush1.msra.mxu0 0.0
          %803 = vmatprep.subr.mxu0 0.0
          %804 = vmatpush1.msra.mxu0 0.0
          %805 = vmatprep.subr.mxu0 0.0
          %806 = vmatpush1.msra.mxu0 0.0
          %807 = vmatprep.subr.mxu0 0.0
          %808 = vmatpush1.msra.mxu0 0.0
          %809 = vmatprep.subr.mxu0 0.0
          %810 = vmatpush1.msra.mxu0 0.0
          %811 = vmatprep.subr.mxu0 0.0
          %812 = vmatpush1.msra.mxu0 0.0
          %813 = vmatprep.subr.mxu0 0.0
          %814 = vmatpush1.msra.mxu0 0.0
          %815 = vmatprep.subr.mxu0 0.0
          %816 = vmatpush1.msra.mxu0 0.0
          %817 = vmatprep.subr.mxu0 0.0
          %818 = vmatpush1.msra.mxu0 0.0
          %819 = vmatprep.subr.mxu0 0.0
          %820 = vmatpush1.msra.mxu0 0.0
          %821 = vmatprep.subr.mxu0 0.0
          %822 = vmatpush1.msra.mxu0 0.0
          %823 = vmatprep.subr.mxu0 0.0
          %824 = vmatpush1.msra.mxu0 0.0
          %825 = vmatprep.mubr.f32.mxu0 0.0
          %826 = vmatmul.mubr.f32.gmra.mrb[0].mxu0 %v552
          %v827 = vpop.f32.mrb[0].mxu0
          %v828 = vadd.f32 0.0, %v827
          %v829 = vpop.f32.mrb[0].mxu0
          %830 = vmatprep.mubr.f32.mxu0 0.0
          %831 = vmatmul.mubr.f32.gmra.mrb[0].mxu0 %v553
          %v832 = vpop.f32.mrb[0].mxu0
          %v833 = vadd.f32 0.0, %v832
          %v834 = vpop.f32.mrb[0].mxu0
          %835 = vmatprep.mubr.f32.mxu0 0.0
          %836 = vmatmul.mubr.f32.gmra.mrb[0].mxu0 %v554
          %v837 = vpop.f32.mrb[0].mxu0
          %v838 = vadd.f32 0.0, %v837
          %v839 = vpop.f32.mrb[0].mxu0
          %840 = vmatprep.mubr.f32.mxu0 0.0
          %841 = vmatmul.mubr.f32.gmra.mrb[0].mxu0 %v555
          %v842 = vpop.f32.mrb[0].mxu0
          %v843 = vadd.f32 0.0, %v842
          %v844 = vpop.f32.mrb[0].mxu0
          %845 = vmatprep.mubr.f32.mxu0 0.0
          %846 = vmatmul.mubr.f32.gmra.mrb[0].mxu0 %v556
          %v847 = vpop.f32.mrb[0].mxu0
          %v848 = vadd.f32 0.0, %v847
          %v849 = vpop.f32.mrb[0].mxu0
          %850 = vmatprep.mubr.f32.mxu0 0.0
          %851 = vmatmul.mubr.f32.gmra.mrb[0].mxu0 %v557
          %v852 = vpop.f32.mrb[0].mxu0
          %v853 = vadd.f32 0.0, %v852
          %v854 = vpop.f32.mrb[0].mxu0
          %855 = vmatprep.mubr.f32.mxu0 0.0
          %856 = vmatmul.mubr.f32.gmra.mrb[0].mxu0 %v558
          %v857 = vpop.f32.mrb[0].mxu0
          %v858 = vadd.f32 0.0, %v857
          %v859 = vpop.f32.mrb[0].mxu0
          %860 = vmatprep.mubr.f32.mxu0 0.0
          %861 = vmatmul.mubr.f32.gmra.mrb[0].mxu0 %v559
          %v862 = vpop.f32.mrb[0].mxu0
          %v863 = vadd.f32 0.0, %v862
          %v864 = vpop.f32.mrb[0].mxu0
          %865 = vmatprep.mubr.f32.mxu0 0.0
          %866 = vmatmul.mubr.f32.gmra.mrb[0].mxu0 %v560
          %v867 = vpop.f32.mrb[0].mxu0
          %v868 = vadd.f32 0.0, %v867
          %v869 = vpop.f32.mrb[0].mxu0
          %870 = vmatprep.mubr.f32.mxu0 0.0
          %871 = vmatmul.mubr.f32.gmra.mrb[0].mxu0 %v561
          %v872 = vpop.f32.mrb[0].mxu0
          %v873 = vadd.f32 0.0, %v872
          %v874 = vpop.f32.mrb[0].mxu0
          %875 = vmatprep.mubr.f32.mxu0 0.0
          %876 = vmatmul.mubr.f32.gmra.mrb[0].mxu0 %v562
          %v877 = vpop.f32.mrb[0].mxu0
          %v878 = vadd.f32 0.0, %v877
          %v879 = vpop.f32.mrb[0].mxu0
          %880 = vmatprep.mubr.f32.mxu0 0.0
          %881 = vmatmul.mubr.f32.gmra.mrb[0].mxu0 %v563
          %v882 = vpop.f32.mrb[0].mxu0
          %v883 = vadd.f32 0.0, %v882
          %v884 = vpop.f32.mrb[0].mxu0
          %885 = vmatprep.mubr.f32.mxu0 0.0
          %886 = vmatmul.mubr.f32.gmra.mrb[0].mxu0 %v564
          %v887 = vpop.f32.mrb[0].mxu0
          %v888 = vadd.f32 0.0, %v887
          %v889 = vpop.f32.mrb[0].mxu0
          %890 = vmatprep.mubr.f32.mxu0 0.0
          %891 = vmatmul.mubr.f32.gmra.mrb[0].mxu0 %v565
          %v892 = vpop.f32.mrb[0].mxu0
          %v893 = vadd.f32 0.0, %v892
          %v894 = vpop.f32.mrb[0].mxu0
          %895 = vmatprep.mubr.f32.mxu0 0.0
          %896 = vmatmul.mubr.f32.gmra.mrb[0].mxu0 %v566
          %v897 = vpop.f32.mrb[0].mxu0
          %v898 = vadd.f32 0.0, %v897
          %v899 = vpop.f32.mrb[0].mxu0
          %900 = vmatprep.mubr.f32.mxu0 0.0
          %901 = vmatmul.mubr.f32.gmra.mrb[0].mxu0 %v567
          %v902 = vpop.f32.mrb[0].mxu0
          %v903 = vadd.f32 0.0, %v902
          %v904 = vpop.f32.mrb[0].mxu0
          %905 = vdwg.mxu0
          %v906 = vpack.c.bf16 %v833, %v828
          %v907 = vpack.c.bf16 %v843, %v838
          %v908 = vpack.c.bf16 %v853, %v848
          %v909 = vpack.c.bf16 %v863, %v858
          %v910 = vpack.c.bf16 %v873, %v868
          %v911 = vpack.c.bf16 %v883, %v878
          %v912 = vpack.c.bf16 %v893, %v888
          %v913 = vpack.c.bf16 %v903, %v898
          %914 = vst [vmem:[#allocation3] sm:$0xff] %v906
          %915 = vst [vmem:[#allocation3 + $0x8] sm:$0xff] %v907
          %916 = vst [vmem:[#allocation3 + $0x10] sm:$0xff] %v908
          %917 = vst [vmem:[#allocation3 + $0x18] sm:$0xff] %v909
          %918 = vst [vmem:[#allocation3 + $0x20] sm:$0xff] %v910
          %919 = vst [vmem:[#allocation3 + $0x28] sm:$0xff] %v911
          %920 = vst [vmem:[#allocation3 + $0x30] sm:$0xff] %v912
          %921 = vst [vmem:[#allocation3 + $0x38] sm:$0xff] %v913
          %v922 = vld [vmem:[%s10] sm:$0xff]
          %v923 = vld [vmem:[%s10 + $0x8] sm:$0xff]
          %v924 = vld [vmem:[%s10 + $0x10] sm:$0xff]
          %v925 = vld [vmem:[%s10 + $0x18] sm:$0xff]
          %v926 = vld [vmem:[%s10 + $0x20] sm:$0xff]
          %v927 = vld [vmem:[%s10 + $0x28] sm:$0xff]
          %v928 = vld [vmem:[%s10 + $0x30] sm:$0xff]
          %v929 = vld [vmem:[%s10 + $0x38] sm:$0xff]
          %v930 = vld [vmem:[%s10 + $0x40] sm:$0xff]
          %v931 = vld [vmem:[%s10 + $0x48] sm:$0xff]
          %v932 = vld [vmem:[%s10 + $0x50] sm:$0xff]
          %v933 = vld [vmem:[%s10 + $0x58] sm:$0xff]
          %v934 = vld [vmem:[%s10 + $0x60] sm:$0xff]
          %v935 = vld [vmem:[%s10 + $0x68] sm:$0xff]
          %v936 = vld [vmem:[%s10 + $0x70] sm:$0xff]
          %v937 = vld [vmem:[%s10 + $0x78] sm:$0xff]
          %938 = vmatprep.subr.mxu0 0.0
          %939 = vmatpush1.msra.mxu0 %v922
          %940 = vmatprep.subr.mxu0 0.0
          %941 = vmatpush1.msra.mxu0 %v923
          %942 = vmatprep.subr.mxu0 0.0
          %943 = vmatpush1.msra.mxu0 %v924
          %944 = vmatprep.subr.mxu0 0.0
          %945 = vmatpush1.msra.mxu0 %v925
          %946 = vmatprep.subr.mxu0 0.0
          %947 = vmatpush1.msra.mxu0 %v926
          %948 = vmatprep.subr.mxu0 0.0
          %949 = vmatpush1.msra.mxu0 %v927
          %950 = vmatprep.subr.mxu0 0.0
          %951 = vmatpush1.msra.mxu0 %v928
          %952 = vmatprep.subr.mxu0 0.0
          %953 = vmatpush1.msra.mxu0 %v929
          %954 = vmatprep.subr.mxu0 0.0
          %955 = vmatpush1.msra.mxu0 %v930
          %956 = vmatprep.subr.mxu0 0.0
          %957 = vmatpush1.msra.mxu0 %v931
          %958 = vmatprep.subr.mxu0 0.0
          %959 = vmatpush1.msra.mxu0 %v932
          %960 = vmatprep.subr.mxu0 0.0
          %961 = vmatpush1.msra.mxu0 %v933
          %962 = vmatprep.subr.mxu0 0.0
          %963 = vmatpush1.msra.mxu0 %v934
          %964 = vmatprep.subr.mxu0 0.0
          %965 = vmatpush1.msra.mxu0 %v935
          %966 = vmatprep.subr.mxu0 0.0
          %967 = vmatpush1.msra.mxu0 %v936
          %968 = vmatprep.subr.mxu0 0.0
          %969 = vmatpush1.msra.mxu0 %v937
          %970 = vmatprep.subr.mxu0 0.0
          %971 = vmatpush1.msra.mxu0 0.0
          %972 = vmatprep.subr.mxu0 0.0
          %973 = vmatpush1.msra.mxu0 0.0
          %974 = vmatprep.subr.mxu0 0.0
          %975 = vmatpush1.msra.mxu0 0.0
          %976 = vmatprep.subr.mxu0 0.0
          %977 = vmatpush1.msra.mxu0 0.0
          %978 = vmatprep.subr.mxu0 0.0
          %979 = vmatpush1.msra.mxu0 0.0
          %980 = vmatprep.subr.mxu0 0.0
          %981 = vmatpush1.msra.mxu0 0.0
          %982 = vmatprep.subr.mxu0 0.0
          %983 = vmatpush1.msra.mxu0 0.0
          %984 = vmatprep.subr.mxu0 0.0
          %985 = vmatpush1.msra.mxu0 0.0
          %986 = vmatprep.subr.mxu0 0.0
          %987 = vmatpush1.msra.mxu0 0.0
          %988 = vmatprep.subr.mxu0 0.0
          %989 = vmatpush1.msra.mxu0 0.0
          %990 = vmatprep.subr.mxu0 0.0
          %991 = vmatpush1.msra.mxu0 0.0
          %992 = vmatprep.subr.mxu0 0.0
          %993 = vmatpush1.msra.mxu0 0.0
          %994 = vmatprep.subr.mxu0 0.0
          %995 = vmatpush1.msra.mxu0 0.0
          %996 = vmatprep.subr.mxu0 0.0
          %997 = vmatpush1.msra.mxu0 0.0
          %998 = vmatprep.subr.mxu0 0.0
          %999 = vmatpush1.msra.mxu0 0.0
          %1000 = vmatprep.subr.mxu0 0.0
          %1001 = vmatpush1.msra.mxu0 0.0
          %1002 = vmatprep.mubr.f32.mxu0 0.0
          %1003 = vmatmul.mubr.f32.gmra.mrb[0].mxu0 %v552
          %v1004 = vpop.f32.mrb[0].mxu0
          %v1005 = vadd.f32 0.0, %v1004
          %v1006 = vpop.f32.mrb[0].mxu0
          %1007 = vmatprep.mubr.f32.mxu0 0.0
          %1008 = vmatmul.mubr.f32.gmra.mrb[0].mxu0 %v553
          %v1009 = vpop.f32.mrb[0].mxu0
          %v1010 = vadd.f32 0.0, %v1009
          %v1011 = vpop.f32.mrb[0].mxu0
          %1012 = vmatprep.mubr.f32.mxu0 0.0
          %1013 = vmatmul.mubr.f32.gmra.mrb[0].mxu0 %v554
          %v1014 = vpop.f32.mrb[0].mxu0
          %v1015 = vadd.f32 0.0, %v1014
          %v1016 = vpop.f32.mrb[0].mxu0
          %1017 = vmatprep.mubr.f32.mxu0 0.0
          %1018 = vmatmul.mubr.f32.gmra.mrb[0].mxu0 %v555
          %v1019 = vpop.f32.mrb[0].mxu0
          %v1020 = vadd.f32 0.0, %v1019
          %v1021 = vpop.f32.mrb[0].mxu0
          %1022 = vmatprep.mubr.f32.mxu0 0.0
          %1023 = vmatmul.mubr.f32.gmra.mrb[0].mxu0 %v556
          %v1024 = vpop.f32.mrb[0].mxu0
          %v1025 = vadd.f32 0.0, %v1024
          %v1026 = vpop.f32.mrb[0].mxu0
          %1027 = vmatprep.mubr.f32.mxu0 0.0
          %1028 = vmatmul.mubr.f32.gmra.mrb[0].mxu0 %v557
          %v1029 = vpop.f32.mrb[0].mxu0
          %v1030 = vadd.f32 0.0, %v1029
          %v1031 = vpop.f32.mrb[0].mxu0
          %1032 = vmatprep.mubr.f32.mxu0 0.0
          %1033 = vmatmul.mubr.f32.gmra.mrb[0].mxu0 %v558
          %v1034 = vpop.f32.mrb[0].mxu0
          %v1035 = vadd.f32 0.0, %v1034
          %v1036 = vpop.f32.mrb[0].mxu0
          %1037 = vmatprep.mubr.f32.mxu0 0.0
          %1038 = vmatmul.mubr.f32.gmra.mrb[0].mxu0 %v559
          %v1039 = vpop.f32.mrb[0].mxu0
          %v1040 = vadd.f32 0.0, %v1039
          %v1041 = vpop.f32.mrb[0].mxu0
          %1042 = vmatprep.mubr.f32.mxu0 0.0
          %1043 = vmatmul.mubr.f32.gmra.mrb[0].mxu0 %v560
          %v1044 = vpop.f32.mrb[0].mxu0
          %v1045 = vadd.f32 0.0, %v1044
          %v1046 = vpop.f32.mrb[0].mxu0
          %1047 = vmatprep.mubr.f32.mxu0 0.0
          %1048 = vmatmul.mubr.f32.gmra.mrb[0].mxu0 %v561
          %v1049 = vpop.f32.mrb[0].mxu0
          %v1050 = vadd.f32 0.0, %v1049
          %v1051 = vpop.f32.mrb[0].mxu0
          %1052 = vmatprep.mubr.f32.mxu0 0.0
          %1053 = vmatmul.mubr.f32.gmra.mrb[0].mxu0 %v562
          %v1054 = vpop.f32.mrb[0].mxu0
          %v1055 = vadd.f32 0.0, %v1054
          %v1056 = vpop.f32.mrb[0].mxu0
          %1057 = vmatprep.mubr.f32.mxu0 0.0
          %1058 = vmatmul.mubr.f32.gmra.mrb[0].mxu0 %v563
          %v1059 = vpop.f32.mrb[0].mxu0
          %v1060 = vadd.f32 0.0, %v1059
          %v1061 = vpop.f32.mrb[0].mxu0
          %1062 = vmatprep.mubr.f32.mxu0 0.0
          %1063 = vmatmul.mubr.f32.gmra.mrb[0].mxu0 %v564
          %v1064 = vpop.f32.mrb[0].mxu0
          %v1065 = vadd.f32 0.0, %v1064
          %v1066 = vpop.f32.mrb[0].mxu0
          %1067 = vmatprep.mubr.f32.mxu0 0.0
          %1068 = vmatmul.mubr.f32.gmra.mrb[0].mxu0 %v565
          %v1069 = vpop.f32.mrb[0].mxu0
          %v1070 = vadd.f32 0.0, %v1069
          %v1071 = vpop.f32.mrb[0].mxu0
          %1072 = vmatprep.mubr.f32.mxu0 0.0
          %1073 = vmatmul.mubr.f32.gmra.mrb[0].mxu0 %v566
          %v1074 = vpop.f32.mrb[0].mxu0
          %v1075 = vadd.f32 0.0, %v1074
          %v1076 = vpop.f32.mrb[0].mxu0
          %1077 = vmatprep.mubr.f32.mxu0 0.0
          %1078 = vmatmul.mubr.f32.gmra.mrb[0].mxu0 %v567
          %v1079 = vpop.f32.mrb[0].mxu0
          %v1080 = vadd.f32 0.0, %v1079
          %v1081 = vpop.f32.mrb[0].mxu0
          %1082 = vdwg.mxu0
          %1083 = vst [vmem:[#allocation4] sm:$0xff] %v1005
          %1084 = vst [vmem:[#allocation4 + $0x8] sm:$0xff] %v1010
          %1085 = vst [vmem:[#allocation4 + $0x10] sm:$0xff] %v1015
          %1086 = vst [vmem:[#allocation4 + $0x18] sm:$0xff] %v1020
          %1087 = vst [vmem:[#allocation4 + $0x20] sm:$0xff] %v1025
          %1088 = vst [vmem:[#allocation4 + $0x28] sm:$0xff] %v1030
          %1089 = vst [vmem:[#allocation4 + $0x30] sm:$0xff] %v1035
          %1090 = vst [vmem:[#allocation4 + $0x38] sm:$0xff] %v1040
          %1091 = vst [vmem:[#allocation4 + $0x40] sm:$0xff] %v1045
          %1092 = vst [vmem:[#allocation4 + $0x48] sm:$0xff] %v1050
          %1093 = vst [vmem:[#allocation4 + $0x50] sm:$0xff] %v1055
          %1094 = vst [vmem:[#allocation4 + $0x58] sm:$0xff] %v1060
          %1095 = vst [vmem:[#allocation4 + $0x60] sm:$0xff] %v1065
          %1096 = vst [vmem:[#allocation4 + $0x68] sm:$0xff] %v1070
          %1097 = vst [vmem:[#allocation4 + $0x70] sm:$0xff] %v1075
          %1098 = vst [vmem:[#allocation4 + $0x78] sm:$0xff] %v1080
          %1099 = vst [vmem:[#allocation5] sm:$0xff] 0.0
          %1100 = vst [vmem:[#allocation5 + $0x8] sm:$0xff] 0.0
          %1101 = vst [vmem:[#allocation5 + $0x10] sm:$0xff] 0.0
          %1102 = vst [vmem:[#allocation5 + $0x18] sm:$0xff] 0.0
          %1103 = vst [vmem:[#allocation5 + $0x20] sm:$0xff] 0.0
          %1104 = vst [vmem:[#allocation5 + $0x28] sm:$0xff] 0.0
          %1105 = vst [vmem:[#allocation5 + $0x30] sm:$0xff] 0.0
          %1106 = vst [vmem:[#allocation5 + $0x38] sm:$0xff] 0.0
          %1107 = vst [vmem:[#allocation5 + $0x40] sm:$0xff] 0.0
          %1108 = vst [vmem:[#allocation5 + $0x48] sm:$0xff] 0.0
          %1109 = vst [vmem:[#allocation5 + $0x50] sm:$0xff] 0.0
          %1110 = vst [vmem:[#allocation5 + $0x58] sm:$0xff] 0.0
          %1111 = vst [vmem:[#allocation5 + $0x60] sm:$0xff] 0.0
          %1112 = vst [vmem:[#allocation5 + $0x68] sm:$0xff] 0.0
          %1113 = vst [vmem:[#allocation5 + $0x70] sm:$0xff] 0.0
          %1114 = vst [vmem:[#allocation5 + $0x78] sm:$0xff] 0.0
        $region80: #{tpu_custom_call.1} parent=71 // pred_fallthru
          _
        %v1115 = vlaneseq
        %v1116 = vshrl.u32 %v1115, 7
        %v1117 = vadd.s32 %v1116, 8
        %v1118 = vadd.s32 %v1116, 16
        %v1119 = vadd.s32 %v1116, 24
        %v1120 = vadd.s32 %v1116, 32
        %v1121 = vadd.s32 %v1116, 40
        %v1122 = vadd.s32 %v1116, 48
        %v1123 = vadd.s32 %v1116, 56
        %v1124 = vadd.s32 %v1116, 64
        %v1125 = vadd.s32 %v1116, 72
        %v1126 = vadd.s32 %v1116, 80
        %v1127 = vadd.s32 %v1116, 88
        %v1128 = vadd.s32 %v1116, 96
        %v1129 = vadd.s32 %v1116, 104
        %v1130 = vadd.s32 %v1116, 112
        %v1131 = vadd.s32 %v1116, 120
        %v1132 = vld [vmem:[%s532] sm:$0xf]
        %v1133 = vlaneseq
        %v1134 = vshrl.u32 %v1133, 7
        %v1135 = vsub.s32 0, %v1134
        %v1136 = vrot.slane %v1132, %v1135
        %v1137 = vlaneseq
        %v1138 = vshrl.u32 %v1137, 7
        %v1139 = vsub.s32 1, %v1138
        %v1140 = vrot.slane %v1132, %v1139
        %v1141 = vlaneseq
        %v1142 = vshrl.u32 %v1141, 7
        %v1143 = vsub.s32 2, %v1142
        %v1144 = vrot.slane %v1132, %v1143
        %v1145 = vlaneseq
        %v1146 = vshrl.u32 %v1145, 7
        %v1147 = vsub.s32 3, %v1146
        %v1148 = vrot.slane %v1132, %v1147
        %vm1149 = vcmp.eq.s32.totalorder %v1116, %v1136
        %vm1150 = vcmp.eq.s32.totalorder %v1116, %v1140
        %vm1151 = vcmp.eq.s32.totalorder %v1116, %v1144
        %vm1152 = vcmp.eq.s32.totalorder %v1116, %v1148
        %vm1153 = vcmp.eq.s32.totalorder %v1117, %v1136
        %vm1154 = vcmp.eq.s32.totalorder %v1117, %v1140
        %vm1155 = vcmp.eq.s32.totalorder %v1117, %v1144
        %vm1156 = vcmp.eq.s32.totalorder %v1117, %v1148
        %vm1157 = vcmp.eq.s32.totalorder %v1118, %v1136
        %vm1158 = vcmp.eq.s32.totalorder %v1118, %v1140
        %vm1159 = vcmp.eq.s32.totalorder %v1118, %v1144
        %vm1160 = vcmp.eq.s32.totalorder %v1118, %v1148
        %vm1161 = vcmp.eq.s32.totalorder %v1119, %v1136
        %vm1162 = vcmp.eq.s32.totalorder %v1119, %v1140
        %vm1163 = vcmp.eq.s32.totalorder %v1119, %v1144
        %vm1164 = vcmp.eq.s32.totalorder %v1119, %v1148
        %vm1165 = vcmp.eq.s32.totalorder %v1120, %v1136
        %vm1166 = vcmp.eq.s32.totalorder %v1120, %v1140
        %vm1167 = vcmp.eq.s32.totalorder %v1120, %v1144
        %vm1168 = vcmp.eq.s32.totalorder %v1120, %v1148
        %vm1169 = vcmp.eq.s32.totalorder %v1121, %v1136
        %vm1170 = vcmp.eq.s32.totalorder %v1121, %v1140
        %vm1171 = vcmp.eq.s32.totalorder %v1121, %v1144
        %vm1172 = vcmp.eq.s32.totalorder %v1121, %v1148
        %vm1173 = vcmp.eq.s32.totalorder %v1122, %v1136
        %vm1174 = vcmp.eq.s32.totalorder %v1122, %v1140
        %vm1175 = vcmp.eq.s32.totalorder %v1122, %v1144
        %vm1176 = vcmp.eq.s32.totalorder %v1122, %v1148
        %vm1177 = vcmp.eq.s32.totalorder %v1123, %v1136
        %vm1178 = vcmp.eq.s32.totalorder %v1123, %v1140
        %vm1179 = vcmp.eq.s32.totalorder %v1123, %v1144
        %vm1180 = vcmp.eq.s32.totalorder %v1123, %v1148
        %vm1181 = vcmp.eq.s32.totalorder %v1124, %v1136
        %vm1182 = vcmp.eq.s32.totalorder %v1124, %v1140
        %vm1183 = vcmp.eq.s32.totalorder %v1124, %v1144
        %vm1184 = vcmp.eq.s32.totalorder %v1124, %v1148
        %vm1185 = vcmp.eq.s32.totalorder %v1125, %v1136
        %vm1186 = vcmp.eq.s32.totalorder %v1125, %v1140
        %vm1187 = vcmp.eq.s32.totalorder %v1125, %v1144
        %vm1188 = vcmp.eq.s32.totalorder %v1125, %v1148
        %vm1189 = vcmp.eq.s32.totalorder %v1126, %v1136
        %vm1190 = vcmp.eq.s32.totalorder %v1126, %v1140
        %vm1191 = vcmp.eq.s32.totalorder %v1126, %v1144
        %vm1192 = vcmp.eq.s32.totalorder %v1126, %v1148
        %vm1193 = vcmp.eq.s32.totalorder %v1127, %v1136
        %vm1194 = vcmp.eq.s32.totalorder %v1127, %v1140
        %vm1195 = vcmp.eq.s32.totalorder %v1127, %v1144
        %vm1196 = vcmp.eq.s32.totalorder %v1127, %v1148
        %vm1197 = vcmp.eq.s32.totalorder %v1128, %v1136
        %vm1198 = vcmp.eq.s32.totalorder %v1128, %v1140
        %vm1199 = vcmp.eq.s32.totalorder %v1128, %v1144
        %vm1200 = vcmp.eq.s32.totalorder %v1128, %v1148
        %vm1201 = vcmp.eq.s32.totalorder %v1129, %v1136
        %vm1202 = vcmp.eq.s32.totalorder %v1129, %v1140
        %vm1203 = vcmp.eq.s32.totalorder %v1129, %v1144
        %vm1204 = vcmp.eq.s32.totalorder %v1129, %v1148
        %vm1205 = vcmp.eq.s32.totalorder %v1130, %v1136
        %vm1206 = vcmp.eq.s32.totalorder %v1130, %v1140
        %vm1207 = vcmp.eq.s32.totalorder %v1130, %v1144
        %vm1208 = vcmp.eq.s32.totalorder %v1130, %v1148
        %vm1209 = vcmp.eq.s32.totalorder %v1131, %v1136
        %vm1210 = vcmp.eq.s32.totalorder %v1131, %v1140
        %vm1211 = vcmp.eq.s32.totalorder %v1131, %v1144
        %vm1212 = vcmp.eq.s32.totalorder %v1131, %v1148
        %v1213 = vsel %vm1149, 1, 0
        %v1214 = vsel %vm1150, 1, 0
        %v1215 = vsel %vm1151, 1, 0
        %v1216 = vsel %vm1152, 1, 0
        %v1217 = vsel %vm1153, 1, 0
        %v1218 = vsel %vm1154, 1, 0
        %v1219 = vsel %vm1155, 1, 0
        %v1220 = vsel %vm1156, 1, 0
        %v1221 = vsel %vm1157, 1, 0
        %v1222 = vsel %vm1158, 1, 0
        %v1223 = vsel %vm1159, 1, 0
        %v1224 = vsel %vm1160, 1, 0
        %v1225 = vsel %vm1161, 1, 0
        %v1226 = vsel %vm1162, 1, 0
        %v1227 = vsel %vm1163, 1, 0
        %v1228 = vsel %vm1164, 1, 0
        %v1229 = vsel %vm1165, 1, 0
        %v1230 = vsel %vm1166, 1, 0
        %v1231 = vsel %vm1167, 1, 0
        %v1232 = vsel %vm1168, 1, 0
        %v1233 = vsel %vm1169, 1, 0
        %v1234 = vsel %vm1170, 1, 0
        %v1235 = vsel %vm1171, 1, 0
        %v1236 = vsel %vm1172, 1, 0
        %v1237 = vsel %vm1173, 1, 0
        %v1238 = vsel %vm1174, 1, 0
        %v1239 = vsel %vm1175, 1, 0
        %v1240 = vsel %vm1176, 1, 0
        %v1241 = vsel %vm1177, 1, 0
        %v1242 = vsel %vm1178, 1, 0
        %v1243 = vsel %vm1179, 1, 0
        %v1244 = vsel %vm1180, 1, 0
        %v1245 = vsel %vm1181, 1, 0
        %v1246 = vsel %vm1182, 1, 0
        %v1247 = vsel %vm1183, 1, 0
        %v1248 = vsel %vm1184, 1, 0
        %v1249 = vsel %vm1185, 1, 0
        %v1250 = vsel %vm1186, 1, 0
        %v1251 = vsel %vm1187, 1, 0
        %v1252 = vsel %vm1188, 1, 0
        %v1253 = vsel %vm1189, 1, 0
        %v1254 = vsel %vm1190, 1, 0
        %v1255 = vsel %vm1191, 1, 0
        %v1256 = vsel %vm1192, 1, 0
        %v1257 = vsel %vm1193, 1, 0
        %v1258 = vsel %vm1194, 1, 0
        %v1259 = vsel %vm1195, 1, 0
        %v1260 = vsel %vm1196, 1, 0
        %v1261 = vsel %vm1197, 1, 0
        %v1262 = vsel %vm1198, 1, 0
        %v1263 = vsel %vm1199, 1, 0
        %v1264 = vsel %vm1200, 1, 0
        %v1265 = vsel %vm1201, 1, 0
        %v1266 = vsel %vm1202, 1, 0
        %v1267 = vsel %vm1203, 1, 0
        %v1268 = vsel %vm1204, 1, 0
        %v1269 = vsel %vm1205, 1, 0
        %v1270 = vsel %vm1206, 1, 0
        %v1271 = vsel %vm1207, 1, 0
        %v1272 = vsel %vm1208, 1, 0
        %v1273 = vsel %vm1209, 1, 0
        %v1274 = vsel %vm1210, 1, 0
        %v1275 = vsel %vm1211, 1, 0
        %v1276 = vsel %vm1212, 1, 0
        %v1277 = vcvt.s32.f32 %v1213
        %v1278 = vcvt.s32.f32 %v1214
        %v1279 = vcvt.s32.f32 %v1215
        %v1280 = vcvt.s32.f32 %v1216
        %v1281 = vcvt.s32.f32 %v1217
        %v1282 = vcvt.s32.f32 %v1218
        %v1283 = vcvt.s32.f32 %v1219
        %v1284 = vcvt.s32.f32 %v1220
        %v1285 = vcvt.s32.f32 %v1221
        %v1286 = vcvt.s32.f32 %v1222
        %v1287 = vcvt.s32.f32 %v1223
        %v1288 = vcvt.s32.f32 %v1224
        %v1289 = vcvt.s32.f32 %v1225
        %v1290 = vcvt.s32.f32 %v1226
        %v1291 = vcvt.s32.f32 %v1227
        %v1292 = vcvt.s32.f32 %v1228
        %v1293 = vcvt.s32.f32 %v1229
        %v1294 = vcvt.s32.f32 %v1230
        %v1295 = vcvt.s32.f32 %v1231
        %v1296 = vcvt.s32.f32 %v1232
        %v1297 = vcvt.s32.f32 %v1233
        %v1298 = vcvt.s32.f32 %v1234
        %v1299 = vcvt.s32.f32 %v1235
        %v1300 = vcvt.s32.f32 %v1236
        %v1301 = vcvt.s32.f32 %v1237
        %v1302 = vcvt.s32.f32 %v1238
        %v1303 = vcvt.s32.f32 %v1239
        %v1304 = vcvt.s32.f32 %v1240
        %v1305 = vcvt.s32.f32 %v1241
        %v1306 = vcvt.s32.f32 %v1242
        %v1307 = vcvt.s32.f32 %v1243
        %v1308 = vcvt.s32.f32 %v1244
        %v1309 = vcvt.s32.f32 %v1245
        %v1310 = vcvt.s32.f32 %v1246
        %v1311 = vcvt.s32.f32 %v1247
        %v1312 = vcvt.s32.f32 %v1248
        %v1313 = vcvt.s32.f32 %v1249
        %v1314 = vcvt.s32.f32 %v1250
        %v1315 = vcvt.s32.f32 %v1251
        %v1316 = vcvt.s32.f32 %v1252
        %v1317 = vcvt.s32.f32 %v1253
        %v1318 = vcvt.s32.f32 %v1254
        %v1319 = vcvt.s32.f32 %v1255
        %v1320 = vcvt.s32.f32 %v1256
        %v1321 = vcvt.s32.f32 %v1257
        %v1322 = vcvt.s32.f32 %v1258
        %v1323 = vcvt.s32.f32 %v1259
        %v1324 = vcvt.s32.f32 %v1260
        %v1325 = vcvt.s32.f32 %v1261
        %v1326 = vcvt.s32.f32 %v1262
        %v1327 = vcvt.s32.f32 %v1263
        %v1328 = vcvt.s32.f32 %v1264
        %v1329 = vcvt.s32.f32 %v1265
        %v1330 = vcvt.s32.f32 %v1266
        %v1331 = vcvt.s32.f32 %v1267
        %v1332 = vcvt.s32.f32 %v1268
        %v1333 = vcvt.s32.f32 %v1269
        %v1334 = vcvt.s32.f32 %v1270
        %v1335 = vcvt.s32.f32 %v1271
        %v1336 = vcvt.s32.f32 %v1272
        %v1337 = vcvt.s32.f32 %v1273
        %v1338 = vcvt.s32.f32 %v1274
        %v1339 = vcvt.s32.f32 %v1275
        %v1340 = vcvt.s32.f32 %v1276
        %v1341 = vpack.c.bf16 %v1281, %v1277
        %v1342 = vpack.c.bf16 %v1282, %v1278
        %v1343 = vpack.c.bf16 %v1283, %v1279
        %v1344 = vpack.c.bf16 %v1284, %v1280
        %v1345 = vpack.c.bf16 %v1289, %v1285
        %v1346 = vpack.c.bf16 %v1290, %v1286
        %v1347 = vpack.c.bf16 %v1291, %v1287
        %v1348 = vpack.c.bf16 %v1292, %v1288
        %v1349 = vpack.c.bf16 %v1297, %v1293
        %v1350 = vpack.c.bf16 %v1298, %v1294
        %v1351 = vpack.c.bf16 %v1299, %v1295
        %v1352 = vpack.c.bf16 %v1300, %v1296
        %v1353 = vpack.c.bf16 %v1305, %v1301
        %v1354 = vpack.c.bf16 %v1306, %v1302
        %v1355 = vpack.c.bf16 %v1307, %v1303
        %v1356 = vpack.c.bf16 %v1308, %v1304
        %v1357 = vpack.c.bf16 %v1313, %v1309
        %v1358 = vpack.c.bf16 %v1314, %v1310
        %v1359 = vpack.c.bf16 %v1315, %v1311
        %v1360 = vpack.c.bf16 %v1316, %v1312
        %v1361 = vpack.c.bf16 %v1321, %v1317
        %v1362 = vpack.c.bf16 %v1322, %v1318
        %v1363 = vpack.c.bf16 %v1323, %v1319
        %v1364 = vpack.c.bf16 %v1324, %v1320
        %v1365 = vpack.c.bf16 %v1329, %v1325
        %v1366 = vpack.c.bf16 %v1330, %v1326
        %v1367 = vpack.c.bf16 %v1331, %v1327
        %v1368 = vpack.c.bf16 %v1332, %v1328
        %v1369 = vpack.c.bf16 %v1337, %v1333
        %v1370 = vpack.c.bf16 %v1338, %v1334
        %v1371 = vpack.c.bf16 %v1339, %v1335
        %v1372 = vpack.c.bf16 %v1340, %v1336
        %v1373 = vld [vmem:[%s537] sm:$0xf]
        %v1374 = vlaneseq
        %v1375 = vshrl.u32 %v1374, 7
        %v1376 = vsub.s32 0, %v1375
        %v1377 = vrot.slane %v1373, %v1376
        %v1378 = vlaneseq
        %v1379 = vshrl.u32 %v1378, 7
        %v1380 = vsub.s32 1, %v1379
        %v1381 = vrot.slane %v1373, %v1380
        %v1382 = vlaneseq
        %v1383 = vshrl.u32 %v1382, 7
        %v1384 = vsub.s32 2, %v1383
        %v1385 = vrot.slane %v1373, %v1384
        %v1386 = vlaneseq
        %v1387 = vshrl.u32 %v1386, 7
        %v1388 = vsub.s32 3, %v1387
        %v1389 = vrot.slane %v1373, %v1388
        %vm1390 = vcmp.eq.s32.totalorder %v1116, %v1377
        %vm1391 = vcmp.eq.s32.totalorder %v1116, %v1381
        %vm1392 = vcmp.eq.s32.totalorder %v1116, %v1385
        %vm1393 = vcmp.eq.s32.totalorder %v1116, %v1389
        %vm1394 = vcmp.eq.s32.totalorder %v1117, %v1377
        %vm1395 = vcmp.eq.s32.totalorder %v1117, %v1381
        %vm1396 = vcmp.eq.s32.totalorder %v1117, %v1385
        %vm1397 = vcmp.eq.s32.totalorder %v1117, %v1389
        %vm1398 = vcmp.eq.s32.totalorder %v1118, %v1377
        %vm1399 = vcmp.eq.s32.totalorder %v1118, %v1381
        %vm1400 = vcmp.eq.s32.totalorder %v1118, %v1385
        %vm1401 = vcmp.eq.s32.totalorder %v1118, %v1389
        %vm1402 = vcmp.eq.s32.totalorder %v1119, %v1377
        %vm1403 = vcmp.eq.s32.totalorder %v1119, %v1381
        %vm1404 = vcmp.eq.s32.totalorder %v1119, %v1385
        %vm1405 = vcmp.eq.s32.totalorder %v1119, %v1389
        %vm1406 = vcmp.eq.s32.totalorder %v1120, %v1377
        %vm1407 = vcmp.eq.s32.totalorder %v1120, %v1381
        %vm1408 = vcmp.eq.s32.totalorder %v1120, %v1385
        %vm1409 = vcmp.eq.s32.totalorder %v1120, %v1389
        %vm1410 = vcmp.eq.s32.totalorder %v1121, %v1377
        %vm1411 = vcmp.eq.s32.totalorder %v1121, %v1381
        %vm1412 = vcmp.eq.s32.totalorder %v1121, %v1385
        %vm1413 = vcmp.eq.s32.totalorder %v1121, %v1389
        %vm1414 = vcmp.eq.s32.totalorder %v1122, %v1377
        %vm1415 = vcmp.eq.s32.totalorder %v1122, %v1381
        %vm1416 = vcmp.eq.s32.totalorder %v1122, %v1385
        %vm1417 = vcmp.eq.s32.totalorder %v1122, %v1389
        %vm1418 = vcmp.eq.s32.totalorder %v1123, %v1377
        %vm1419 = vcmp.eq.s32.totalorder %v1123, %v1381
        %vm1420 = vcmp.eq.s32.totalorder %v1123, %v1385
        %vm1421 = vcmp.eq.s32.totalorder %v1123, %v1389
        %vm1422 = vcmp.eq.s32.totalorder %v1124, %v1377
        %vm1423 = vcmp.eq.s32.totalorder %v1124, %v1381
        %vm1424 = vcmp.eq.s32.totalorder %v1124, %v1385
        %vm1425 = vcmp.eq.s32.totalorder %v1124, %v1389
        %vm1426 = vcmp.eq.s32.totalorder %v1125, %v1377
        %vm1427 = vcmp.eq.s32.totalorder %v1125, %v1381
        %vm1428 = vcmp.eq.s32.totalorder %v1125, %v1385
        %vm1429 = vcmp.eq.s32.totalorder %v1125, %v1389
        %vm1430 = vcmp.eq.s32.totalorder %v1126, %v1377
        %vm1431 = vcmp.eq.s32.totalorder %v1126, %v1381
        %vm1432 = vcmp.eq.s32.totalorder %v1126, %v1385
        %vm1433 = vcmp.eq.s32.totalorder %v1126, %v1389
        %vm1434 = vcmp.eq.s32.totalorder %v1127, %v1377
        %vm1435 = vcmp.eq.s32.totalorder %v1127, %v1381
        %vm1436 = vcmp.eq.s32.totalorder %v1127, %v1385
        %vm1437 = vcmp.eq.s32.totalorder %v1127, %v1389
        %vm1438 = vcmp.eq.s32.totalorder %v1128, %v1377
        %vm1439 = vcmp.eq.s32.totalorder %v1128, %v1381
        %vm1440 = vcmp.eq.s32.totalorder %v1128, %v1385
        %vm1441 = vcmp.eq.s32.totalorder %v1128, %v1389
        %vm1442 = vcmp.eq.s32.totalorder %v1129, %v1377
        %vm1443 = vcmp.eq.s32.totalorder %v1129, %v1381
        %vm1444 = vcmp.eq.s32.totalorder %v1129, %v1385
        %vm1445 = vcmp.eq.s32.totalorder %v1129, %v1389
        %vm1446 = vcmp.eq.s32.totalorder %v1130, %v1377
        %vm1447 = vcmp.eq.s32.totalorder %v1130, %v1381
        %vm1448 = vcmp.eq.s32.totalorder %v1130, %v1385
        %vm1449 = vcmp.eq.s32.totalorder %v1130, %v1389
        %vm1450 = vcmp.eq.s32.totalorder %v1131, %v1377
        %vm1451 = vcmp.eq.s32.totalorder %v1131, %v1381
        %vm1452 = vcmp.eq.s32.totalorder %v1131, %v1385
        %vm1453 = vcmp.eq.s32.totalorder %v1131, %v1389
        %v1454 = vsel %vm1390, 1, 0
        %v1455 = vsel %vm1391, 1, 0
        %v1456 = vsel %vm1392, 1, 0
        %v1457 = vsel %vm1393, 1, 0
        %v1458 = vsel %vm1394, 1, 0
        %v1459 = vsel %vm1395, 1, 0
        %v1460 = vsel %vm1396, 1, 0
        %v1461 = vsel %vm1397, 1, 0
        %v1462 = vsel %vm1398, 1, 0
        %v1463 = vsel %vm1399, 1, 0
        %v1464 = vsel %vm1400, 1, 0
        %v1465 = vsel %vm1401, 1, 0
        %v1466 = vsel %vm1402, 1, 0
        %v1467 = vsel %vm1403, 1, 0
        %v1468 = vsel %vm1404, 1, 0
        %v1469 = vsel %vm1405, 1, 0
        %v1470 = vsel %vm1406, 1, 0
        %v1471 = vsel %vm1407, 1, 0
        %v1472 = vsel %vm1408, 1, 0
        %v1473 = vsel %vm1409, 1, 0
        %v1474 = vsel %vm1410, 1, 0
        %v1475 = vsel %vm1411, 1, 0
        %v1476 = vsel %vm1412, 1, 0
        %v1477 = vsel %vm1413, 1, 0
        %v1478 = vsel %vm1414, 1, 0
        %v1479 = vsel %vm1415, 1, 0
        %v1480 = vsel %vm1416, 1, 0
        %v1481 = vsel %vm1417, 1, 0
        %v1482 = vsel %vm1418, 1, 0
        %v1483 = vsel %vm1419, 1, 0
        %v1484 = vsel %vm1420, 1, 0
        %v1485 = vsel %vm1421, 1, 0
        %v1486 = vsel %vm1422, 1, 0
        %v1487 = vsel %vm1423, 1, 0
        %v1488 = vsel %vm1424, 1, 0
        %v1489 = vsel %vm1425, 1, 0
        %v1490 = vsel %vm1426, 1, 0
        %v1491 = vsel %vm1427, 1, 0
        %v1492 = vsel %vm1428, 1, 0
        %v1493 = vsel %vm1429, 1, 0
        %v1494 = vsel %vm1430, 1, 0
        %v1495 = vsel %vm1431, 1, 0
        %v1496 = vsel %vm1432, 1, 0
        %v1497 = vsel %vm1433, 1, 0
        %v1498 = vsel %vm1434, 1, 0
        %v1499 = vsel %vm1435, 1, 0
        %v1500 = vsel %vm1436, 1, 0
        %v1501 = vsel %vm1437, 1, 0
        %v1502 = vsel %vm1438, 1, 0
        %v1503 = vsel %vm1439, 1, 0
        %v1504 = vsel %vm1440, 1, 0
        %v1505 = vsel %vm1441, 1, 0
        %v1506 = vsel %vm1442, 1, 0
        %v1507 = vsel %vm1443, 1, 0
        %v1508 = vsel %vm1444, 1, 0
        %v1509 = vsel %vm1445, 1, 0
        %v1510 = vsel %vm1446, 1, 0
        %v1511 = vsel %vm1447, 1, 0
        %v1512 = vsel %vm1448, 1, 0
        %v1513 = vsel %vm1449, 1, 0
        %v1514 = vsel %vm1450, 1, 0
        %v1515 = vsel %vm1451, 1, 0
        %v1516 = vsel %vm1452, 1, 0
        %v1517 = vsel %vm1453, 1, 0
        %v1518 = vcvt.s32.f32 %v1454
        %v1519 = vcvt.s32.f32 %v1455
        %v1520 = vcvt.s32.f32 %v1456
        %v1521 = vcvt.s32.f32 %v1457
        %v1522 = vcvt.s32.f32 %v1458
        %v1523 = vcvt.s32.f32 %v1459
        %v1524 = vcvt.s32.f32 %v1460
        %v1525 = vcvt.s32.f32 %v1461
        %v1526 = vcvt.s32.f32 %v1462
        %v1527 = vcvt.s32.f32 %v1463
        %v1528 = vcvt.s32.f32 %v1464
        %v1529 = vcvt.s32.f32 %v1465
        %v1530 = vcvt.s32.f32 %v1466
        %v1531 = vcvt.s32.f32 %v1467
        %v1532 = vcvt.s32.f32 %v1468
        %v1533 = vcvt.s32.f32 %v1469
        %v1534 = vcvt.s32.f32 %v1470
        %v1535 = vcvt.s32.f32 %v1471
        %v1536 = vcvt.s32.f32 %v1472
        %v1537 = vcvt.s32.f32 %v1473
        %v1538 = vcvt.s32.f32 %v1474
        %v1539 = vcvt.s32.f32 %v1475
        %v1540 = vcvt.s32.f32 %v1476
        %v1541 = vcvt.s32.f32 %v1477
        %v1542 = vcvt.s32.f32 %v1478
        %v1543 = vcvt.s32.f32 %v1479
        %v1544 = vcvt.s32.f32 %v1480
        %v1545 = vcvt.s32.f32 %v1481
        %v1546 = vcvt.s32.f32 %v1482
        %v1547 = vcvt.s32.f32 %v1483
        %v1548 = vcvt.s32.f32 %v1484
        %v1549 = vcvt.s32.f32 %v1485
        %v1550 = vcvt.s32.f32 %v1486
        %v1551 = vcvt.s32.f32 %v1487
        %v1552 = vcvt.s32.f32 %v1488
        %v1553 = vcvt.s32.f32 %v1489
        %v1554 = vcvt.s32.f32 %v1490
        %v1555 = vcvt.s32.f32 %v1491
        %v1556 = vcvt.s32.f32 %v1492
        %v1557 = vcvt.s32.f32 %v1493
        %v1558 = vcvt.s32.f32 %v1494
        %v1559 = vcvt.s32.f32 %v1495
        %v1560 = vcvt.s32.f32 %v1496
        %v1561 = vcvt.s32.f32 %v1497
        %v1562 = vcvt.s32.f32 %v1498
        %v1563 = vcvt.s32.f32 %v1499
        %v1564 = vcvt.s32.f32 %v1500
        %v1565 = vcvt.s32.f32 %v1501
        %v1566 = vcvt.s32.f32 %v1502
        %v1567 = vcvt.s32.f32 %v1503
        %v1568 = vcvt.s32.f32 %v1504
        %v1569 = vcvt.s32.f32 %v1505
        %v1570 = vcvt.s32.f32 %v1506
        %v1571 = vcvt.s32.f32 %v1507
        %v1572 = vcvt.s32.f32 %v1508
        %v1573 = vcvt.s32.f32 %v1509
        %v1574 = vcvt.s32.f32 %v1510
        %v1575 = vcvt.s32.f32 %v1511
        %v1576 = vcvt.s32.f32 %v1512
        %v1577 = vcvt.s32.f32 %v1513
        %v1578 = vcvt.s32.f32 %v1514
        %v1579 = vcvt.s32.f32 %v1515
        %v1580 = vcvt.s32.f32 %v1516
        %v1581 = vcvt.s32.f32 %v1517
        %v1582 = vpack.c.bf16 %v1522, %v1518
        %v1583 = vpack.c.bf16 %v1523, %v1519
        %v1584 = vpack.c.bf16 %v1524, %v1520
        %v1585 = vpack.c.bf16 %v1525, %v1521
        %v1586 = vpack.c.bf16 %v1530, %v1526
        %v1587 = vpack.c.bf16 %v1531, %v1527
        %v1588 = vpack.c.bf16 %v1532, %v1528
        %v1589 = vpack.c.bf16 %v1533, %v1529
        %v1590 = vpack.c.bf16 %v1538, %v1534
        %v1591 = vpack.c.bf16 %v1539, %v1535
        %v1592 = vpack.c.bf16 %v1540, %v1536
        %v1593 = vpack.c.bf16 %v1541, %v1537
        %v1594 = vpack.c.bf16 %v1546, %v1542
        %v1595 = vpack.c.bf16 %v1547, %v1543
        %v1596 = vpack.c.bf16 %v1548, %v1544
        %v1597 = vpack.c.bf16 %v1549, %v1545
        %v1598 = vpack.c.bf16 %v1554, %v1550
        %v1599 = vpack.c.bf16 %v1555, %v1551
        %v1600 = vpack.c.bf16 %v1556, %v1552
        %v1601 = vpack.c.bf16 %v1557, %v1553
        %v1602 = vpack.c.bf16 %v1562, %v1558
        %v1603 = vpack.c.bf16 %v1563, %v1559
        %v1604 = vpack.c.bf16 %v1564, %v1560
        %v1605 = vpack.c.bf16 %v1565, %v1561
        %v1606 = vpack.c.bf16 %v1570, %v1566
        %v1607 = vpack.c.bf16 %v1571, %v1567
        %v1608 = vpack.c.bf16 %v1572, %v1568
        %v1609 = vpack.c.bf16 %v1573, %v1569
        %v1610 = vpack.c.bf16 %v1578, %v1574
        %v1611 = vpack.c.bf16 %v1579, %v1575
        %v1612 = vpack.c.bf16 %v1580, %v1576
        %v1613 = vpack.c.bf16 %v1581, %v1577
        %v1614 = vld [vmem:[#allocation2] sm:$0xff]
        %v1615 = vld [vmem:[#allocation2 + $0x8] sm:$0xff]
        %v1616 = vld [vmem:[#allocation2 + $0x10] sm:$0xff]
        %v1617 = vld [vmem:[#allocation2 + $0x18] sm:$0xff]
        %v1618 = vld [vmem:[#allocation2 + $0x20] sm:$0xff]
        %v1619 = vld [vmem:[#allocation2 + $0x28] sm:$0xff]
        %v1620 = vld [vmem:[#allocation2 + $0x30] sm:$0xff]
        %v1621 = vld [vmem:[#allocation2 + $0x38] sm:$0xff]
        %v1622 = vld [vmem:[#allocation3] sm:$0xff]
        %v1623 = vld [vmem:[#allocation3 + $0x8] sm:$0xff]
        %v1624 = vld [vmem:[#allocation3 + $0x10] sm:$0xff]
        %v1625 = vld [vmem:[#allocation3 + $0x18] sm:$0xff]
        %v1626 = vld [vmem:[#allocation3 + $0x20] sm:$0xff]
        %v1627 = vld [vmem:[#allocation3 + $0x28] sm:$0xff]
        %v1628 = vld [vmem:[#allocation3 + $0x30] sm:$0xff]
        %v1629 = vld [vmem:[#allocation3 + $0x38] sm:$0xff]
        %1630 = vxpose.xlu0.c.b16.start [1/8] %v1582, 128
        %1631 = vxpose.xlu0.c.b16.cont [2/8] %v1586, 128
        %1632 = vxpose.xlu0.c.b16.cont [3/8] %v1590, 128
        %1633 = vxpose.xlu0.c.b16.cont [4/8] %v1594, 128
        %1634 = vxpose.xlu0.c.b16.cont [5/8] %v1598, 128
        %1635 = vxpose.xlu0.c.b16.cont [6/8] %v1602, 128
        %1636 = vxpose.xlu0.c.b16.cont [7/8] %v1606, 128
        %1637 = vxpose.xlu0.c.b16.end [8/8] %v1610, 128
        %v1638 = vpop.trf.xlu0
        %v1639 = vpop.trf.xlu0
        %v1640 = vpop.trf.xlu0
        %v1641 = vpop.trf.xlu0
        %v1642 = vpop.trf.xlu0
        %v1643 = vpop.trf.xlu0
        %v1644 = vpop.trf.xlu0
        %v1645 = vpop.trf.xlu0
        %1646 = vxpose.xlu0.c.b16.start [1/8] %v1583, 128
        %1647 = vxpose.xlu0.c.b16.cont [2/8] %v1587, 128
        %1648 = vxpose.xlu0.c.b16.cont [3/8] %v1591, 128
        %1649 = vxpose.xlu0.c.b16.cont [4/8] %v1595, 128
        %1650 = vxpose.xlu0.c.b16.cont [5/8] %v1599, 128
        %1651 = vxpose.xlu0.c.b16.cont [6/8] %v1603, 128
        %1652 = vxpose.xlu0.c.b16.cont [7/8] %v1607, 128
        %1653 = vxpose.xlu0.c.b16.end [8/8] %v1611, 128
        %v1654 = vpop.trf.xlu0
        %v1655 = vpop.trf.xlu0
        %v1656 = vpop.trf.xlu0
        %v1657 = vpop.trf.xlu0
        %v1658 = vpop.trf.xlu0
        %v1659 = vpop.trf.xlu0
        %v1660 = vpop.trf.xlu0
        %v1661 = vpop.trf.xlu0
        %1662 = vxpose.xlu0.c.b16.start [1/8] %v1584, 128
        %1663 = vxpose.xlu0.c.b16.cont [2/8] %v1588, 128
        %1664 = vxpose.xlu0.c.b16.cont [3/8] %v1592, 128
        %1665 = vxpose.xlu0.c.b16.cont [4/8] %v1596, 128
        %1666 = vxpose.xlu0.c.b16.cont [5/8] %v1600, 128
        %1667 = vxpose.xlu0.c.b16.cont [6/8] %v1604, 128
        %1668 = vxpose.xlu0.c.b16.cont [7/8] %v1608, 128
        %1669 = vxpose.xlu0.c.b16.end [8/8] %v1612, 128
        %v1670 = vpop.trf.xlu0
        %v1671 = vpop.trf.xlu0
        %v1672 = vpop.trf.xlu0
        %v1673 = vpop.trf.xlu0
        %v1674 = vpop.trf.xlu0
        %v1675 = vpop.trf.xlu0
        %v1676 = vpop.trf.xlu0
        %v1677 = vpop.trf.xlu0
        %1678 = vxpose.xlu0.c.b16.start [1/8] %v1585, 128
        %1679 = vxpose.xlu0.c.b16.cont [2/8] %v1589, 128
        %1680 = vxpose.xlu0.c.b16.cont [3/8] %v1593, 128
        %1681 = vxpose.xlu0.c.b16.cont [4/8] %v1597, 128
        %1682 = vxpose.xlu0.c.b16.cont [5/8] %v1601, 128
        %1683 = vxpose.xlu0.c.b16.cont [6/8] %v1605, 128
        %1684 = vxpose.xlu0.c.b16.cont [7/8] %v1609, 128
        %1685 = vxpose.xlu0.c.b16.end [8/8] %v1613, 128
        %v1686 = vpop.trf.xlu0
        %v1687 = vpop.trf.xlu0
        %v1688 = vpop.trf.xlu0
        %v1689 = vpop.trf.xlu0
        %v1690 = vpop.trf.xlu0
        %v1691 = vpop.trf.xlu0
        %v1692 = vpop.trf.xlu0
        %v1693 = vpop.trf.xlu0
        %1694 = vmatprep.subr.bf16.mxu0 0
        %1695 = vmatpush1.bf16.msra.mxu0 %v1622
        %1696 = vmatprep.subr.bf16.mxu0 0
        %1697 = vmatpush1.bf16.msra.mxu0 %v1623
        %1698 = vmatprep.subr.bf16.mxu0 0
        %1699 = vmatpush1.bf16.msra.mxu0 %v1624
        %1700 = vmatprep.subr.bf16.mxu0 0
        %1701 = vmatpush1.bf16.msra.mxu0 %v1625
        %1702 = vmatprep.subr.bf16.mxu0 0
        %1703 = vmatpush1.bf16.msra.mxu0 %v1626
        %1704 = vmatprep.subr.bf16.mxu0 0
        %1705 = vmatpush1.bf16.msra.mxu0 %v1627
        %1706 = vmatprep.subr.bf16.mxu0 0
        %1707 = vmatpush1.bf16.msra.mxu0 %v1628
        %1708 = vmatprep.subr.bf16.mxu0 0
        %1709 = vmatpush1.bf16.msra.mxu0 %v1629
        %1710 = vmatprep.subr.bf16.mxu0 0
        %1711 = vmatpush1.bf16.msra.mxu0 0
        %1712 = vmatprep.subr.bf16.mxu0 0
        %1713 = vmatpush1.bf16.msra.mxu0 0
        %1714 = vmatprep.subr.bf16.mxu0 0
        %1715 = vmatpush1.bf16.msra.mxu0 0
        %1716 = vmatprep.subr.bf16.mxu0 0
        %1717 = vmatpush1.bf16.msra.mxu0 0
        %1718 = vmatprep.subr.bf16.mxu0 0
        %1719 = vmatpush1.bf16.msra.mxu0 0
        %1720 = vmatprep.subr.bf16.mxu0 0
        %1721 = vmatpush1.bf16.msra.mxu0 0
        %1722 = vmatprep.subr.bf16.mxu0 0
        %1723 = vmatpush1.bf16.msra.mxu0 0
        %1724 = vmatprep.subr.bf16.mxu0 0
        %1725 = vmatpush1.bf16.msra.mxu0 0
        %1726 = vmatprep.mubr.bf16.mxu0 0
        %1727 = vmatmul.mubr.bf16.gmra.mrb[0].mxu0 %v1638
        %v1728 = vpop.f32.mrb[0].mxu0
        %v1729 = vadd.f32 0.0, %v1728
        %v1730 = vpop.f32.mrb[0].mxu0
        %v1731 = vpop.f32.mrb[0].mxu0
        %v1732 = vadd.f32 0.0, %v1731
        %v1733 = vpop.f32.mrb[0].mxu0
        %1734 = vmatprep.mubr.bf16.mxu0 0
        %1735 = vmatmul.mubr.bf16.gmra.mrb[0].mxu0 %v1639
        %v1736 = vpop.f32.mrb[0].mxu0
        %v1737 = vadd.f32 0.0, %v1736
        %v1738 = vpop.f32.mrb[0].mxu0
        %v1739 = vpop.f32.mrb[0].mxu0
        %v1740 = vadd.f32 0.0, %v1739
        %v1741 = vpop.f32.mrb[0].mxu0
        %1742 = vmatprep.mubr.bf16.mxu0 0
        %1743 = vmatmul.mubr.bf16.gmra.mrb[0].mxu0 %v1640
        %v1744 = vpop.f32.mrb[0].mxu0
        %v1745 = vadd.f32 0.0, %v1744
        %v1746 = vpop.f32.mrb[0].mxu0
        %v1747 = vpop.f32.mrb[0].mxu0
        %v1748 = vadd.f32 0.0, %v1747
        %v1749 = vpop.f32.mrb[0].mxu0
        %1750 = vmatprep.mubr.bf16.mxu0 0
        %1751 = vmatmul.mubr.bf16.gmra.mrb[0].mxu0 %v1641
        %v1752 = vpop.f32.mrb[0].mxu0
        %v1753 = vadd.f32 0.0, %v1752
        %v1754 = vpop.f32.mrb[0].mxu0
        %v1755 = vpop.f32.mrb[0].mxu0
        %v1756 = vadd.f32 0.0, %v1755
        %v1757 = vpop.f32.mrb[0].mxu0
        %1758 = vmatprep.mubr.bf16.mxu0 0
        %1759 = vmatmul.mubr.bf16.gmra.mrb[0].mxu0 %v1642
        %v1760 = vpop.f32.mrb[0].mxu0
        %v1761 = vadd.f32 0.0, %v1760
        %v1762 = vpop.f32.mrb[0].mxu0
        %v1763 = vpop.f32.mrb[0].mxu0
        %v1764 = vadd.f32 0.0, %v1763
        %v1765 = vpop.f32.mrb[0].mxu0
        %1766 = vmatprep.mubr.bf16.mxu0 0
        %1767 = vmatmul.mubr.bf16.gmra.mrb[0].mxu0 %v1643
        %v1768 = vpop.f32.mrb[0].mxu0
        %v1769 = vadd.f32 0.0, %v1768
        %v1770 = vpop.f32.mrb[0].mxu0
        %v1771 = vpop.f32.mrb[0].mxu0
        %v1772 = vadd.f32 0.0, %v1771
        %v1773 = vpop.f32.mrb[0].mxu0
        %1774 = vmatprep.mubr.bf16.mxu0 0
        %1775 = vmatmul.mubr.bf16.gmra.mrb[0].mxu0 %v1644
        %v1776 = vpop.f32.mrb[0].mxu0
        %v1777 = vadd.f32 0.0, %v1776
        %v1778 = vpop.f32.mrb[0].mxu0
        %v1779 = vpop.f32.mrb[0].mxu0
        %v1780 = vadd.f32 0.0, %v1779
        %v1781 = vpop.f32.mrb[0].mxu0
        %1782 = vmatprep.mubr.bf16.mxu0 0
        %1783 = vmatmul.mubr.bf16.gmra.mrb[0].mxu0 %v1645
        %v1784 = vpop.f32.mrb[0].mxu0
        %v1785 = vadd.f32 0.0, %v1784
        %v1786 = vpop.f32.mrb[0].mxu0
        %v1787 = vpop.f32.mrb[0].mxu0
        %v1788 = vadd.f32 0.0, %v1787
        %v1789 = vpop.f32.mrb[0].mxu0
        %1790 = vmatprep.mubr.bf16.mxu0 0
        %1791 = vmatmul.mubr.bf16.gmra.mrb[0].mxu0 %v1654
        %v1792 = vpop.f32.mrb[0].mxu0
        %v1793 = vadd.f32 0.0, %v1792
        %v1794 = vpop.f32.mrb[0].mxu0
        %v1795 = vpop.f32.mrb[0].mxu0
        %v1796 = vadd.f32 0.0, %v1795
        %v1797 = vpop.f32.mrb[0].mxu0
        %1798 = vmatprep.mubr.bf16.mxu0 0
        %1799 = vmatmul.mubr.bf16.gmra.mrb[0].mxu0 %v1655
        %v1800 = vpop.f32.mrb[0].mxu0
        %v1801 = vadd.f32 0.0, %v1800
        %v1802 = vpop.f32.mrb[0].mxu0
        %v1803 = vpop.f32.mrb[0].mxu0
        %v1804 = vadd.f32 0.0, %v1803
        %v1805 = vpop.f32.mrb[0].mxu0
        %1806 = vmatprep.mubr.bf16.mxu0 0
        %1807 = vmatmul.mubr.bf16.gmra.mrb[0].mxu0 %v1656
        %v1808 = vpop.f32.mrb[0].mxu0
        %v1809 = vadd.f32 0.0, %v1808
        %v1810 = vpop.f32.mrb[0].mxu0
        %v1811 = vpop.f32.mrb[0].mxu0
        %v1812 = vadd.f32 0.0, %v1811
        %v1813 = vpop.f32.mrb[0].mxu0
        %1814 = vmatprep.mubr.bf16.mxu0 0
        %1815 = vmatmul.mubr.bf16.gmra.mrb[0].mxu0 %v1657
        %v1816 = vpop.f32.mrb[0].mxu0
        %v1817 = vadd.f32 0.0, %v1816
        %v1818 = vpop.f32.mrb[0].mxu0
        %v1819 = vpop.f32.mrb[0].mxu0
        %v1820 = vadd.f32 0.0, %v1819
        %v1821 = vpop.f32.mrb[0].mxu0
        %1822 = vmatprep.mubr.bf16.mxu0 0
        %1823 = vmatmul.mubr.bf16.gmra.mrb[0].mxu0 %v1658
        %v1824 = vpop.f32.mrb[0].mxu0
        %v1825 = vadd.f32 0.0, %v1824
        %v1826 = vpop.f32.mrb[0].mxu0
        %v1827 = vpop.f32.mrb[0].mxu0
        %v1828 = vadd.f32 0.0, %v1827
        %v1829 = vpop.f32.mrb[0].mxu0
        %1830 = vmatprep.mubr.bf16.mxu0 0
        %1831 = vmatmul.mubr.bf16.gmra.mrb[0].mxu0 %v1659
        %v1832 = vpop.f32.mrb[0].mxu0
        %v1833 = vadd.f32 0.0, %v1832
        %v1834 = vpop.f32.mrb[0].mxu0
        %v1835 = vpop.f32.mrb[0].mxu0
        %v1836 = vadd.f32 0.0, %v1835
        %v1837 = vpop.f32.mrb[0].mxu0
        %1838 = vmatprep.mubr.bf16.mxu0 0
        %1839 = vmatmul.mubr.bf16.gmra.mrb[0].mxu0 %v1660
        %v1840 = vpop.f32.mrb[0].mxu0
        %v1841 = vadd.f32 0.0, %v1840
        %v1842 = vpop.f32.mrb[0].mxu0
        %v1843 = vpop.f32.mrb[0].mxu0
        %v1844 = vadd.f32 0.0, %v1843
        %v1845 = vpop.f32.mrb[0].mxu0
        %1846 = vmatprep.mubr.bf16.mxu0 0
        %1847 = vmatmul.mubr.bf16.gmra.mrb[0].mxu0 %v1661
        %v1848 = vpop.f32.mrb[0].mxu0
        %v1849 = vadd.f32 0.0, %v1848
        %v1850 = vpop.f32.mrb[0].mxu0
        %v1851 = vpop.f32.mrb[0].mxu0
        %v1852 = vadd.f32 0.0, %v1851
        %v1853 = vpop.f32.mrb[0].mxu0
        %1854 = vmatprep.mubr.bf16.mxu0 0
        %1855 = vmatmul.mubr.bf16.gmra.mrb[0].mxu0 %v1670
        %v1856 = vpop.f32.mrb[0].mxu0
        %v1857 = vadd.f32 0.0, %v1856
        %v1858 = vpop.f32.mrb[0].mxu0
        %v1859 = vpop.f32.mrb[0].mxu0
        %v1860 = vadd.f32 0.0, %v1859
        %v1861 = vpop.f32.mrb[0].mxu0
        %1862 = vmatprep.mubr.bf16.mxu0 0
        %1863 = vmatmul.mubr.bf16.gmra.mrb[0].mxu0 %v1671
        %v1864 = vpop.f32.mrb[0].mxu0
        %v1865 = vadd.f32 0.0, %v1864
        %v1866 = vpop.f32.mrb[0].mxu0
        %v1867 = vpop.f32.mrb[0].mxu0
        %v1868 = vadd.f32 0.0, %v1867
        %v1869 = vpop.f32.mrb[0].mxu0
        %1870 = vmatprep.mubr.bf16.mxu0 0
        %1871 = vmatmul.mubr.bf16.gmra.mrb[0].mxu0 %v1672
        %v1872 = vpop.f32.mrb[0].mxu0
        %v1873 = vadd.f32 0.0, %v1872
        %v1874 = vpop.f32.mrb[0].mxu0
        %v1875 = vpop.f32.mrb[0].mxu0
        %v1876 = vadd.f32 0.0, %v1875
        %v1877 = vpop.f32.mrb[0].mxu0
        %1878 = vmatprep.mubr.bf16.mxu0 0
        %1879 = vmatmul.mubr.bf16.gmra.mrb[0].mxu0 %v1673
        %v1880 = vpop.f32.mrb[0].mxu0
        %v1881 = vadd.f32 0.0, %v1880
        %v1882 = vpop.f32.mrb[0].mxu0
        %v1883 = vpop.f32.mrb[0].mxu0
        %v1884 = vadd.f32 0.0, %v1883
        %v1885 = vpop.f32.mrb[0].mxu0
        %1886 = vmatprep.mubr.bf16.mxu0 0
        %1887 = vmatmul.mubr.bf16.gmra.mrb[0].mxu0 %v1674
        %v1888 = vpop.f32.mrb[0].mxu0
        %v1889 = vadd.f32 0.0, %v1888
        %v1890 = vpop.f32.mrb[0].mxu0
        %v1891 = vpop.f32.mrb[0].mxu0
        %v1892 = vadd.f32 0.0, %v1891
        %v1893 = vpop.f32.mrb[0].mxu0
        %1894 = vmatprep.mubr.bf16.mxu0 0
        %1895 = vmatmul.mubr.bf16.gmra.mrb[0].mxu0 %v1675
        %v1896 = vpop.f32.mrb[0].mxu0
        %v1897 = vadd.f32 0.0, %v1896
        %v1898 = vpop.f32.mrb[0].mxu0
        %v1899 = vpop.f32.mrb[0].mxu0
        %v1900 = vadd.f32 0.0, %v1899
        %v1901 = vpop.f32.mrb[0].mxu0
        %1902 = vmatprep.mubr.bf16.mxu0 0
        %1903 = vmatmul.mubr.bf16.gmra.mrb[0].mxu0 %v1676
        %v1904 = vpop.f32.mrb[0].mxu0
        %v1905 = vadd.f32 0.0, %v1904
        %v1906 = vpop.f32.mrb[0].mxu0
        %v1907 = vpop.f32.mrb[0].mxu0
        %v1908 = vadd.f32 0.0, %v1907
        %v1909 = vpop.f32.mrb[0].mxu0
        %1910 = vmatprep.mubr.bf16.mxu0 0
        %1911 = vmatmul.mubr.bf16.gmra.mrb[0].mxu0 %v1677
        %v1912 = vpop.f32.mrb[0].mxu0
        %v1913 = vadd.f32 0.0, %v1912
        %v1914 = vpop.f32.mrb[0].mxu0
        %v1915 = vpop.f32.mrb[0].mxu0
        %v1916 = vadd.f32 0.0, %v1915
        %v1917 = vpop.f32.mrb[0].mxu0
        %1918 = vmatprep.mubr.bf16.mxu0 0
        %1919 = vmatmul.mubr.bf16.gmra.mrb[0].mxu0 %v1686
        %v1920 = vpop.f32.mrb[0].mxu0
        %v1921 = vadd.f32 0.0, %v1920
        %v1922 = vpop.f32.mrb[0].mxu0
        %v1923 = vpop.f32.mrb[0].mxu0
        %v1924 = vadd.f32 0.0, %v1923
        %v1925 = vpop.f32.mrb[0].mxu0
        %1926 = vmatprep.mubr.bf16.mxu0 0
        %1927 = vmatmul.mubr.bf16.gmra.mrb[0].mxu0 %v1687
        %v1928 = vpop.f32.mrb[0].mxu0
        %v1929 = vadd.f32 0.0, %v1928
        %v1930 = vpop.f32.mrb[0].mxu0
        %v1931 = vpop.f32.mrb[0].mxu0
        %v1932 = vadd.f32 0.0, %v1931
        %v1933 = vpop.f32.mrb[0].mxu0
        %1934 = vmatprep.mubr.bf16.mxu0 0
        %1935 = vmatmul.mubr.bf16.gmra.mrb[0].mxu0 %v1688
        %v1936 = vpop.f32.mrb[0].mxu0
        %v1937 = vadd.f32 0.0, %v1936
        %v1938 = vpop.f32.mrb[0].mxu0
        %v1939 = vpop.f32.mrb[0].mxu0
        %v1940 = vadd.f32 0.0, %v1939
        %v1941 = vpop.f32.mrb[0].mxu0
        %1942 = vmatprep.mubr.bf16.mxu0 0
        %1943 = vmatmul.mubr.bf16.gmra.mrb[0].mxu0 %v1689
        %v1944 = vpop.f32.mrb[0].mxu0
        %v1945 = vadd.f32 0.0, %v1944
        %v1946 = vpop.f32.mrb[0].mxu0
        %v1947 = vpop.f32.mrb[0].mxu0
        %v1948 = vadd.f32 0.0, %v1947
        %v1949 = vpop.f32.mrb[0].mxu0
        %1950 = vmatprep.mubr.bf16.mxu0 0
        %1951 = vmatmul.mubr.bf16.gmra.mrb[0].mxu0 %v1690
        %v1952 = vpop.f32.mrb[0].mxu0
        %v1953 = vadd.f32 0.0, %v1952
        %v1954 = vpop.f32.mrb[0].mxu0
        %v1955 = vpop.f32.mrb[0].mxu0
        %v1956 = vadd.f32 0.0, %v1955
        %v1957 = vpop.f32.mrb[0].mxu0
        %1958 = vmatprep.mubr.bf16.mxu0 0
        %1959 = vmatmul.mubr.bf16.gmra.mrb[0].mxu0 %v1691
        %v1960 = vpop.f32.mrb[0].mxu0
        %v1961 = vadd.f32 0.0, %v1960
        %v1962 = vpop.f32.mrb[0].mxu0
        %v1963 = vpop.f32.mrb[0].mxu0
        %v1964 = vadd.f32 0.0, %v1963
        %v1965 = vpop.f32.mrb[0].mxu0
        %1966 = vmatprep.mubr.bf16.mxu0 0
        %1967 = vmatmul.mubr.bf16.gmra.mrb[0].mxu0 %v1692
        %v1968 = vpop.f32.mrb[0].mxu0
        %v1969 = vadd.f32 0.0, %v1968
        %v1970 = vpop.f32.mrb[0].mxu0
        %v1971 = vpop.f32.mrb[0].mxu0
        %v1972 = vadd.f32 0.0, %v1971
        %v1973 = vpop.f32.mrb[0].mxu0
        %1974 = vmatprep.mubr.bf16.mxu0 0
        %1975 = vmatmul.mubr.bf16.gmra.mrb[0].mxu0 %v1693
        %v1976 = vpop.f32.mrb[0].mxu0
        %v1977 = vadd.f32 0.0, %v1976
        %v1978 = vpop.f32.mrb[0].mxu0
        %v1979 = vpop.f32.mrb[0].mxu0
        %v1980 = vadd.f32 0.0, %v1979
        %v1981 = vpop.f32.mrb[0].mxu0
        %1982 = vdwg.mxu0
        %v1983 = vld [vmem:[%s543] sm:$0xff]
        %v1984 = vld [vmem:[%s543 + $0x8] sm:$0xff]
        %v1985 = vld [vmem:[%s543 + $0x10] sm:$0xff]
        %v1986 = vld [vmem:[%s543 + $0x18] sm:$0xff]
        %v1987 = vld [vmem:[%s543 + $0x20] sm:$0xff]
        %v1988 = vld [vmem:[%s543 + $0x28] sm:$0xff]
        %v1989 = vld [vmem:[%s543 + $0x30] sm:$0xff]
        %v1990 = vld [vmem:[%s543 + $0x38] sm:$0xff]
        %v1991 = vld [vmem:[%s543 + $0x40] sm:$0xff]
        %v1992 = vld [vmem:[%s543 + $0x48] sm:$0xff]
        %v1993 = vld [vmem:[%s543 + $0x50] sm:$0xff]
        %v1994 = vld [vmem:[%s543 + $0x58] sm:$0xff]
        %v1995 = vld [vmem:[%s543 + $0x60] sm:$0xff]
        %v1996 = vld [vmem:[%s543 + $0x68] sm:$0xff]
        %v1997 = vld [vmem:[%s543 + $0x70] sm:$0xff]
        %v1998 = vld [vmem:[%s543 + $0x78] sm:$0xff]
        %v1999 = vld [vmem:[%s543 + $0x80] sm:$0xff]
        %v2000 = vld [vmem:[%s543 + $0x88] sm:$0xff]
        %v2001 = vld [vmem:[%s543 + $0x90] sm:$0xff]
        %v2002 = vld [vmem:[%s543 + $0x98] sm:$0xff]
        %v2003 = vld [vmem:[%s543 + $0xa0] sm:$0xff]
        %v2004 = vld [vmem:[%s543 + $0xa8] sm:$0xff]
        %v2005 = vld [vmem:[%s543 + $0xb0] sm:$0xff]
        %v2006 = vld [vmem:[%s543 + $0xb8] sm:$0xff]
        %v2007 = vld [vmem:[%s543 + $0xc0] sm:$0xff]
        %v2008 = vld [vmem:[%s543 + $0xc8] sm:$0xff]
        %v2009 = vld [vmem:[%s543 + $0xd0] sm:$0xff]
        %v2010 = vld [vmem:[%s543 + $0xd8] sm:$0xff]
        %v2011 = vld [vmem:[%s543 + $0xe0] sm:$0xff]
        %v2012 = vld [vmem:[%s543 + $0xe8] sm:$0xff]
        %v2013 = vld [vmem:[%s543 + $0xf0] sm:$0xff]
        %v2014 = vld [vmem:[%s543 + $0xf8] sm:$0xff]
        %v2015 = vld [vmem:[%s543 + $0x100] sm:$0xff]
        %v2016 = vld [vmem:[%s543 + $0x108] sm:$0xff]
        %v2017 = vld [vmem:[%s543 + $0x110] sm:$0xff]
        %v2018 = vld [vmem:[%s543 + $0x118] sm:$0xff]
        %v2019 = vld [vmem:[%s543 + $0x120] sm:$0xff]
        %v2020 = vld [vmem:[%s543 + $0x128] sm:$0xff]
        %v2021 = vld [vmem:[%s543 + $0x130] sm:$0xff]
        %v2022 = vld [vmem:[%s543 + $0x138] sm:$0xff]
        %v2023 = vld [vmem:[%s543 + $0x140] sm:$0xff]
        %v2024 = vld [vmem:[%s543 + $0x148] sm:$0xff]
        %v2025 = vld [vmem:[%s543 + $0x150] sm:$0xff]
        %v2026 = vld [vmem:[%s543 + $0x158] sm:$0xff]
        %v2027 = vld [vmem:[%s543 + $0x160] sm:$0xff]
        %v2028 = vld [vmem:[%s543 + $0x168] sm:$0xff]
        %v2029 = vld [vmem:[%s543 + $0x170] sm:$0xff]
        %v2030 = vld [vmem:[%s543 + $0x178] sm:$0xff]
        %v2031 = vld [vmem:[%s543 + $0x180] sm:$0xff]
        %v2032 = vld [vmem:[%s543 + $0x188] sm:$0xff]
        %v2033 = vld [vmem:[%s543 + $0x190] sm:$0xff]
        %v2034 = vld [vmem:[%s543 + $0x198] sm:$0xff]
        %v2035 = vld [vmem:[%s543 + $0x1a0] sm:$0xff]
        %v2036 = vld [vmem:[%s543 + $0x1a8] sm:$0xff]
        %v2037 = vld [vmem:[%s543 + $0x1b0] sm:$0xff]
        %v2038 = vld [vmem:[%s543 + $0x1b8] sm:$0xff]
        %v2039 = vld [vmem:[%s543 + $0x1c0] sm:$0xff]
        %v2040 = vld [vmem:[%s543 + $0x1c8] sm:$0xff]
        %v2041 = vld [vmem:[%s543 + $0x1d0] sm:$0xff]
        %v2042 = vld [vmem:[%s543 + $0x1d8] sm:$0xff]
        %v2043 = vld [vmem:[%s543 + $0x1e0] sm:$0xff]
        %v2044 = vld [vmem:[%s543 + $0x1e8] sm:$0xff]
        %v2045 = vld [vmem:[%s543 + $0x1f0] sm:$0xff]
        %v2046 = vld [vmem:[%s543 + $0x1f8] sm:$0xff]
        %v2047 = vld [vmem:[%s471] sm:$0xff]
        %v2048 = vld [vmem:[%s471 + $0x8] sm:$0xff]
        %v2049 = vld [vmem:[%s471 + $0x10] sm:$0xff]
        %v2050 = vld [vmem:[%s471 + $0x18] sm:$0xff]
        %v2051 = vld [vmem:[%s471 + $0x20] sm:$0xff]
        %v2052 = vld [vmem:[%s471 + $0x28] sm:$0xff]
        %v2053 = vld [vmem:[%s471 + $0x30] sm:$0xff]
        %v2054 = vld [vmem:[%s471 + $0x38] sm:$0xff]
        %v2055 = vld [vmem:[%s471 + $0x40] sm:$0xff]
        %v2056 = vld [vmem:[%s471 + $0x48] sm:$0xff]
        %v2057 = vld [vmem:[%s471 + $0x50] sm:$0xff]
        %v2058 = vld [vmem:[%s471 + $0x58] sm:$0xff]
        %v2059 = vld [vmem:[%s471 + $0x60] sm:$0xff]
        %v2060 = vld [vmem:[%s471 + $0x68] sm:$0xff]
        %v2061 = vld [vmem:[%s471 + $0x70] sm:$0xff]
        %v2062 = vld [vmem:[%s471 + $0x78] sm:$0xff]
        %v2063 = vld [vmem:[%s471 + $0x80] sm:$0xff]
        %v2064 = vld [vmem:[%s471 + $0x88] sm:$0xff]
        %v2065 = vld [vmem:[%s471 + $0x90] sm:$0xff]
        %v2066 = vld [vmem:[%s471 + $0x98] sm:$0xff]
        %v2067 = vld [vmem:[%s471 + $0xa0] sm:$0xff]
        %v2068 = vld [vmem:[%s471 + $0xa8] sm:$0xff]
        %v2069 = vld [vmem:[%s471 + $0xb0] sm:$0xff]
        %v2070 = vld [vmem:[%s471 + $0xb8] sm:$0xff]
        %v2071 = vld [vmem:[%s471 + $0xc0] sm:$0xff]
        %v2072 = vld [vmem:[%s471 + $0xc8] sm:$0xff]
        %v2073 = vld [vmem:[%s471 + $0xd0] sm:$0xff]
        %v2074 = vld [vmem:[%s471 + $0xd8] sm:$0xff]
        %v2075 = vld [vmem:[%s471 + $0xe0] sm:$0xff]
        %v2076 = vld [vmem:[%s471 + $0xe8] sm:$0xff]
        %v2077 = vld [vmem:[%s471 + $0xf0] sm:$0xff]
        %v2078 = vld [vmem:[%s471 + $0xf8] sm:$0xff]
        %v2079 = vld [vmem:[%s471 + $0x100] sm:$0xff]
        %v2080 = vld [vmem:[%s471 + $0x108] sm:$0xff]
        %v2081 = vld [vmem:[%s471 + $0x110] sm:$0xff]
        %v2082 = vld [vmem:[%s471 + $0x118] sm:$0xff]
        %v2083 = vld [vmem:[%s471 + $0x120] sm:$0xff]
        %v2084 = vld [vmem:[%s471 + $0x128] sm:$0xff]
        %v2085 = vld [vmem:[%s471 + $0x130] sm:$0xff]
        %v2086 = vld [vmem:[%s471 + $0x138] sm:$0xff]
        %v2087 = vld [vmem:[%s471 + $0x140] sm:$0xff]
        %v2088 = vld [vmem:[%s471 + $0x148] sm:$0xff]
        %v2089 = vld [vmem:[%s471 + $0x150] sm:$0xff]
        %v2090 = vld [vmem:[%s471 + $0x158] sm:$0xff]
        %v2091 = vld [vmem:[%s471 + $0x160] sm:$0xff]
        %v2092 = vld [vmem:[%s471 + $0x168] sm:$0xff]
        %v2093 = vld [vmem:[%s471 + $0x170] sm:$0xff]
        %v2094 = vld [vmem:[%s471 + $0x178] sm:$0xff]
        %v2095 = vld [vmem:[%s471 + $0x180] sm:$0xff]
        %v2096 = vld [vmem:[%s471 + $0x188] sm:$0xff]
        %v2097 = vld [vmem:[%s471 + $0x190] sm:$0xff]
        %v2098 = vld [vmem:[%s471 + $0x198] sm:$0xff]
        %v2099 = vld [vmem:[%s471 + $0x1a0] sm:$0xff]
        %v2100 = vld [vmem:[%s471 + $0x1a8] sm:$0xff]
        %v2101 = vld [vmem:[%s471 + $0x1b0] sm:$0xff]
        %v2102 = vld [vmem:[%s471 + $0x1b8] sm:$0xff]
        %v2103 = vld [vmem:[%s471 + $0x1c0] sm:$0xff]
        %v2104 = vld [vmem:[%s471 + $0x1c8] sm:$0xff]
        %v2105 = vld [vmem:[%s471 + $0x1d0] sm:$0xff]
        %v2106 = vld [vmem:[%s471 + $0x1d8] sm:$0xff]
        %v2107 = vld [vmem:[%s471 + $0x1e0] sm:$0xff]
        %v2108 = vld [vmem:[%s471 + $0x1e8] sm:$0xff]
        %v2109 = vld [vmem:[%s471 + $0x1f0] sm:$0xff]
        %v2110 = vld [vmem:[%s471 + $0x1f8] sm:$0xff]
        %2111 = vxpose.xlu0.c.b16.start [1/8] %v1341, 128
        %2112 = vxpose.xlu0.c.b16.cont [2/8] %v1345, 128
        %2113 = vxpose.xlu0.c.b16.cont [3/8] %v1349, 128
        %2114 = vxpose.xlu0.c.b16.cont [4/8] %v1353, 128
        %2115 = vxpose.xlu0.c.b16.cont [5/8] %v1357, 128
        %2116 = vxpose.xlu0.c.b16.cont [6/8] %v1361, 128
        %2117 = vxpose.xlu0.c.b16.cont [7/8] %v1365, 128
        %2118 = vxpose.xlu0.c.b16.end [8/8] %v1369, 128
        %v2119 = vpop.trf.xlu0
        %v2120 = vpop.trf.xlu0
        %v2121 = vpop.trf.xlu0
        %v2122 = vpop.trf.xlu0
        %v2123 = vpop.trf.xlu0
        %v2124 = vpop.trf.xlu0
        %v2125 = vpop.trf.xlu0
        %v2126 = vpop.trf.xlu0
        %2127 = vxpose.xlu0.c.b16.start [1/8] %v1342, 128
        %2128 = vxpose.xlu0.c.b16.cont [2/8] %v1346, 128
        %2129 = vxpose.xlu0.c.b16.cont [3/8] %v1350, 128
        %2130 = vxpose.xlu0.c.b16.cont [4/8] %v1354, 128
        %2131 = vxpose.xlu0.c.b16.cont [5/8] %v1358, 128
        %2132 = vxpose.xlu0.c.b16.cont [6/8] %v1362, 128
        %2133 = vxpose.xlu0.c.b16.cont [7/8] %v1366, 128
        %2134 = vxpose.xlu0.c.b16.end [8/8] %v1370, 128
        %v2135 = vpop.trf.xlu0
        %v2136 = vpop.trf.xlu0
        %v2137 = vpop.trf.xlu0
        %v2138 = vpop.trf.xlu0
        %v2139 = vpop.trf.xlu0
        %v2140 = vpop.trf.xlu0
        %v2141 = vpop.trf.xlu0
        %v2142 = vpop.trf.xlu0
        %2143 = vxpose.xlu0.c.b16.start [1/8] %v1343, 128
        %2144 = vxpose.xlu0.c.b16.cont [2/8] %v1347, 128
        %2145 = vxpose.xlu0.c.b16.cont [3/8] %v1351, 128
        %2146 = vxpose.xlu0.c.b16.cont [4/8] %v1355, 128
        %2147 = vxpose.xlu0.c.b16.cont [5/8] %v1359, 128
        %2148 = vxpose.xlu0.c.b16.cont [6/8] %v1363, 128
        %2149 = vxpose.xlu0.c.b16.cont [7/8] %v1367, 128
        %2150 = vxpose.xlu0.c.b16.end [8/8] %v1371, 128
        %v2151 = vpop.trf.xlu0
        %v2152 = vpop.trf.xlu0
        %v2153 = vpop.trf.xlu0
        %v2154 = vpop.trf.xlu0
        %v2155 = vpop.trf.xlu0
        %v2156 = vpop.trf.xlu0
        %v2157 = vpop.trf.xlu0
        %v2158 = vpop.trf.xlu0
        %2159 = vxpose.xlu0.c.b16.start [1/8] %v1344, 128
        %2160 = vxpose.xlu0.c.b16.cont [2/8] %v1348, 128
        %2161 = vxpose.xlu0.c.b16.cont [3/8] %v1352, 128
        %2162 = vxpose.xlu0.c.b16.cont [4/8] %v1356, 128
        %2163 = vxpose.xlu0.c.b16.cont [5/8] %v1360, 128
        %2164 = vxpose.xlu0.c.b16.cont [6/8] %v1364, 128
        %2165 = vxpose.xlu0.c.b16.cont [7/8] %v1368, 128
        %2166 = vxpose.xlu0.c.b16.end [8/8] %v1372, 128
        %v2167 = vpop.trf.xlu0
        %v2168 = vpop.trf.xlu0
        %v2169 = vpop.trf.xlu0
        %v2170 = vpop.trf.xlu0
        %v2171 = vpop.trf.xlu0
        %v2172 = vpop.trf.xlu0
        %v2173 = vpop.trf.xlu0
        %v2174 = vpop.trf.xlu0
        %2175 = vmatprep.subr.bf16.mxu0 0
        %2176 = vmatpush1.bf16.msra.mxu0 %v1614
        %2177 = vmatprep.subr.bf16.mxu0 0
        %2178 = vmatpush1.bf16.msra.mxu0 %v1615
        %2179 = vmatprep.subr.bf16.mxu0 0
        %2180 = vmatpush1.bf16.msra.mxu0 %v1616
        %2181 = vmatprep.subr.bf16.mxu0 0
        %2182 = vmatpush1.bf16.msra.mxu0 %v1617
        %2183 = vmatprep.subr.bf16.mxu0 0
        %2184 = vmatpush1.bf16.msra.mxu0 %v1618
        %2185 = vmatprep.subr.bf16.mxu0 0
        %2186 = vmatpush1.bf16.msra.mxu0 %v1619
        %2187 = vmatprep.subr.bf16.mxu0 0
        %2188 = vmatpush1.bf16.msra.mxu0 %v1620
        %2189 = vmatprep.subr.bf16.mxu0 0
        %2190 = vmatpush1.bf16.msra.mxu0 %v1621
        %2191 = vmatprep.subr.bf16.mxu0 0
        %2192 = vmatpush1.bf16.msra.mxu0 0
        %2193 = vmatprep.subr.bf16.mxu0 0
        %2194 = vmatpush1.bf16.msra.mxu0 0
        %2195 = vmatprep.subr.bf16.mxu0 0
        %2196 = vmatpush1.bf16.msra.mxu0 0
        %2197 = vmatprep.subr.bf16.mxu0 0
        %2198 = vmatpush1.bf16.msra.mxu0 0
        %2199 = vmatprep.subr.bf16.mxu0 0
        %2200 = vmatpush1.bf16.msra.mxu0 0
        %2201 = vmatprep.subr.bf16.mxu0 0
        %2202 = vmatpush1.bf16.msra.mxu0 0
        %2203 = vmatprep.subr.bf16.mxu0 0
        %2204 = vmatpush1.bf16.msra.mxu0 0
        %2205 = vmatprep.subr.bf16.mxu0 0
        %2206 = vmatpush1.bf16.msra.mxu0 0
        %2207 = vmatprep.mubr.bf16.mxu0 0
        %2208 = vmatmul.mubr.bf16.gmra.mrb[0].mxu0 %v2119
        %v2209 = vpop.f32.mrb[0].mxu0
        %v2210 = vadd.f32 %v1729, %v2209
        %v2211 = vpop.f32.mrb[0].mxu0
        %v2212 = vpop.f32.mrb[0].mxu0
        %v2213 = vadd.f32 %v1732, %v2212
        %v2214 = vpop.f32.mrb[0].mxu0
        %2215 = vmatprep.mubr.bf16.mxu0 0
        %2216 = vmatmul.mubr.bf16.gmra.mrb[0].mxu0 %v2120
        %v2217 = vpop.f32.mrb[0].mxu0
        %v2218 = vadd.f32 %v1737, %v2217
        %v2219 = vpop.f32.mrb[0].mxu0
        %v2220 = vpop.f32.mrb[0].mxu0
        %v2221 = vadd.f32 %v1740, %v2220
        %v2222 = vpop.f32.mrb[0].mxu0
        %2223 = vmatprep.mubr.bf16.mxu0 0
        %2224 = vmatmul.mubr.bf16.gmra.mrb[0].mxu0 %v2121
        %v2225 = vpop.f32.mrb[0].mxu0
        %v2226 = vadd.f32 %v1745, %v2225
        %v2227 = vpop.f32.mrb[0].mxu0
        %v2228 = vpop.f32.mrb[0].mxu0
        %v2229 = vadd.f32 %v1748, %v2228
        %v2230 = vpop.f32.mrb[0].mxu0
        %2231 = vmatprep.mubr.bf16.mxu0 0
        %2232 = vmatmul.mubr.bf16.gmra.mrb[0].mxu0 %v2122
        %v2233 = vpop.f32.mrb[0].mxu0
        %v2234 = vadd.f32 %v1753, %v2233
        %v2235 = vpop.f32.mrb[0].mxu0
        %v2236 = vpop.f32.mrb[0].mxu0
        %v2237 = vadd.f32 %v1756, %v2236
        %v2238 = vpop.f32.mrb[0].mxu0
        %2239 = vmatprep.mubr.bf16.mxu0 0
        %2240 = vmatmul.mubr.bf16.gmra.mrb[0].mxu0 %v2123
        %v2241 = vpop.f32.mrb[0].mxu0
        %v2242 = vadd.f32 %v1761, %v2241
        %v2243 = vpop.f32.mrb[0].mxu0
        %v2244 = vpop.f32.mrb[0].mxu0
        %v2245 = vadd.f32 %v1764, %v2244
        %v2246 = vpop.f32.mrb[0].mxu0
        %2247 = vmatprep.mubr.bf16.mxu0 0
        %2248 = vmatmul.mubr.bf16.gmra.mrb[0].mxu0 %v2124
        %v2249 = vpop.f32.mrb[0].mxu0
        %v2250 = vadd.f32 %v1769, %v2249
        %v2251 = vpop.f32.mrb[0].mxu0
        %v2252 = vpop.f32.mrb[0].mxu0
        %v2253 = vadd.f32 %v1772, %v2252
        %v2254 = vpop.f32.mrb[0].mxu0
        %2255 = vmatprep.mubr.bf16.mxu0 0
        %2256 = vmatmul.mubr.bf16.gmra.mrb[0].mxu0 %v2125
        %v2257 = vpop.f32.mrb[0].mxu0
        %v2258 = vadd.f32 %v1777, %v2257
        %v2259 = vpop.f32.mrb[0].mxu0
        %v2260 = vpop.f32.mrb[0].mxu0
        %v2261 = vadd.f32 %v1780, %v2260
        %v2262 = vpop.f32.mrb[0].mxu0
        %2263 = vmatprep.mubr.bf16.mxu0 0
        %2264 = vmatmul.mubr.bf16.gmra.mrb[0].mxu0 %v2126
        %v2265 = vpop.f32.mrb[0].mxu0
        %v2266 = vadd.f32 %v1785, %v2265
        %v2267 = vpop.f32.mrb[0].mxu0
        %v2268 = vpop.f32.mrb[0].mxu0
        %v2269 = vadd.f32 %v1788, %v2268
        %v2270 = vpop.f32.mrb[0].mxu0
        %2271 = vmatprep.mubr.bf16.mxu0 0
        %2272 = vmatmul.mubr.bf16.gmra.mrb[0].mxu0 %v2135
        %v2273 = vpop.f32.mrb[0].mxu0
        %v2274 = vadd.f32 %v1793, %v2273
        %v2275 = vpop.f32.mrb[0].mxu0
        %v2276 = vpop.f32.mrb[0].mxu0
        %v2277 = vadd.f32 %v1796, %v2276
        %v2278 = vpop.f32.mrb[0].mxu0
        %2279 = vmatprep.mubr.bf16.mxu0 0
        %2280 = vmatmul.mubr.bf16.gmra.mrb[0].mxu0 %v2136
        %v2281 = vpop.f32.mrb[0].mxu0
        %v2282 = vadd.f32 %v1801, %v2281
        %v2283 = vpop.f32.mrb[0].mxu0
        %v2284 = vpop.f32.mrb[0].mxu0
        %v2285 = vadd.f32 %v1804, %v2284
        %v2286 = vpop.f32.mrb[0].mxu0
        %2287 = vmatprep.mubr.bf16.mxu0 0
        %2288 = vmatmul.mubr.bf16.gmra.mrb[0].mxu0 %v2137
        %v2289 = vpop.f32.mrb[0].mxu0
        %v2290 = vadd.f32 %v1809, %v2289
        %v2291 = vpop.f32.mrb[0].mxu0
        %v2292 = vpop.f32.mrb[0].mxu0
        %v2293 = vadd.f32 %v1812, %v2292
        %v2294 = vpop.f32.mrb[0].mxu0
        %2295 = vmatprep.mubr.bf16.mxu0 0
        %2296 = vmatmul.mubr.bf16.gmra.mrb[0].mxu0 %v2138
        %v2297 = vpop.f32.mrb[0].mxu0
        %v2298 = vadd.f32 %v1817, %v2297
        %v2299 = vpop.f32.mrb[0].mxu0
        %v2300 = vpop.f32.mrb[0].mxu0
        %v2301 = vadd.f32 %v1820, %v2300
        %v2302 = vpop.f32.mrb[0].mxu0
        %2303 = vmatprep.mubr.bf16.mxu0 0
        %2304 = vmatmul.mubr.bf16.gmra.mrb[0].mxu0 %v2139
        %v2305 = vpop.f32.mrb[0].mxu0
        %v2306 = vadd.f32 %v1825, %v2305
        %v2307 = vpop.f32.mrb[0].mxu0
        %v2308 = vpop.f32.mrb[0].mxu0
        %v2309 = vadd.f32 %v1828, %v2308
        %v2310 = vpop.f32.mrb[0].mxu0
        %2311 = vmatprep.mubr.bf16.mxu0 0
        %2312 = vmatmul.mubr.bf16.gmra.mrb[0].mxu0 %v2140
        %v2313 = vpop.f32.mrb[0].mxu0
        %v2314 = vadd.f32 %v1833, %v2313
        %v2315 = vpop.f32.mrb[0].mxu0
        %v2316 = vpop.f32.mrb[0].mxu0
        %v2317 = vadd.f32 %v1836, %v2316
        %v2318 = vpop.f32.mrb[0].mxu0
        %2319 = vmatprep.mubr.bf16.mxu0 0
        %2320 = vmatmul.mubr.bf16.gmra.mrb[0].mxu0 %v2141
        %v2321 = vpop.f32.mrb[0].mxu0
        %v2322 = vadd.f32 %v1841, %v2321
        %v2323 = vpop.f32.mrb[0].mxu0
        %v2324 = vpop.f32.mrb[0].mxu0
        %v2325 = vadd.f32 %v1844, %v2324
        %v2326 = vpop.f32.mrb[0].mxu0
        %2327 = vmatprep.mubr.bf16.mxu0 0
        %2328 = vmatmul.mubr.bf16.gmra.mrb[0].mxu0 %v2142
        %v2329 = vpop.f32.mrb[0].mxu0
        %v2330 = vadd.f32 %v1849, %v2329
        %v2331 = vpop.f32.mrb[0].mxu0
        %v2332 = vpop.f32.mrb[0].mxu0
        %v2333 = vadd.f32 %v1852, %v2332
        %v2334 = vpop.f32.mrb[0].mxu0
        %2335 = vmatprep.mubr.bf16.mxu0 0
        %2336 = vmatmul.mubr.bf16.gmra.mrb[0].mxu0 %v2151
        %v2337 = vpop.f32.mrb[0].mxu0
        %v2338 = vadd.f32 %v1857, %v2337
        %v2339 = vpop.f32.mrb[0].mxu0
        %v2340 = vpop.f32.mrb[0].mxu0
        %v2341 = vadd.f32 %v1860, %v2340
        %v2342 = vpop.f32.mrb[0].mxu0
        %2343 = vmatprep.mubr.bf16.mxu0 0
        %2344 = vmatmul.mubr.bf16.gmra.mrb[0].mxu0 %v2152
        %v2345 = vpop.f32.mrb[0].mxu0
        %v2346 = vadd.f32 %v1865, %v2345
        %v2347 = vpop.f32.mrb[0].mxu0
        %v2348 = vpop.f32.mrb[0].mxu0
        %v2349 = vadd.f32 %v1868, %v2348
        %v2350 = vpop.f32.mrb[0].mxu0
        %2351 = vmatprep.mubr.bf16.mxu0 0
        %2352 = vmatmul.mubr.bf16.gmra.mrb[0].mxu0 %v2153
        %v2353 = vpop.f32.mrb[0].mxu0
        %v2354 = vadd.f32 %v1873, %v2353
        %v2355 = vpop.f32.mrb[0].mxu0
        %v2356 = vpop.f32.mrb[0].mxu0
        %v2357 = vadd.f32 %v1876, %v2356
        %v2358 = vpop.f32.mrb[0].mxu0
        %2359 = vmatprep.mubr.bf16.mxu0 0
        %2360 = vmatmul.mubr.bf16.gmra.mrb[0].mxu0 %v2154
        %v2361 = vpop.f32.mrb[0].mxu0
        %v2362 = vadd.f32 %v1881, %v2361
        %v2363 = vpop.f32.mrb[0].mxu0
        %v2364 = vpop.f32.mrb[0].mxu0
        %v2365 = vadd.f32 %v1884, %v2364
        %v2366 = vpop.f32.mrb[0].mxu0
        %2367 = vmatprep.mubr.bf16.mxu0 0
        %2368 = vmatmul.mubr.bf16.gmra.mrb[0].mxu0 %v2155
        %v2369 = vpop.f32.mrb[0].mxu0
        %v2370 = vadd.f32 %v1889, %v2369
        %v2371 = vpop.f32.mrb[0].mxu0
        %v2372 = vpop.f32.mrb[0].mxu0
        %v2373 = vadd.f32 %v1892, %v2372
        %v2374 = vpop.f32.mrb[0].mxu0
        %2375 = vmatprep.mubr.bf16.mxu0 0
        %2376 = vmatmul.mubr.bf16.gmra.mrb[0].mxu0 %v2156
        %v2377 = vpop.f32.mrb[0].mxu0
        %v2378 = vadd.f32 %v1897, %v2377
        %v2379 = vpop.f32.mrb[0].mxu0
        %v2380 = vpop.f32.mrb[0].mxu0
        %v2381 = vadd.f32 %v1900, %v2380
        %v2382 = vpop.f32.mrb[0].mxu0
        %2383 = vmatprep.mubr.bf16.mxu0 0
        %2384 = vmatmul.mubr.bf16.gmra.mrb[0].mxu0 %v2157
        %v2385 = vpop.f32.mrb[0].mxu0
        %v2386 = vadd.f32 %v1905, %v2385
        %v2387 = vpop.f32.mrb[0].mxu0
        %v2388 = vpop.f32.mrb[0].mxu0
        %v2389 = vadd.f32 %v1908, %v2388
        %v2390 = vpop.f32.mrb[0].mxu0
        %2391 = vmatprep.mubr.bf16.mxu0 0
        %2392 = vmatmul.mubr.bf16.gmra.mrb[0].mxu0 %v2158
        %v2393 = vpop.f32.mrb[0].mxu0
        %v2394 = vadd.f32 %v1913, %v2393
        %v2395 = vpop.f32.mrb[0].mxu0
        %v2396 = vpop.f32.mrb[0].mxu0
        %v2397 = vadd.f32 %v1916, %v2396
        %v2398 = vpop.f32.mrb[0].mxu0
        %2399 = vmatprep.mubr.bf16.mxu0 0
        %2400 = vmatmul.mubr.bf16.gmra.mrb[0].mxu0 %v2167
        %v2401 = vpop.f32.mrb[0].mxu0
        %v2402 = vadd.f32 %v1921, %v2401
        %v2403 = vpop.f32.mrb[0].mxu0
        %v2404 = vpop.f32.mrb[0].mxu0
        %v2405 = vadd.f32 %v1924, %v2404
        %v2406 = vpop.f32.mrb[0].mxu0
        %2407 = vmatprep.mubr.bf16.mxu0 0
        %2408 = vmatmul.mubr.bf16.gmra.mrb[0].mxu0 %v2168
        %v2409 = vpop.f32.mrb[0].mxu0
        %v2410 = vadd.f32 %v1929, %v2409
        %v2411 = vpop.f32.mrb[0].mxu0
        %v2412 = vpop.f32.mrb[0].mxu0
        %v2413 = vadd.f32 %v1932, %v2412
        %v2414 = vpop.f32.mrb[0].mxu0
        %2415 = vmatprep.mubr.bf16.mxu0 0
        %2416 = vmatmul.mubr.bf16.gmra.mrb[0].mxu0 %v2169
        %v2417 = vpop.f32.mrb[0].mxu0
        %v2418 = vadd.f32 %v1937, %v2417
        %v2419 = vpop.f32.mrb[0].mxu0
        %v2420 = vpop.f32.mrb[0].mxu0
        %v2421 = vadd.f32 %v1940, %v2420
        %v2422 = vpop.f32.mrb[0].mxu0
        %2423 = vmatprep.mubr.bf16.mxu0 0
        %2424 = vmatmul.mubr.bf16.gmra.mrb[0].mxu0 %v2170
        %v2425 = vpop.f32.mrb[0].mxu0
        %v2426 = vadd.f32 %v1945, %v2425
        %v2427 = vpop.f32.mrb[0].mxu0
        %v2428 = vpop.f32.mrb[0].mxu0
        %v2429 = vadd.f32 %v1948, %v2428
        %v2430 = vpop.f32.mrb[0].mxu0
        %2431 = vmatprep.mubr.bf16.mxu0 0
        %2432 = vmatmul.mubr.bf16.gmra.mrb[0].mxu0 %v2171
        %v2433 = vpop.f32.mrb[0].mxu0
        %v2434 = vadd.f32 %v1953, %v2433
        %v2435 = vpop.f32.mrb[0].mxu0
        %v2436 = vpop.f32.mrb[0].mxu0
        %v2437 = vadd.f32 %v1956, %v2436
        %v2438 = vpop.f32.mrb[0].mxu0
        %2439 = vmatprep.mubr.bf16.mxu0 0
        %2440 = vmatmul.mubr.bf16.gmra.mrb[0].mxu0 %v2172
        %v2441 = vpop.f32.mrb[0].mxu0
        %v2442 = vadd.f32 %v1961, %v2441
        %v2443 = vpop.f32.mrb[0].mxu0
        %v2444 = vpop.f32.mrb[0].mxu0
        %v2445 = vadd.f32 %v1964, %v2444
        %v2446 = vpop.f32.mrb[0].mxu0
        %2447 = vmatprep.mubr.bf16.mxu0 0
        %2448 = vmatmul.mubr.bf16.gmra.mrb[0].mxu0 %v2173
        %v2449 = vpop.f32.mrb[0].mxu0
        %v2450 = vadd.f32 %v1969, %v2449
        %v2451 = vpop.f32.mrb[0].mxu0
        %v2452 = vpop.f32.mrb[0].mxu0
        %v2453 = vadd.f32 %v1972, %v2452
        %v2454 = vpop.f32.mrb[0].mxu0
        %2455 = vmatprep.mubr.bf16.mxu0 0
        %2456 = vmatmul.mubr.bf16.gmra.mrb[0].mxu0 %v2174
        %v2457 = vpop.f32.mrb[0].mxu0
        %v2458 = vadd.f32 %v1977, %v2457
        %v2459 = vpop.f32.mrb[0].mxu0
        %v2460 = vpop.f32.mrb[0].mxu0
        %v2461 = vadd.f32 %v1980, %v2460
        %v2462 = vpop.f32.mrb[0].mxu0
        %2463 = vdwg.mxu0
        %v2464 = vld [vmem:[%s7] sm:$0xff]
        %v2465 = vld [vmem:[%s7 + $0x8] sm:$0xff]
        %v2466 = vld [vmem:[%s7 + $0x10] sm:$0xff]
        %v2467 = vld [vmem:[%s7 + $0x18] sm:$0xff]
        %v2468 = vld [vmem:[%s7 + $0x20] sm:$0xff]
        %v2469 = vld [vmem:[%s7 + $0x28] sm:$0xff]
        %v2470 = vld [vmem:[%s7 + $0x30] sm:$0xff]
        %v2471 = vld [vmem:[%s7 + $0x38] sm:$0xff]
        %v2472 = vld [vmem:[%s7 + $0x40] sm:$0xff]
        %v2473 = vld [vmem:[%s7 + $0x48] sm:$0xff]
        %v2474 = vld [vmem:[%s7 + $0x50] sm:$0xff]
        %v2475 = vld [vmem:[%s7 + $0x58] sm:$0xff]
        %v2476 = vld [vmem:[%s7 + $0x60] sm:$0xff]
        %v2477 = vld [vmem:[%s7 + $0x68] sm:$0xff]
        %v2478 = vld [vmem:[%s7 + $0x70] sm:$0xff]
        %v2479 = vld [vmem:[%s7 + $0x78] sm:$0xff]
        %2480 = vmatprep.subr.mxu0 0.0
        %2481 = vmatpush1.msra.mxu0 %v2464
        %2482 = vmatprep.subr.mxu0 0.0
        %2483 = vmatpush1.msra.mxu0 %v2465
        %2484 = vmatprep.subr.mxu0 0.0
        %2485 = vmatpush1.msra.mxu0 %v2466
        %2486 = vmatprep.subr.mxu0 0.0
        %2487 = vmatpush1.msra.mxu0 %v2467
        %2488 = vmatprep.subr.mxu0 0.0
        %2489 = vmatpush1.msra.mxu0 %v2468
        %2490 = vmatprep.subr.mxu0 0.0
        %2491 = vmatpush1.msra.mxu0 %v2469
        %2492 = vmatprep.subr.mxu0 0.0
        %2493 = vmatpush1.msra.mxu0 %v2470
        %2494 = vmatprep.subr.mxu0 0.0
        %2495 = vmatpush1.msra.mxu0 %v2471
        %2496 = vmatprep.subr.mxu0 0.0
        %2497 = vmatpush1.msra.mxu0 %v2472
        %2498 = vmatprep.subr.mxu0 0.0
        %2499 = vmatpush1.msra.mxu0 %v2473
        %2500 = vmatprep.subr.mxu0 0.0
        %2501 = vmatpush1.msra.mxu0 %v2474
        %2502 = vmatprep.subr.mxu0 0.0
        %2503 = vmatpush1.msra.mxu0 %v2475
        %2504 = vmatprep.subr.mxu0 0.0
        %2505 = vmatpush1.msra.mxu0 %v2476
        %2506 = vmatprep.subr.mxu0 0.0
        %2507 = vmatpush1.msra.mxu0 %v2477
        %2508 = vmatprep.subr.mxu0 0.0
        %2509 = vmatpush1.msra.mxu0 %v2478
        %2510 = vmatprep.subr.mxu0 0.0
        %2511 = vmatpush1.msra.mxu0 %v2479
        %2512 = vmatprep.subr.mxu0 0.0
        %2513 = vmatpush1.msra.mxu0 0.0
        %2514 = vmatprep.subr.mxu0 0.0
        %2515 = vmatpush1.msra.mxu0 0.0
        %2516 = vmatprep.subr.mxu0 0.0
        %2517 = vmatpush1.msra.mxu0 0.0
        %2518 = vmatprep.subr.mxu0 0.0
        %2519 = vmatpush1.msra.mxu0 0.0
        %2520 = vmatprep.subr.mxu0 0.0
        %2521 = vmatpush1.msra.mxu0 0.0
        %2522 = vmatprep.subr.mxu0 0.0
        %2523 = vmatpush1.msra.mxu0 0.0
        %2524 = vmatprep.subr.mxu0 0.0
        %2525 = vmatpush1.msra.mxu0 0.0
        %2526 = vmatprep.subr.mxu0 0.0
        %2527 = vmatpush1.msra.mxu0 0.0
        %2528 = vmatprep.subr.mxu0 0.0
        %2529 = vmatpush1.msra.mxu0 0.0
        %2530 = vmatprep.subr.mxu0 0.0
        %2531 = vmatpush1.msra.mxu0 0.0
        %2532 = vmatprep.subr.mxu0 0.0
        %2533 = vmatpush1.msra.mxu0 0.0
        %2534 = vmatprep.subr.mxu0 0.0
        %2535 = vmatpush1.msra.mxu0 0.0
        %2536 = vmatprep.subr.mxu0 0.0
        %2537 = vmatpush1.msra.mxu0 0.0
        %2538 = vmatprep.subr.mxu0 0.0
        %2539 = vmatpush1.msra.mxu0 0.0
        %2540 = vmatprep.subr.mxu0 0.0
        %2541 = vmatpush1.msra.mxu0 0.0
        %2542 = vmatprep.subr.mxu0 0.0
        %2543 = vmatpush1.msra.mxu0 0.0
        %2544 = vmatprep.mubr.f32.mxu0 0.0
        %2545 = vmatmul.mubr.f32.gmra.mrb[0].mxu0 %v1983
        %v2546 = vpop.f32.mrb[0].mxu0
        %v2547 = vadd.f32 0.0, %v2546
        %v2548 = vpop.f32.mrb[0].mxu0
        %2549 = vmatprep.mubr.f32.mxu0 0.0
        %2550 = vmatmul.mubr.f32.gmra.mrb[0].mxu0 %v1984
        %v2551 = vpop.f32.mrb[0].mxu0
        %v2552 = vadd.f32 0.0, %v2551
        %v2553 = vpop.f32.mrb[0].mxu0
        %2554 = vmatprep.mubr.f32.mxu0 0.0
        %2555 = vmatmul.mubr.f32.gmra.mrb[0].mxu0 %v1985
        %v2556 = vpop.f32.mrb[0].mxu0
        %v2557 = vadd.f32 0.0, %v2556
        %v2558 = vpop.f32.mrb[0].mxu0
        %2559 = vmatprep.mubr.f32.mxu0 0.0
        %2560 = vmatmul.mubr.f32.gmra.mrb[0].mxu0 %v1986
        %v2561 = vpop.f32.mrb[0].mxu0
        %v2562 = vadd.f32 0.0, %v2561
        %v2563 = vpop.f32.mrb[0].mxu0
        %2564 = vmatprep.mubr.f32.mxu0 0.0
        %2565 = vmatmul.mubr.f32.gmra.mrb[0].mxu0 %v1987
        %v2566 = vpop.f32.mrb[0].mxu0
        %v2567 = vadd.f32 0.0, %v2566
        %v2568 = vpop.f32.mrb[0].mxu0
        %2569 = vmatprep.mubr.f32.mxu0 0.0
        %2570 = vmatmul.mubr.f32.gmra.mrb[0].mxu0 %v1988
        %v2571 = vpop.f32.mrb[0].mxu0
        %v2572 = vadd.f32 0.0, %v2571
        %v2573 = vpop.f32.mrb[0].mxu0
        %2574 = vmatprep.mubr.f32.mxu0 0.0
        %2575 = vmatmul.mubr.f32.gmra.mrb[0].mxu0 %v1989
        %v2576 = vpop.f32.mrb[0].mxu0
        %v2577 = vadd.f32 0.0, %v2576
        %v2578 = vpop.f32.mrb[0].mxu0
        %2579 = vmatprep.mubr.f32.mxu0 0.0
        %2580 = vmatmul.mubr.f32.gmra.mrb[0].mxu0 %v1990
        %v2581 = vpop.f32.mrb[0].mxu0
        %v2582 = vadd.f32 0.0, %v2581
        %v2583 = vpop.f32.mrb[0].mxu0
        %2584 = vmatprep.mubr.f32.mxu0 0.0
        %2585 = vmatmul.mubr.f32.gmra.mrb[0].mxu0 %v1991
        %v2586 = vpop.f32.mrb[0].mxu0
        %v2587 = vadd.f32 0.0, %v2586
        %v2588 = vpop.f32.mrb[0].mxu0
        %2589 = vmatprep.mubr.f32.mxu0 0.0
        %2590 = vmatmul.mubr.f32.gmra.mrb[0].mxu0 %v1992
        %v2591 = vpop.f32.mrb[0].mxu0
        %v2592 = vadd.f32 0.0, %v2591
        %v2593 = vpop.f32.mrb[0].mxu0
        %2594 = vmatprep.mubr.f32.mxu0 0.0
        %2595 = vmatmul.mubr.f32.gmra.mrb[0].mxu0 %v1993
        %v2596 = vpop.f32.mrb[0].mxu0
        %v2597 = vadd.f32 0.0, %v2596
        %v2598 = vpop.f32.mrb[0].mxu0
        %2599 = vmatprep.mubr.f32.mxu0 0.0
        %2600 = vmatmul.mubr.f32.gmra.mrb[0].mxu0 %v1994
        %v2601 = vpop.f32.mrb[0].mxu0
        %v2602 = vadd.f32 0.0, %v2601
        %v2603 = vpop.f32.mrb[0].mxu0
        %2604 = vmatprep.mubr.f32.mxu0 0.0
        %2605 = vmatmul.mubr.f32.gmra.mrb[0].mxu0 %v1995
        %v2606 = vpop.f32.mrb[0].mxu0
        %v2607 = vadd.f32 0.0, %v2606
        %v2608 = vpop.f32.mrb[0].mxu0
        %2609 = vmatprep.mubr.f32.mxu0 0.0
        %2610 = vmatmul.mubr.f32.gmra.mrb[0].mxu0 %v1996
        %v2611 = vpop.f32.mrb[0].mxu0
        %v2612 = vadd.f32 0.0, %v2611
        %v2613 = vpop.f32.mrb[0].mxu0
        %2614 = vmatprep.mubr.f32.mxu0 0.0
        %2615 = vmatmul.mubr.f32.gmra.mrb[0].mxu0 %v1997
        %v2616 = vpop.f32.mrb[0].mxu0
        %v2617 = vadd.f32 0.0, %v2616
        %v2618 = vpop.f32.mrb[0].mxu0
        %2619 = vmatprep.mubr.f32.mxu0 0.0
        %2620 = vmatmul.mubr.f32.gmra.mrb[0].mxu0 %v1998
        %v2621 = vpop.f32.mrb[0].mxu0
        %v2622 = vadd.f32 0.0, %v2621
        %v2623 = vpop.f32.mrb[0].mxu0
        %2624 = vmatprep.mubr.f32.mxu0 0.0
        %2625 = vmatmul.mubr.f32.gmra.mrb[0].mxu0 %v1999
        %v2626 = vpop.f32.mrb[0].mxu0
        %v2627 = vadd.f32 0.0, %v2626
        %v2628 = vpop.f32.mrb[0].mxu0
        %2629 = vmatprep.mubr.f32.mxu0 0.0
        %2630 = vmatmul.mubr.f32.gmra.mrb[0].mxu0 %v2000
        %v2631 = vpop.f32.mrb[0].mxu0
        %v2632 = vadd.f32 0.0, %v2631
        %v2633 = vpop.f32.mrb[0].mxu0
        %2634 = vmatprep.mubr.f32.mxu0 0.0
        %2635 = vmatmul.mubr.f32.gmra.mrb[0].mxu0 %v2001
        %v2636 = vpop.f32.mrb[0].mxu0
        %v2637 = vadd.f32 0.0, %v2636
        %v2638 = vpop.f32.mrb[0].mxu0
        %2639 = vmatprep.mubr.f32.mxu0 0.0
        %2640 = vmatmul.mubr.f32.gmra.mrb[0].mxu0 %v2002
        %v2641 = vpop.f32.mrb[0].mxu0
        %v2642 = vadd.f32 0.0, %v2641
        %v2643 = vpop.f32.mrb[0].mxu0
        %2644 = vmatprep.mubr.f32.mxu0 0.0
        %2645 = vmatmul.mubr.f32.gmra.mrb[0].mxu0 %v2003
        %v2646 = vpop.f32.mrb[0].mxu0
        %v2647 = vadd.f32 0.0, %v2646
        %v2648 = vpop.f32.mrb[0].mxu0
        %2649 = vmatprep.mubr.f32.mxu0 0.0
        %2650 = vmatmul.mubr.f32.gmra.mrb[0].mxu0 %v2004
        %v2651 = vpop.f32.mrb[0].mxu0
        %v2652 = vadd.f32 0.0, %v2651
        %v2653 = vpop.f32.mrb[0].mxu0
        %2654 = vmatprep.mubr.f32.mxu0 0.0
        %2655 = vmatmul.mubr.f32.gmra.mrb[0].mxu0 %v2005
        %v2656 = vpop.f32.mrb[0].mxu0
        %v2657 = vadd.f32 0.0, %v2656
        %v2658 = vpop.f32.mrb[0].mxu0
        %2659 = vmatprep.mubr.f32.mxu0 0.0
        %2660 = vmatmul.mubr.f32.gmra.mrb[0].mxu0 %v2006
        %v2661 = vpop.f32.mrb[0].mxu0
        %v2662 = vadd.f32 0.0, %v2661
        %v2663 = vpop.f32.mrb[0].mxu0
        %2664 = vmatprep.mubr.f32.mxu0 0.0
        %2665 = vmatmul.mubr.f32.gmra.mrb[0].mxu0 %v2007
        %v2666 = vpop.f32.mrb[0].mxu0
        %v2667 = vadd.f32 0.0, %v2666
        %v2668 = vpop.f32.mrb[0].mxu0
        %2669 = vmatprep.mubr.f32.mxu0 0.0
        %2670 = vmatmul.mubr.f32.gmra.mrb[0].mxu0 %v2008
        %v2671 = vpop.f32.mrb[0].mxu0
        %v2672 = vadd.f32 0.0, %v2671
        %v2673 = vpop.f32.mrb[0].mxu0
        %2674 = vmatprep.mubr.f32.mxu0 0.0
        %2675 = vmatmul.mubr.f32.gmra.mrb[0].mxu0 %v2009
        %v2676 = vpop.f32.mrb[0].mxu0
        %v2677 = vadd.f32 0.0, %v2676
        %v2678 = vpop.f32.mrb[0].mxu0
        %2679 = vmatprep.mubr.f32.mxu0 0.0
        %2680 = vmatmul.mubr.f32.gmra.mrb[0].mxu0 %v2010
        %v2681 = vpop.f32.mrb[0].mxu0
        %v2682 = vadd.f32 0.0, %v2681
        %v2683 = vpop.f32.mrb[0].mxu0
        %2684 = vmatprep.mubr.f32.mxu0 0.0
        %2685 = vmatmul.mubr.f32.gmra.mrb[0].mxu0 %v2011
        %v2686 = vpop.f32.mrb[0].mxu0
        %v2687 = vadd.f32 0.0, %v2686
        %v2688 = vpop.f32.mrb[0].mxu0
        %2689 = vmatprep.mubr.f32.mxu0 0.0
        %2690 = vmatmul.mubr.f32.gmra.mrb[0].mxu0 %v2012
        %v2691 = vpop.f32.mrb[0].mxu0
        %v2692 = vadd.f32 0.0, %v2691
        %v2693 = vpop.f32.mrb[0].mxu0
        %2694 = vmatprep.mubr.f32.mxu0 0.0
        %2695 = vmatmul.mubr.f32.gmra.mrb[0].mxu0 %v2013
        %v2696 = vpop.f32.mrb[0].mxu0
        %v2697 = vadd.f32 0.0, %v2696
        %v2698 = vpop.f32.mrb[0].mxu0
        %2699 = vmatprep.mubr.f32.mxu0 0.0
        %2700 = vmatmul.mubr.f32.gmra.mrb[0].mxu0 %v2014
        %v2701 = vpop.f32.mrb[0].mxu0
        %v2702 = vadd.f32 0.0, %v2701
        %v2703 = vpop.f32.mrb[0].mxu0
        %2704 = vmatprep.mubr.f32.mxu0 0.0
        %2705 = vmatmul.mubr.f32.gmra.mrb[0].mxu0 %v2015
        %v2706 = vpop.f32.mrb[0].mxu0
        %v2707 = vadd.f32 0.0, %v2706
        %v2708 = vpop.f32.mrb[0].mxu0
        %2709 = vmatprep.mubr.f32.mxu0 0.0
        %2710 = vmatmul.mubr.f32.gmra.mrb[0].mxu0 %v2016
        %v2711 = vpop.f32.mrb[0].mxu0
        %v2712 = vadd.f32 0.0, %v2711
        %v2713 = vpop.f32.mrb[0].mxu0
        %2714 = vmatprep.mubr.f32.mxu0 0.0
        %2715 = vmatmul.mubr.f32.gmra.mrb[0].mxu0 %v2017
        %v2716 = vpop.f32.mrb[0].mxu0
        %v2717 = vadd.f32 0.0, %v2716
        %v2718 = vpop.f32.mrb[0].mxu0
        %2719 = vmatprep.mubr.f32.mxu0 0.0
        %2720 = vmatmul.mubr.f32.gmra.mrb[0].mxu0 %v2018
        %v2721 = vpop.f32.mrb[0].mxu0
        %v2722 = vadd.f32 0.0, %v2721
        %v2723 = vpop.f32.mrb[0].mxu0
        %2724 = vmatprep.mubr.f32.mxu0 0.0
        %2725 = vmatmul.mubr.f32.gmra.mrb[0].mxu0 %v2019
        %v2726 = vpop.f32.mrb[0].mxu0
        %v2727 = vadd.f32 0.0, %v2726
        %v2728 = vpop.f32.mrb[0].mxu0
        %2729 = vmatprep.mubr.f32.mxu0 0.0
        %2730 = vmatmul.mubr.f32.gmra.mrb[0].mxu0 %v2020
        %v2731 = vpop.f32.mrb[0].mxu0
        %v2732 = vadd.f32 0.0, %v2731
        %v2733 = vpop.f32.mrb[0].mxu0
        %2734 = vmatprep.mubr.f32.mxu0 0.0
        %2735 = vmatmul.mubr.f32.gmra.mrb[0].mxu0 %v2021
        %v2736 = vpop.f32.mrb[0].mxu0
        %v2737 = vadd.f32 0.0, %v2736
        %v2738 = vpop.f32.mrb[0].mxu0
        %2739 = vmatprep.mubr.f32.mxu0 0.0
        %2740 = vmatmul.mubr.f32.gmra.mrb[0].mxu0 %v2022
        %v2741 = vpop.f32.mrb[0].mxu0
        %v2742 = vadd.f32 0.0, %v2741
        %v2743 = vpop.f32.mrb[0].mxu0
        %2744 = vmatprep.mubr.f32.mxu0 0.0
        %2745 = vmatmul.mubr.f32.gmra.mrb[0].mxu0 %v2023
        %v2746 = vpop.f32.mrb[0].mxu0
        %v2747 = vadd.f32 0.0, %v2746
        %v2748 = vpop.f32.mrb[0].mxu0
        %2749 = vmatprep.mubr.f32.mxu0 0.0
        %2750 = vmatmul.mubr.f32.gmra.mrb[0].mxu0 %v2024
        %v2751 = vpop.f32.mrb[0].mxu0
        %v2752 = vadd.f32 0.0, %v2751
        %v2753 = vpop.f32.mrb[0].mxu0
        %2754 = vmatprep.mubr.f32.mxu0 0.0
        %2755 = vmatmul.mubr.f32.gmra.mrb[0].mxu0 %v2025
        %v2756 = vpop.f32.mrb[0].mxu0
        %v2757 = vadd.f32 0.0, %v2756
        %v2758 = vpop.f32.mrb[0].mxu0
        %2759 = vmatprep.mubr.f32.mxu0 0.0
        %2760 = vmatmul.mubr.f32.gmra.mrb[0].mxu0 %v2026
        %v2761 = vpop.f32.mrb[0].mxu0
        %v2762 = vadd.f32 0.0, %v2761
        %v2763 = vpop.f32.mrb[0].mxu0
        %2764 = vmatprep.mubr.f32.mxu0 0.0
        %2765 = vmatmul.mubr.f32.gmra.mrb[0].mxu0 %v2027
        %v2766 = vpop.f32.mrb[0].mxu0
        %v2767 = vadd.f32 0.0, %v2766
        %v2768 = vpop.f32.mrb[0].mxu0
        %2769 = vmatprep.mubr.f32.mxu0 0.0
        %2770 = vmatmul.mubr.f32.gmra.mrb[0].mxu0 %v2028
        %v2771 = vpop.f32.mrb[0].mxu0
        %v2772 = vadd.f32 0.0, %v2771
        %v2773 = vpop.f32.mrb[0].mxu0
        %2774 = vmatprep.mubr.f32.mxu0 0.0
        %2775 = vmatmul.mubr.f32.gmra.mrb[0].mxu0 %v2029
        %v2776 = vpop.f32.mrb[0].mxu0
        %v2777 = vadd.f32 0.0, %v2776
        %v2778 = vpop.f32.mrb[0].mxu0
        %2779 = vmatprep.mubr.f32.mxu0 0.0
        %2780 = vmatmul.mubr.f32.gmra.mrb[0].mxu0 %v2030
        %v2781 = vpop.f32.mrb[0].mxu0
        %v2782 = vadd.f32 0.0, %v2781
        %v2783 = vpop.f32.mrb[0].mxu0
        %2784 = vmatprep.mubr.f32.mxu0 0.0
        %2785 = vmatmul.mubr.f32.gmra.mrb[0].mxu0 %v2031
        %v2786 = vpop.f32.mrb[0].mxu0
        %v2787 = vadd.f32 0.0, %v2786
        %v2788 = vpop.f32.mrb[0].mxu0
        %2789 = vmatprep.mubr.f32.mxu0 0.0
        %2790 = vmatmul.mubr.f32.gmra.mrb[0].mxu0 %v2032
        %v2791 = vpop.f32.mrb[0].mxu0
        %v2792 = vadd.f32 0.0, %v2791
        %v2793 = vpop.f32.mrb[0].mxu0
        %2794 = vmatprep.mubr.f32.mxu0 0.0
        %2795 = vmatmul.mubr.f32.gmra.mrb[0].mxu0 %v2033
        %v2796 = vpop.f32.mrb[0].mxu0
        %v2797 = vadd.f32 0.0, %v2796
        %v2798 = vpop.f32.mrb[0].mxu0
        %2799 = vmatprep.mubr.f32.mxu0 0.0
        %2800 = vmatmul.mubr.f32.gmra.mrb[0].mxu0 %v2034
        %v2801 = vpop.f32.mrb[0].mxu0
        %v2802 = vadd.f32 0.0, %v2801
        %v2803 = vpop.f32.mrb[0].mxu0
        %2804 = vmatprep.mubr.f32.mxu0 0.0
        %2805 = vmatmul.mubr.f32.gmra.mrb[0].mxu0 %v2035
        %v2806 = vpop.f32.mrb[0].mxu0
        %v2807 = vadd.f32 0.0, %v2806
        %v2808 = vpop.f32.mrb[0].mxu0
        %2809 = vmatprep.mubr.f32.mxu0 0.0
        %2810 = vmatmul.mubr.f32.gmra.mrb[0].mxu0 %v2036
        %v2811 = vpop.f32.mrb[0].mxu0
        %v2812 = vadd.f32 0.0, %v2811
        %v2813 = vpop.f32.mrb[0].mxu0
        %2814 = vmatprep.mubr.f32.mxu0 0.0
        %2815 = vmatmul.mubr.f32.gmra.mrb[0].mxu0 %v2037
        %v2816 = vpop.f32.mrb[0].mxu0
        %v2817 = vadd.f32 0.0, %v2816
        %v2818 = vpop.f32.mrb[0].mxu0
        %2819 = vmatprep.mubr.f32.mxu0 0.0
        %2820 = vmatmul.mubr.f32.gmra.mrb[0].mxu0 %v2038
        %v2821 = vpop.f32.mrb[0].mxu0
        %v2822 = vadd.f32 0.0, %v2821
        %v2823 = vpop.f32.mrb[0].mxu0
        %2824 = vmatprep.mubr.f32.mxu0 0.0
        %2825 = vmatmul.mubr.f32.gmra.mrb[0].mxu0 %v2039
        %v2826 = vpop.f32.mrb[0].mxu0
        %v2827 = vadd.f32 0.0, %v2826
        %v2828 = vpop.f32.mrb[0].mxu0
        %2829 = vmatprep.mubr.f32.mxu0 0.0
        %2830 = vmatmul.mubr.f32.gmra.mrb[0].mxu0 %v2040
        %v2831 = vpop.f32.mrb[0].mxu0
        %v2832 = vadd.f32 0.0, %v2831
        %v2833 = vpop.f32.mrb[0].mxu0
        %2834 = vmatprep.mubr.f32.mxu0 0.0
        %2835 = vmatmul.mubr.f32.gmra.mrb[0].mxu0 %v2041
        %v2836 = vpop.f32.mrb[0].mxu0
        %v2837 = vadd.f32 0.0, %v2836
        %v2838 = vpop.f32.mrb[0].mxu0
        %2839 = vmatprep.mubr.f32.mxu0 0.0
        %2840 = vmatmul.mubr.f32.gmra.mrb[0].mxu0 %v2042
        %v2841 = vpop.f32.mrb[0].mxu0
        %v2842 = vadd.f32 0.0, %v2841
        %v2843 = vpop.f32.mrb[0].mxu0
        %2844 = vmatprep.mubr.f32.mxu0 0.0
        %2845 = vmatmul.mubr.f32.gmra.mrb[0].mxu0 %v2043
        %v2846 = vpop.f32.mrb[0].mxu0
        %v2847 = vadd.f32 0.0, %v2846
        %v2848 = vpop.f32.mrb[0].mxu0
        %2849 = vmatprep.mubr.f32.mxu0 0.0
        %2850 = vmatmul.mubr.f32.gmra.mrb[0].mxu0 %v2044
        %v2851 = vpop.f32.mrb[0].mxu0
        %v2852 = vadd.f32 0.0, %v2851
        %v2853 = vpop.f32.mrb[0].mxu0
        %2854 = vmatprep.mubr.f32.mxu0 0.0
        %2855 = vmatmul.mubr.f32.gmra.mrb[0].mxu0 %v2045
        %v2856 = vpop.f32.mrb[0].mxu0
        %v2857 = vadd.f32 0.0, %v2856
        %v2858 = vpop.f32.mrb[0].mxu0
        %2859 = vmatprep.mubr.f32.mxu0 0.0
        %2860 = vmatmul.mubr.f32.gmra.mrb[0].mxu0 %v2046
        %v2861 = vpop.f32.mrb[0].mxu0
        %v2862 = vadd.f32 0.0, %v2861
        %v2863 = vpop.f32.mrb[0].mxu0
        %2864 = vdwg.mxu0
        %v2865 = vadd.f32 %v2210, %v2547
        %v2866 = vadd.f32 %v2213, %v2552
        %v2867 = vadd.f32 %v2218, %v2557
        %v2868 = vadd.f32 %v2221, %v2562
        %v2869 = vadd.f32 %v2226, %v2567
        %v2870 = vadd.f32 %v2229, %v2572
        %v2871 = vadd.f32 %v2234, %v2577
        %v2872 = vadd.f32 %v2237, %v2582
        %v2873 = vadd.f32 %v2242, %v2587
        %v2874 = vadd.f32 %v2245, %v2592
        %v2875 = vadd.f32 %v2250, %v2597
        %v2876 = vadd.f32 %v2253, %v2602
        %v2877 = vadd.f32 %v2258, %v2607
        %v2878 = vadd.f32 %v2261, %v2612
        %v2879 = vadd.f32 %v2266, %v2617
        %v2880 = vadd.f32 %v2269, %v2622
        %v2881 = vadd.f32 %v2274, %v2627
        %v2882 = vadd.f32 %v2277, %v2632
        %v2883 = vadd.f32 %v2282, %v2637
        %v2884 = vadd.f32 %v2285, %v2642
        %v2885 = vadd.f32 %v2290, %v2647
        %v2886 = vadd.f32 %v2293, %v2652
        %v2887 = vadd.f32 %v2298, %v2657
        %v2888 = vadd.f32 %v2301, %v2662
        %v2889 = vadd.f32 %v2306, %v2667
        %v2890 = vadd.f32 %v2309, %v2672
        %v2891 = vadd.f32 %v2314, %v2677
        %v2892 = vadd.f32 %v2317, %v2682
        %v2893 = vadd.f32 %v2322, %v2687
        %v2894 = vadd.f32 %v2325, %v2692
        %v2895 = vadd.f32 %v2330, %v2697
        %v2896 = vadd.f32 %v2333, %v2702
        %v2897 = vadd.f32 %v2338, %v2707
        %v2898 = vadd.f32 %v2341, %v2712
        %v2899 = vadd.f32 %v2346, %v2717
        %v2900 = vadd.f32 %v2349, %v2722
        %v2901 = vadd.f32 %v2354, %v2727
        %v2902 = vadd.f32 %v2357, %v2732
        %v2903 = vadd.f32 %v2362, %v2737
        %v2904 = vadd.f32 %v2365, %v2742
        %v2905 = vadd.f32 %v2370, %v2747
        %v2906 = vadd.f32 %v2373, %v2752
        %v2907 = vadd.f32 %v2378, %v2757
        %v2908 = vadd.f32 %v2381, %v2762
        %v2909 = vadd.f32 %v2386, %v2767
        %v2910 = vadd.f32 %v2389, %v2772
        %v2911 = vadd.f32 %v2394, %v2777
        %v2912 = vadd.f32 %v2397, %v2782
        %v2913 = vadd.f32 %v2402, %v2787
        %v2914 = vadd.f32 %v2405, %v2792
        %v2915 = vadd.f32 %v2410, %v2797
        %v2916 = vadd.f32 %v2413, %v2802
        %v2917 = vadd.f32 %v2418, %v2807
        %v2918 = vadd.f32 %v2421, %v2812
        %v2919 = vadd.f32 %v2426, %v2817
        %v2920 = vadd.f32 %v2429, %v2822
        %v2921 = vadd.f32 %v2434, %v2827
        %v2922 = vadd.f32 %v2437, %v2832
        %v2923 = vadd.f32 %v2442, %v2837
        %v2924 = vadd.f32 %v2445, %v2842
        %v2925 = vadd.f32 %v2450, %v2847
        %v2926 = vadd.f32 %v2453, %v2852
        %v2927 = vadd.f32 %v2458, %v2857
        %v2928 = vadd.f32 %v2461, %v2862
        %v2929 = vld [vmem:[%s8] sm:$0xff]
        %v2930 = vld [vmem:[%s8 + $0x8] sm:$0xff]
        %v2931 = vld [vmem:[%s8 + $0x10] sm:$0xff]
        %v2932 = vld [vmem:[%s8 + $0x18] sm:$0xff]
        %v2933 = vld [vmem:[%s8 + $0x20] sm:$0xff]
        %v2934 = vld [vmem:[%s8 + $0x28] sm:$0xff]
        %v2935 = vld [vmem:[%s8 + $0x30] sm:$0xff]
        %v2936 = vld [vmem:[%s8 + $0x38] sm:$0xff]
        %v2937 = vld [vmem:[%s8 + $0x40] sm:$0xff]
        %v2938 = vld [vmem:[%s8 + $0x48] sm:$0xff]
        %v2939 = vld [vmem:[%s8 + $0x50] sm:$0xff]
        %v2940 = vld [vmem:[%s8 + $0x58] sm:$0xff]
        %v2941 = vld [vmem:[%s8 + $0x60] sm:$0xff]
        %v2942 = vld [vmem:[%s8 + $0x68] sm:$0xff]
        %v2943 = vld [vmem:[%s8 + $0x70] sm:$0xff]
        %v2944 = vld [vmem:[%s8 + $0x78] sm:$0xff]
        %2945 = vmatprep.subr.mxu0 0.0
        %2946 = vmatpush1.msra.mxu0 %v2929
        %2947 = vmatprep.subr.mxu0 0.0
        %2948 = vmatpush1.msra.mxu0 %v2930
        %2949 = vmatprep.subr.mxu0 0.0
        %2950 = vmatpush1.msra.mxu0 %v2931
        %2951 = vmatprep.subr.mxu0 0.0
        %2952 = vmatpush1.msra.mxu0 %v2932
        %2953 = vmatprep.subr.mxu0 0.0
        %2954 = vmatpush1.msra.mxu0 %v2933
        %2955 = vmatprep.subr.mxu0 0.0
        %2956 = vmatpush1.msra.mxu0 %v2934
        %2957 = vmatprep.subr.mxu0 0.0
        %2958 = vmatpush1.msra.mxu0 %v2935
        %2959 = vmatprep.subr.mxu0 0.0
        %2960 = vmatpush1.msra.mxu0 %v2936
        %2961 = vmatprep.subr.mxu0 0.0
        %2962 = vmatpush1.msra.mxu0 %v2937
        %2963 = vmatprep.subr.mxu0 0.0
        %2964 = vmatpush1.msra.mxu0 %v2938
        %2965 = vmatprep.subr.mxu0 0.0
        %2966 = vmatpush1.msra.mxu0 %v2939
        %2967 = vmatprep.subr.mxu0 0.0
        %2968 = vmatpush1.msra.mxu0 %v2940
        %2969 = vmatprep.subr.mxu0 0.0
        %2970 = vmatpush1.msra.mxu0 %v2941
        %2971 = vmatprep.subr.mxu0 0.0
        %2972 = vmatpush1.msra.mxu0 %v2942
        %2973 = vmatprep.subr.mxu0 0.0
        %2974 = vmatpush1.msra.mxu0 %v2943
        %2975 = vmatprep.subr.mxu0 0.0
        %2976 = vmatpush1.msra.mxu0 %v2944
        %2977 = vmatprep.subr.mxu0 0.0
        %2978 = vmatpush1.msra.mxu0 0.0
        %2979 = vmatprep.subr.mxu0 0.0
        %2980 = vmatpush1.msra.mxu0 0.0
        %2981 = vmatprep.subr.mxu0 0.0
        %2982 = vmatpush1.msra.mxu0 0.0
        %2983 = vmatprep.subr.mxu0 0.0
        %2984 = vmatpush1.msra.mxu0 0.0
        %2985 = vmatprep.subr.mxu0 0.0
        %2986 = vmatpush1.msra.mxu0 0.0
        %2987 = vmatprep.subr.mxu0 0.0
        %2988 = vmatpush1.msra.mxu0 0.0
        %2989 = vmatprep.subr.mxu0 0.0
        %2990 = vmatpush1.msra.mxu0 0.0
        %2991 = vmatprep.subr.mxu0 0.0
        %2992 = vmatpush1.msra.mxu0 0.0
        %2993 = vmatprep.subr.mxu0 0.0
        %2994 = vmatpush1.msra.mxu0 0.0
        %2995 = vmatprep.subr.mxu0 0.0
        %2996 = vmatpush1.msra.mxu0 0.0
        %2997 = vmatprep.subr.mxu0 0.0
        %2998 = vmatpush1.msra.mxu0 0.0
        %2999 = vmatprep.subr.mxu0 0.0
        %3000 = vmatpush1.msra.mxu0 0.0
        %3001 = vmatprep.subr.mxu0 0.0
        %3002 = vmatpush1.msra.mxu0 0.0
        %3003 = vmatprep.subr.mxu0 0.0
        %3004 = vmatpush1.msra.mxu0 0.0
        %3005 = vmatprep.subr.mxu0 0.0
        %3006 = vmatpush1.msra.mxu0 0.0
        %3007 = vmatprep.subr.mxu0 0.0
        %3008 = vmatpush1.msra.mxu0 0.0
        %3009 = vmatprep.mubr.f32.mxu0 0.0
        %3010 = vmatmul.mubr.f32.gmra.mrb[0].mxu0 %v2047
        %v3011 = vpop.f32.mrb[0].mxu0
        %v3012 = vadd.f32 0.0, %v3011
        %v3013 = vpop.f32.mrb[0].mxu0
        %3014 = vmatprep.mubr.f32.mxu0 0.0
        %3015 = vmatmul.mubr.f32.gmra.mrb[0].mxu0 %v2048
        %v3016 = vpop.f32.mrb[0].mxu0
        %v3017 = vadd.f32 0.0, %v3016
        %v3018 = vpop.f32.mrb[0].mxu0
        %3019 = vmatprep.mubr.f32.mxu0 0.0
        %3020 = vmatmul.mubr.f32.gmra.mrb[0].mxu0 %v2049
        %v3021 = vpop.f32.mrb[0].mxu0
        %v3022 = vadd.f32 0.0, %v3021
        %v3023 = vpop.f32.mrb[0].mxu0
        %3024 = vmatprep.mubr.f32.mxu0 0.0
        %3025 = vmatmul.mubr.f32.gmra.mrb[0].mxu0 %v2050
        %v3026 = vpop.f32.mrb[0].mxu0
        %v3027 = vadd.f32 0.0, %v3026
        %v3028 = vpop.f32.mrb[0].mxu0
        %3029 = vmatprep.mubr.f32.mxu0 0.0
        %3030 = vmatmul.mubr.f32.gmra.mrb[0].mxu0 %v2051
        %v3031 = vpop.f32.mrb[0].mxu0
        %v3032 = vadd.f32 0.0, %v3031
        %v3033 = vpop.f32.mrb[0].mxu0
        %3034 = vmatprep.mubr.f32.mxu0 0.0
        %3035 = vmatmul.mubr.f32.gmra.mrb[0].mxu0 %v2052
        %v3036 = vpop.f32.mrb[0].mxu0
        %v3037 = vadd.f32 0.0, %v3036
        %v3038 = vpop.f32.mrb[0].mxu0
        %3039 = vmatprep.mubr.f32.mxu0 0.0
        %3040 = vmatmul.mubr.f32.gmra.mrb[0].mxu0 %v2053
        %v3041 = vpop.f32.mrb[0].mxu0
        %v3042 = vadd.f32 0.0, %v3041
        %v3043 = vpop.f32.mrb[0].mxu0
        %3044 = vmatprep.mubr.f32.mxu0 0.0
        %3045 = vmatmul.mubr.f32.gmra.mrb[0].mxu0 %v2054
        %v3046 = vpop.f32.mrb[0].mxu0
        %v3047 = vadd.f32 0.0, %v3046
        %v3048 = vpop.f32.mrb[0].mxu0
        %3049 = vmatprep.mubr.f32.mxu0 0.0
        %3050 = vmatmul.mubr.f32.gmra.mrb[0].mxu0 %v2055
        %v3051 = vpop.f32.mrb[0].mxu0
        %v3052 = vadd.f32 0.0, %v3051
        %v3053 = vpop.f32.mrb[0].mxu0
        %3054 = vmatprep.mubr.f32.mxu0 0.0
        %3055 = vmatmul.mubr.f32.gmra.mrb[0].mxu0 %v2056
        %v3056 = vpop.f32.mrb[0].mxu0
        %v3057 = vadd.f32 0.0, %v3056
        %v3058 = vpop.f32.mrb[0].mxu0
        %3059 = vmatprep.mubr.f32.mxu0 0.0
        %3060 = vmatmul.mubr.f32.gmra.mrb[0].mxu0 %v2057
        %v3061 = vpop.f32.mrb[0].mxu0
        %v3062 = vadd.f32 0.0, %v3061
        %v3063 = vpop.f32.mrb[0].mxu0
        %3064 = vmatprep.mubr.f32.mxu0 0.0
        %3065 = vmatmul.mubr.f32.gmra.mrb[0].mxu0 %v2058
        %v3066 = vpop.f32.mrb[0].mxu0
        %v3067 = vadd.f32 0.0, %v3066
        %v3068 = vpop.f32.mrb[0].mxu0
        %3069 = vmatprep.mubr.f32.mxu0 0.0
        %3070 = vmatmul.mubr.f32.gmra.mrb[0].mxu0 %v2059
        %v3071 = vpop.f32.mrb[0].mxu0
        %v3072 = vadd.f32 0.0, %v3071
        %v3073 = vpop.f32.mrb[0].mxu0
        %3074 = vmatprep.mubr.f32.mxu0 0.0
        %3075 = vmatmul.mubr.f32.gmra.mrb[0].mxu0 %v2060
        %v3076 = vpop.f32.mrb[0].mxu0
        %v3077 = vadd.f32 0.0, %v3076
        %v3078 = vpop.f32.mrb[0].mxu0
        %3079 = vmatprep.mubr.f32.mxu0 0.0
        %3080 = vmatmul.mubr.f32.gmra.mrb[0].mxu0 %v2061
        %v3081 = vpop.f32.mrb[0].mxu0
        %v3082 = vadd.f32 0.0, %v3081
        %v3083 = vpop.f32.mrb[0].mxu0
        %3084 = vmatprep.mubr.f32.mxu0 0.0
        %3085 = vmatmul.mubr.f32.gmra.mrb[0].mxu0 %v2062
        %v3086 = vpop.f32.mrb[0].mxu0
        %v3087 = vadd.f32 0.0, %v3086
        %v3088 = vpop.f32.mrb[0].mxu0
        %3089 = vmatprep.mubr.f32.mxu0 0.0
        %3090 = vmatmul.mubr.f32.gmra.mrb[0].mxu0 %v2063
        %v3091 = vpop.f32.mrb[0].mxu0
        %v3092 = vadd.f32 0.0, %v3091
        %v3093 = vpop.f32.mrb[0].mxu0
        %3094 = vmatprep.mubr.f32.mxu0 0.0
        %3095 = vmatmul.mubr.f32.gmra.mrb[0].mxu0 %v2064
        %v3096 = vpop.f32.mrb[0].mxu0
        %v3097 = vadd.f32 0.0, %v3096
        %v3098 = vpop.f32.mrb[0].mxu0
        %3099 = vmatprep.mubr.f32.mxu0 0.0
        %3100 = vmatmul.mubr.f32.gmra.mrb[0].mxu0 %v2065
        %v3101 = vpop.f32.mrb[0].mxu0
        %v3102 = vadd.f32 0.0, %v3101
        %v3103 = vpop.f32.mrb[0].mxu0
        %3104 = vmatprep.mubr.f32.mxu0 0.0
        %3105 = vmatmul.mubr.f32.gmra.mrb[0].mxu0 %v2066
        %v3106 = vpop.f32.mrb[0].mxu0
        %v3107 = vadd.f32 0.0, %v3106
        %v3108 = vpop.f32.mrb[0].mxu0
        %3109 = vmatprep.mubr.f32.mxu0 0.0
        %3110 = vmatmul.mubr.f32.gmra.mrb[0].mxu0 %v2067
        %v3111 = vpop.f32.mrb[0].mxu0
        %v3112 = vadd.f32 0.0, %v3111
        %v3113 = vpop.f32.mrb[0].mxu0
        %3114 = vmatprep.mubr.f32.mxu0 0.0
        %3115 = vmatmul.mubr.f32.gmra.mrb[0].mxu0 %v2068
        %v3116 = vpop.f32.mrb[0].mxu0
        %v3117 = vadd.f32 0.0, %v3116
        %v3118 = vpop.f32.mrb[0].mxu0
        %3119 = vmatprep.mubr.f32.mxu0 0.0
        %3120 = vmatmul.mubr.f32.gmra.mrb[0].mxu0 %v2069
        %v3121 = vpop.f32.mrb[0].mxu0
        %v3122 = vadd.f32 0.0, %v3121
        %v3123 = vpop.f32.mrb[0].mxu0
        %3124 = vmatprep.mubr.f32.mxu0 0.0
        %3125 = vmatmul.mubr.f32.gmra.mrb[0].mxu0 %v2070
        %v3126 = vpop.f32.mrb[0].mxu0
        %v3127 = vadd.f32 0.0, %v3126
        %v3128 = vpop.f32.mrb[0].mxu0
        %3129 = vmatprep.mubr.f32.mxu0 0.0
        %3130 = vmatmul.mubr.f32.gmra.mrb[0].mxu0 %v2071
        %v3131 = vpop.f32.mrb[0].mxu0
        %v3132 = vadd.f32 0.0, %v3131
        %v3133 = vpop.f32.mrb[0].mxu0
        %3134 = vmatprep.mubr.f32.mxu0 0.0
        %3135 = vmatmul.mubr.f32.gmra.mrb[0].mxu0 %v2072
        %v3136 = vpop.f32.mrb[0].mxu0
        %v3137 = vadd.f32 0.0, %v3136
        %v3138 = vpop.f32.mrb[0].mxu0
        %3139 = vmatprep.mubr.f32.mxu0 0.0
        %3140 = vmatmul.mubr.f32.gmra.mrb[0].mxu0 %v2073
        %v3141 = vpop.f32.mrb[0].mxu0
        %v3142 = vadd.f32 0.0, %v3141
        %v3143 = vpop.f32.mrb[0].mxu0
        %3144 = vmatprep.mubr.f32.mxu0 0.0
        %3145 = vmatmul.mubr.f32.gmra.mrb[0].mxu0 %v2074
        %v3146 = vpop.f32.mrb[0].mxu0
        %v3147 = vadd.f32 0.0, %v3146
        %v3148 = vpop.f32.mrb[0].mxu0
        %3149 = vmatprep.mubr.f32.mxu0 0.0
        %3150 = vmatmul.mubr.f32.gmra.mrb[0].mxu0 %v2075
        %v3151 = vpop.f32.mrb[0].mxu0
        %v3152 = vadd.f32 0.0, %v3151
        %v3153 = vpop.f32.mrb[0].mxu0
        %3154 = vmatprep.mubr.f32.mxu0 0.0
        %3155 = vmatmul.mubr.f32.gmra.mrb[0].mxu0 %v2076
        %v3156 = vpop.f32.mrb[0].mxu0
        %v3157 = vadd.f32 0.0, %v3156
        %v3158 = vpop.f32.mrb[0].mxu0
        %3159 = vmatprep.mubr.f32.mxu0 0.0
        %3160 = vmatmul.mubr.f32.gmra.mrb[0].mxu0 %v2077
        %v3161 = vpop.f32.mrb[0].mxu0
        %v3162 = vadd.f32 0.0, %v3161
        %v3163 = vpop.f32.mrb[0].mxu0
        %3164 = vmatprep.mubr.f32.mxu0 0.0
        %3165 = vmatmul.mubr.f32.gmra.mrb[0].mxu0 %v2078
        %v3166 = vpop.f32.mrb[0].mxu0
        %v3167 = vadd.f32 0.0, %v3166
        %v3168 = vpop.f32.mrb[0].mxu0
        %3169 = vmatprep.mubr.f32.mxu0 0.0
        %3170 = vmatmul.mubr.f32.gmra.mrb[0].mxu0 %v2079
        %v3171 = vpop.f32.mrb[0].mxu0
        %v3172 = vadd.f32 0.0, %v3171
        %v3173 = vpop.f32.mrb[0].mxu0
        %3174 = vmatprep.mubr.f32.mxu0 0.0
        %3175 = vmatmul.mubr.f32.gmra.mrb[0].mxu0 %v2080
        %v3176 = vpop.f32.mrb[0].mxu0
        %v3177 = vadd.f32 0.0, %v3176
        %v3178 = vpop.f32.mrb[0].mxu0
        %3179 = vmatprep.mubr.f32.mxu0 0.0
        %3180 = vmatmul.mubr.f32.gmra.mrb[0].mxu0 %v2081
        %v3181 = vpop.f32.mrb[0].mxu0
        %v3182 = vadd.f32 0.0, %v3181
        %v3183 = vpop.f32.mrb[0].mxu0
        %3184 = vmatprep.mubr.f32.mxu0 0.0
        %3185 = vmatmul.mubr.f32.gmra.mrb[0].mxu0 %v2082
        %v3186 = vpop.f32.mrb[0].mxu0
        %v3187 = vadd.f32 0.0, %v3186
        %v3188 = vpop.f32.mrb[0].mxu0
        %3189 = vmatprep.mubr.f32.mxu0 0.0
        %3190 = vmatmul.mubr.f32.gmra.mrb[0].mxu0 %v2083
        %v3191 = vpop.f32.mrb[0].mxu0
        %v3192 = vadd.f32 0.0, %v3191
        %v3193 = vpop.f32.mrb[0].mxu0
        %3194 = vmatprep.mubr.f32.mxu0 0.0
        %3195 = vmatmul.mubr.f32.gmra.mrb[0].mxu0 %v2084
        %v3196 = vpop.f32.mrb[0].mxu0
        %v3197 = vadd.f32 0.0, %v3196
        %v3198 = vpop.f32.mrb[0].mxu0
        %3199 = vmatprep.mubr.f32.mxu0 0.0
        %3200 = vmatmul.mubr.f32.gmra.mrb[0].mxu0 %v2085
        %v3201 = vpop.f32.mrb[0].mxu0
        %v3202 = vadd.f32 0.0, %v3201
        %v3203 = vpop.f32.mrb[0].mxu0
        %3204 = vmatprep.mubr.f32.mxu0 0.0
        %3205 = vmatmul.mubr.f32.gmra.mrb[0].mxu0 %v2086
        %v3206 = vpop.f32.mrb[0].mxu0
        %v3207 = vadd.f32 0.0, %v3206
        %v3208 = vpop.f32.mrb[0].mxu0
        %3209 = vmatprep.mubr.f32.mxu0 0.0
        %3210 = vmatmul.mubr.f32.gmra.mrb[0].mxu0 %v2087
        %v3211 = vpop.f32.mrb[0].mxu0
        %v3212 = vadd.f32 0.0, %v3211
        %v3213 = vpop.f32.mrb[0].mxu0
        %3214 = vmatprep.mubr.f32.mxu0 0.0
        %3215 = vmatmul.mubr.f32.gmra.mrb[0].mxu0 %v2088
        %v3216 = vpop.f32.mrb[0].mxu0
        %v3217 = vadd.f32 0.0, %v3216
        %v3218 = vpop.f32.mrb[0].mxu0
        %3219 = vmatprep.mubr.f32.mxu0 0.0
        %3220 = vmatmul.mubr.f32.gmra.mrb[0].mxu0 %v2089
        %v3221 = vpop.f32.mrb[0].mxu0
        %v3222 = vadd.f32 0.0, %v3221
        %v3223 = vpop.f32.mrb[0].mxu0
        %3224 = vmatprep.mubr.f32.mxu0 0.0
        %3225 = vmatmul.mubr.f32.gmra.mrb[0].mxu0 %v2090
        %v3226 = vpop.f32.mrb[0].mxu0
        %v3227 = vadd.f32 0.0, %v3226
        %v3228 = vpop.f32.mrb[0].mxu0
        %3229 = vmatprep.mubr.f32.mxu0 0.0
        %3230 = vmatmul.mubr.f32.gmra.mrb[0].mxu0 %v2091
        %v3231 = vpop.f32.mrb[0].mxu0
        %v3232 = vadd.f32 0.0, %v3231
        %v3233 = vpop.f32.mrb[0].mxu0
        %3234 = vmatprep.mubr.f32.mxu0 0.0
        %3235 = vmatmul.mubr.f32.gmra.mrb[0].mxu0 %v2092
        %v3236 = vpop.f32.mrb[0].mxu0
        %v3237 = vadd.f32 0.0, %v3236
        %v3238 = vpop.f32.mrb[0].mxu0
        %3239 = vmatprep.mubr.f32.mxu0 0.0
        %3240 = vmatmul.mubr.f32.gmra.mrb[0].mxu0 %v2093
        %v3241 = vpop.f32.mrb[0].mxu0
        %v3242 = vadd.f32 0.0, %v3241
        %v3243 = vpop.f32.mrb[0].mxu0
        %3244 = vmatprep.mubr.f32.mxu0 0.0
        %3245 = vmatmul.mubr.f32.gmra.mrb[0].mxu0 %v2094
        %v3246 = vpop.f32.mrb[0].mxu0
        %v3247 = vadd.f32 0.0, %v3246
        %v3248 = vpop.f32.mrb[0].mxu0
        %3249 = vmatprep.mubr.f32.mxu0 0.0
        %3250 = vmatmul.mubr.f32.gmra.mrb[0].mxu0 %v2095
        %v3251 = vpop.f32.mrb[0].mxu0
        %v3252 = vadd.f32 0.0, %v3251
        %v3253 = vpop.f32.mrb[0].mxu0
        %3254 = vmatprep.mubr.f32.mxu0 0.0
        %3255 = vmatmul.mubr.f32.gmra.mrb[0].mxu0 %v2096
        %v3256 = vpop.f32.mrb[0].mxu0
        %v3257 = vadd.f32 0.0, %v3256
        %v3258 = vpop.f32.mrb[0].mxu0
        %3259 = vmatprep.mubr.f32.mxu0 0.0
        %3260 = vmatmul.mubr.f32.gmra.mrb[0].mxu0 %v2097
        %v3261 = vpop.f32.mrb[0].mxu0
        %v3262 = vadd.f32 0.0, %v3261
        %v3263 = vpop.f32.mrb[0].mxu0
        %3264 = vmatprep.mubr.f32.mxu0 0.0
        %3265 = vmatmul.mubr.f32.gmra.mrb[0].mxu0 %v2098
        %v3266 = vpop.f32.mrb[0].mxu0
        %v3267 = vadd.f32 0.0, %v3266
        %v3268 = vpop.f32.mrb[0].mxu0
        %3269 = vmatprep.mubr.f32.mxu0 0.0
        %3270 = vmatmul.mubr.f32.gmra.mrb[0].mxu0 %v2099
        %v3271 = vpop.f32.mrb[0].mxu0
        %v3272 = vadd.f32 0.0, %v3271
        %v3273 = vpop.f32.mrb[0].mxu0
        %3274 = vmatprep.mubr.f32.mxu0 0.0
        %3275 = vmatmul.mubr.f32.gmra.mrb[0].mxu0 %v2100
        %v3276 = vpop.f32.mrb[0].mxu0
        %v3277 = vadd.f32 0.0, %v3276
        %v3278 = vpop.f32.mrb[0].mxu0
        %3279 = vmatprep.mubr.f32.mxu0 0.0
        %3280 = vmatmul.mubr.f32.gmra.mrb[0].mxu0 %v2101
        %v3281 = vpop.f32.mrb[0].mxu0
        %v3282 = vadd.f32 0.0, %v3281
        %v3283 = vpop.f32.mrb[0].mxu0
        %3284 = vmatprep.mubr.f32.mxu0 0.0
        %3285 = vmatmul.mubr.f32.gmra.mrb[0].mxu0 %v2102
        %v3286 = vpop.f32.mrb[0].mxu0
        %v3287 = vadd.f32 0.0, %v3286
        %v3288 = vpop.f32.mrb[0].mxu0
        %3289 = vmatprep.mubr.f32.mxu0 0.0
        %3290 = vmatmul.mubr.f32.gmra.mrb[0].mxu0 %v2103
        %v3291 = vpop.f32.mrb[0].mxu0
        %v3292 = vadd.f32 0.0, %v3291
        %v3293 = vpop.f32.mrb[0].mxu0
        %3294 = vmatprep.mubr.f32.mxu0 0.0
        %3295 = vmatmul.mubr.f32.gmra.mrb[0].mxu0 %v2104
        %v3296 = vpop.f32.mrb[0].mxu0
        %v3297 = vadd.f32 0.0, %v3296
        %v3298 = vpop.f32.mrb[0].mxu0
        %3299 = vmatprep.mubr.f32.mxu0 0.0
        %3300 = vmatmul.mubr.f32.gmra.mrb[0].mxu0 %v2105
        %v3301 = vpop.f32.mrb[0].mxu0
        %v3302 = vadd.f32 0.0, %v3301
        %v3303 = vpop.f32.mrb[0].mxu0
        %3304 = vmatprep.mubr.f32.mxu0 0.0
        %3305 = vmatmul.mubr.f32.gmra.mrb[0].mxu0 %v2106
        %v3306 = vpop.f32.mrb[0].mxu0
        %v3307 = vadd.f32 0.0, %v3306
        %v3308 = vpop.f32.mrb[0].mxu0
        %3309 = vmatprep.mubr.f32.mxu0 0.0
        %3310 = vmatmul.mubr.f32.gmra.mrb[0].mxu0 %v2107
        %v3311 = vpop.f32.mrb[0].mxu0
        %v3312 = vadd.f32 0.0, %v3311
        %v3313 = vpop.f32.mrb[0].mxu0
        %3314 = vmatprep.mubr.f32.mxu0 0.0
        %3315 = vmatmul.mubr.f32.gmra.mrb[0].mxu0 %v2108
        %v3316 = vpop.f32.mrb[0].mxu0
        %v3317 = vadd.f32 0.0, %v3316
        %v3318 = vpop.f32.mrb[0].mxu0
        %3319 = vmatprep.mubr.f32.mxu0 0.0
        %3320 = vmatmul.mubr.f32.gmra.mrb[0].mxu0 %v2109
        %v3321 = vpop.f32.mrb[0].mxu0
        %v3322 = vadd.f32 0.0, %v3321
        %v3323 = vpop.f32.mrb[0].mxu0
        %3324 = vmatprep.mubr.f32.mxu0 0.0
        %3325 = vmatmul.mubr.f32.gmra.mrb[0].mxu0 %v2110
        %v3326 = vpop.f32.mrb[0].mxu0
        %v3327 = vadd.f32 0.0, %v3326
        %v3328 = vpop.f32.mrb[0].mxu0
        %3329 = vdwg.mxu0
        %v3330 = vadd.f32 %v2865, %v3012
        %v3331 = vadd.f32 %v2866, %v3017
        %v3332 = vadd.f32 %v2867, %v3022
        %v3333 = vadd.f32 %v2868, %v3027
        %v3334 = vadd.f32 %v2869, %v3032
        %v3335 = vadd.f32 %v2870, %v3037
        %v3336 = vadd.f32 %v2871, %v3042
        %v3337 = vadd.f32 %v2872, %v3047
        %v3338 = vadd.f32 %v2873, %v3052
        %v3339 = vadd.f32 %v2874, %v3057
        %v3340 = vadd.f32 %v2875, %v3062
        %v3341 = vadd.f32 %v2876, %v3067
        %v3342 = vadd.f32 %v2877, %v3072
        %v3343 = vadd.f32 %v2878, %v3077
        %v3344 = vadd.f32 %v2879, %v3082
        %v3345 = vadd.f32 %v2880, %v3087
        %v3346 = vadd.f32 %v2881, %v3092
        %v3347 = vadd.f32 %v2882, %v3097
        %v3348 = vadd.f32 %v2883, %v3102
        %v3349 = vadd.f32 %v2884, %v3107
        %v3350 = vadd.f32 %v2885, %v3112
        %v3351 = vadd.f32 %v2886, %v3117
        %v3352 = vadd.f32 %v2887, %v3122
        %v3353 = vadd.f32 %v2888, %v3127
        %v3354 = vadd.f32 %v2889, %v3132
        %v3355 = vadd.f32 %v2890, %v3137
        %v3356 = vadd.f32 %v2891, %v3142
        %v3357 = vadd.f32 %v2892, %v3147
        %v3358 = vadd.f32 %v2893, %v3152
        %v3359 = vadd.f32 %v2894, %v3157
        %v3360 = vadd.f32 %v2895, %v3162
        %v3361 = vadd.f32 %v2896, %v3167
        %v3362 = vadd.f32 %v2897, %v3172
        %v3363 = vadd.f32 %v2898, %v3177
        %v3364 = vadd.f32 %v2899, %v3182
        %v3365 = vadd.f32 %v2900, %v3187
        %v3366 = vadd.f32 %v2901, %v3192
        %v3367 = vadd.f32 %v2902, %v3197
        %v3368 = vadd.f32 %v2903, %v3202
        %v3369 = vadd.f32 %v2904, %v3207
        %v3370 = vadd.f32 %v2905, %v3212
        %v3371 = vadd.f32 %v2906, %v3217
        %v3372 = vadd.f32 %v2907, %v3222
        %v3373 = vadd.f32 %v2908, %v3227
        %v3374 = vadd.f32 %v2909, %v3232
        %v3375 = vadd.f32 %v2910, %v3237
        %v3376 = vadd.f32 %v2911, %v3242
        %v3377 = vadd.f32 %v2912, %v3247
        %v3378 = vadd.f32 %v2913, %v3252
        %v3379 = vadd.f32 %v2914, %v3257
        %v3380 = vadd.f32 %v2915, %v3262
        %v3381 = vadd.f32 %v2916, %v3267
        %v3382 = vadd.f32 %v2917, %v3272
        %v3383 = vadd.f32 %v2918, %v3277
        %v3384 = vadd.f32 %v2919, %v3282
        %v3385 = vadd.f32 %v2920, %v3287
        %v3386 = vadd.f32 %v2921, %v3292
        %v3387 = vadd.f32 %v2922, %v3297
        %v3388 = vadd.f32 %v2923, %v3302
        %v3389 = vadd.f32 %v2924, %v3307
        %v3390 = vadd.f32 %v2925, %v3312
        %v3391 = vadd.f32 %v2926, %v3317
        %v3392 = vadd.f32 %v2927, %v3322
        %v3393 = vadd.f32 %v2928, %v3327
        %v3394 = vld [vmem:[%s9] sm:$0x1]
        %v3396 = vlaneseq
        %v3397 = vshrl.u32 %v3396, 7
        %v3398 = vsub.s32 0, %v3397
        %v3399 = vrot.slane %v3394, %v3398
        %v3401 = vadd.f32 %v3330, %v3399
        %v3402 = vadd.f32 %v3331, %v3399
        %v3403 = vadd.f32 %v3332, %v3399
        %v3404 = vadd.f32 %v3333, %v3399
        %v3405 = vadd.f32 %v3334, %v3399
        %v3406 = vadd.f32 %v3335, %v3399
        %v3407 = vadd.f32 %v3336, %v3399
        %v3408 = vadd.f32 %v3337, %v3399
        %v3409 = vadd.f32 %v3338, %v3399
        %v3410 = vadd.f32 %v3339, %v3399
        %v3411 = vadd.f32 %v3340, %v3399
        %v3412 = vadd.f32 %v3341, %v3399
        %v3413 = vadd.f32 %v3342, %v3399
        %v3414 = vadd.f32 %v3343, %v3399
        %v3415 = vadd.f32 %v3344, %v3399
        %v3416 = vadd.f32 %v3345, %v3399
        %v3417 = vadd.f32 %v3346, %v3399
        %v3418 = vadd.f32 %v3347, %v3399
        %v3419 = vadd.f32 %v3348, %v3399
        %v3420 = vadd.f32 %v3349, %v3399
        %v3421 = vadd.f32 %v3350, %v3399
        %v3422 = vadd.f32 %v3351, %v3399
        %v3423 = vadd.f32 %v3352, %v3399
        %v3424 = vadd.f32 %v3353, %v3399
        %v3425 = vadd.f32 %v3354, %v3399
        %v3426 = vadd.f32 %v3355, %v3399
        %v3427 = vadd.f32 %v3356, %v3399
        %v3428 = vadd.f32 %v3357, %v3399
        %v3429 = vadd.f32 %v3358, %v3399
        %v3430 = vadd.f32 %v3359, %v3399
        %v3431 = vadd.f32 %v3360, %v3399
        %v3432 = vadd.f32 %v3361, %v3399
        %v3433 = vadd.f32 %v3362, %v3399
        %v3434 = vadd.f32 %v3363, %v3399
        %v3435 = vadd.f32 %v3364, %v3399
        %v3436 = vadd.f32 %v3365, %v3399
        %v3437 = vadd.f32 %v3366, %v3399
        %v3438 = vadd.f32 %v3367, %v3399
        %v3439 = vadd.f32 %v3368, %v3399
        %v3440 = vadd.f32 %v3369, %v3399
        %v3441 = vadd.f32 %v3370, %v3399
        %v3442 = vadd.f32 %v3371, %v3399
        %v3443 = vadd.f32 %v3372, %v3399
        %v3444 = vadd.f32 %v3373, %v3399
        %v3445 = vadd.f32 %v3374, %v3399
        %v3446 = vadd.f32 %v3375, %v3399
        %v3447 = vadd.f32 %v3376, %v3399
        %v3448 = vadd.f32 %v3377, %v3399
        %v3449 = vadd.f32 %v3378, %v3399
        %v3450 = vadd.f32 %v3379, %v3399
        %v3451 = vadd.f32 %v3380, %v3399
        %v3452 = vadd.f32 %v3381, %v3399
        %v3453 = vadd.f32 %v3382, %v3399
        %v3454 = vadd.f32 %v3383, %v3399
        %v3455 = vadd.f32 %v3384, %v3399
        %v3456 = vadd.f32 %v3385, %v3399
        %v3457 = vadd.f32 %v3386, %v3399
        %v3458 = vadd.f32 %v3387, %v3399
        %v3459 = vadd.f32 %v3388, %v3399
        %v3460 = vadd.f32 %v3389, %v3399
        %v3461 = vadd.f32 %v3390, %v3399
        %v3462 = vadd.f32 %v3391, %v3399
        %v3463 = vadd.f32 %v3392, %v3399
        %v3464 = vadd.f32 %v3393, %v3399
        %v3465 = vmax.f32 %v3401, 0.0
        %v3466 = vmax.f32 %v3402, 0.0
        %v3467 = vmax.f32 %v3403, 0.0
        %v3468 = vmax.f32 %v3404, 0.0
        %v3469 = vmax.f32 %v3405, 0.0
        %v3470 = vmax.f32 %v3406, 0.0
        %v3471 = vmax.f32 %v3407, 0.0
        %v3472 = vmax.f32 %v3408, 0.0
        %v3473 = vmax.f32 %v3409, 0.0
        %v3474 = vmax.f32 %v3410, 0.0
        %v3475 = vmax.f32 %v3411, 0.0
        %v3476 = vmax.f32 %v3412, 0.0
        %v3477 = vmax.f32 %v3413, 0.0
        %v3478 = vmax.f32 %v3414, 0.0
        %v3479 = vmax.f32 %v3415, 0.0
        %v3480 = vmax.f32 %v3416, 0.0
        %v3481 = vmax.f32 %v3417, 0.0
        %v3482 = vmax.f32 %v3418, 0.0
        %v3483 = vmax.f32 %v3419, 0.0
        %v3484 = vmax.f32 %v3420, 0.0
        %v3485 = vmax.f32 %v3421, 0.0
        %v3486 = vmax.f32 %v3422, 0.0
        %v3487 = vmax.f32 %v3423, 0.0
        %v3488 = vmax.f32 %v3424, 0.0
        %v3489 = vmax.f32 %v3425, 0.0
        %v3490 = vmax.f32 %v3426, 0.0
        %v3491 = vmax.f32 %v3427, 0.0
        %v3492 = vmax.f32 %v3428, 0.0
        %v3493 = vmax.f32 %v3429, 0.0
        %v3494 = vmax.f32 %v3430, 0.0
        %v3495 = vmax.f32 %v3431, 0.0
        %v3496 = vmax.f32 %v3432, 0.0
        %v3497 = vmax.f32 %v3433, 0.0
        %v3498 = vmax.f32 %v3434, 0.0
        %v3499 = vmax.f32 %v3435, 0.0
        %v3500 = vmax.f32 %v3436, 0.0
        %v3501 = vmax.f32 %v3437, 0.0
        %v3502 = vmax.f32 %v3438, 0.0
        %v3503 = vmax.f32 %v3439, 0.0
        %v3504 = vmax.f32 %v3440, 0.0
        %v3505 = vmax.f32 %v3441, 0.0
        %v3506 = vmax.f32 %v3442, 0.0
        %v3507 = vmax.f32 %v3443, 0.0
        %v3508 = vmax.f32 %v3444, 0.0
        %v3509 = vmax.f32 %v3445, 0.0
        %v3510 = vmax.f32 %v3446, 0.0
        %v3511 = vmax.f32 %v3447, 0.0
        %v3512 = vmax.f32 %v3448, 0.0
        %v3513 = vmax.f32 %v3449, 0.0
        %v3514 = vmax.f32 %v3450, 0.0
        %v3515 = vmax.f32 %v3451, 0.0
        %v3516 = vmax.f32 %v3452, 0.0
        %v3517 = vmax.f32 %v3453, 0.0
        %v3518 = vmax.f32 %v3454, 0.0
        %v3519 = vmax.f32 %v3455, 0.0
        %v3520 = vmax.f32 %v3456, 0.0
        %v3521 = vmax.f32 %v3457, 0.0
        %v3522 = vmax.f32 %v3458, 0.0
        %v3523 = vmax.f32 %v3459, 0.0
        %v3524 = vmax.f32 %v3460, 0.0
        %v3525 = vmax.f32 %v3461, 0.0
        %v3526 = vmax.f32 %v3462, 0.0
        %v3527 = vmax.f32 %v3463, 0.0
        %v3528 = vmax.f32 %v3464, 0.0
        %v3529 = vadd.f32 %v2047, %v3465
        %v3530 = vadd.f32 %v2048, %v3466
        %v3531 = vadd.f32 %v2049, %v3467
        %v3532 = vadd.f32 %v2050, %v3468
        %v3533 = vadd.f32 %v2051, %v3469
        %v3534 = vadd.f32 %v2052, %v3470
        %v3535 = vadd.f32 %v2053, %v3471
        %v3536 = vadd.f32 %v2054, %v3472
        %v3537 = vadd.f32 %v2055, %v3473
        %v3538 = vadd.f32 %v2056, %v3474
        %v3539 = vadd.f32 %v2057, %v3475
        %v3540 = vadd.f32 %v2058, %v3476
        %v3541 = vadd.f32 %v2059, %v3477
        %v3542 = vadd.f32 %v2060, %v3478
        %v3543 = vadd.f32 %v2061, %v3479
        %v3544 = vadd.f32 %v2062, %v3480
        %v3545 = vadd.f32 %v2063, %v3481
        %v3546 = vadd.f32 %v2064, %v3482
        %v3547 = vadd.f32 %v2065, %v3483
        %v3548 = vadd.f32 %v2066, %v3484
        %v3549 = vadd.f32 %v2067, %v3485
        %v3550 = vadd.f32 %v2068, %v3486
        %v3551 = vadd.f32 %v2069, %v3487
        %v3552 = vadd.f32 %v2070, %v3488
        %v3553 = vadd.f32 %v2071, %v3489
        %v3554 = vadd.f32 %v2072, %v3490
        %v3555 = vadd.f32 %v2073, %v3491
        %v3556 = vadd.f32 %v2074, %v3492
        %v3557 = vadd.f32 %v2075, %v3493
        %v3558 = vadd.f32 %v2076, %v3494
        %v3559 = vadd.f32 %v2077, %v3495
        %v3560 = vadd.f32 %v2078, %v3496
        %v3561 = vadd.f32 %v2079, %v3497
        %v3562 = vadd.f32 %v2080, %v3498
        %v3563 = vadd.f32 %v2081, %v3499
        %v3564 = vadd.f32 %v2082, %v3500
        %v3565 = vadd.f32 %v2083, %v3501
        %v3566 = vadd.f32 %v2084, %v3502
        %v3567 = vadd.f32 %v2085, %v3503
        %v3568 = vadd.f32 %v2086, %v3504
        %v3569 = vadd.f32 %v2087, %v3505
        %v3570 = vadd.f32 %v2088, %v3506
        %v3571 = vadd.f32 %v2089, %v3507
        %v3572 = vadd.f32 %v2090, %v3508
        %v3573 = vadd.f32 %v2091, %v3509
        %v3574 = vadd.f32 %v2092, %v3510
        %v3575 = vadd.f32 %v2093, %v3511
        %v3576 = vadd.f32 %v2094, %v3512
        %v3577 = vadd.f32 %v2095, %v3513
        %v3578 = vadd.f32 %v2096, %v3514
        %v3579 = vadd.f32 %v2097, %v3515
        %v3580 = vadd.f32 %v2098, %v3516
        %v3581 = vadd.f32 %v2099, %v3517
        %v3582 = vadd.f32 %v2100, %v3518
        %v3583 = vadd.f32 %v2101, %v3519
        %v3584 = vadd.f32 %v2102, %v3520
        %v3585 = vadd.f32 %v2103, %v3521
        %v3586 = vadd.f32 %v2104, %v3522
        %v3587 = vadd.f32 %v2105, %v3523
        %v3588 = vadd.f32 %v2106, %v3524
        %v3589 = vadd.f32 %v2107, %v3525
        %v3590 = vadd.f32 %v2108, %v3526
        %v3591 = vadd.f32 %v2109, %v3527
        %v3592 = vadd.f32 %v2110, %v3528
        %3593 = vst [vmem:[%s528] sm:$0xff] %v3529
        %3594 = vst [vmem:[%s528 + $0x8] sm:$0xff] %v3530
        %3595 = vst [vmem:[%s528 + $0x10] sm:$0xff] %v3531
        %3596 = vst [vmem:[%s528 + $0x18] sm:$0xff] %v3532
        %3597 = vst [vmem:[%s528 + $0x20] sm:$0xff] %v3533
        %3598 = vst [vmem:[%s528 + $0x28] sm:$0xff] %v3534
        %3599 = vst [vmem:[%s528 + $0x30] sm:$0xff] %v3535
        %3600 = vst [vmem:[%s528 + $0x38] sm:$0xff] %v3536
        %3601 = vst [vmem:[%s528 + $0x40] sm:$0xff] %v3537
        %3602 = vst [vmem:[%s528 + $0x48] sm:$0xff] %v3538
        %3603 = vst [vmem:[%s528 + $0x50] sm:$0xff] %v3539
        %3604 = vst [vmem:[%s528 + $0x58] sm:$0xff] %v3540
        %3605 = vst [vmem:[%s528 + $0x60] sm:$0xff] %v3541
        %3606 = vst [vmem:[%s528 + $0x68] sm:$0xff] %v3542
        %3607 = vst [vmem:[%s528 + $0x70] sm:$0xff] %v3543
        %3608 = vst [vmem:[%s528 + $0x78] sm:$0xff] %v3544
        %3609 = vst [vmem:[%s528 + $0x80] sm:$0xff] %v3545
        %3610 = vst [vmem:[%s528 + $0x88] sm:$0xff] %v3546
        %3611 = vst [vmem:[%s528 + $0x90] sm:$0xff] %v3547
        %3612 = vst [vmem:[%s528 + $0x98] sm:$0xff] %v3548
        %3613 = vst [vmem:[%s528 + $0xa0] sm:$0xff] %v3549
        %3614 = vst [vmem:[%s528 + $0xa8] sm:$0xff] %v3550
        %3615 = vst [vmem:[%s528 + $0xb0] sm:$0xff] %v3551
        %3616 = vst [vmem:[%s528 + $0xb8] sm:$0xff] %v3552
        %3617 = vst [vmem:[%s528 + $0xc0] sm:$0xff] %v3553
        %3618 = vst [vmem:[%s528 + $0xc8] sm:$0xff] %v3554
        %3619 = vst [vmem:[%s528 + $0xd0] sm:$0xff] %v3555
        %3620 = vst [vmem:[%s528 + $0xd8] sm:$0xff] %v3556
        %3621 = vst [vmem:[%s528 + $0xe0] sm:$0xff] %v3557
        %3622 = vst [vmem:[%s528 + $0xe8] sm:$0xff] %v3558
        %3623 = vst [vmem:[%s528 + $0xf0] sm:$0xff] %v3559
        %3624 = vst [vmem:[%s528 + $0xf8] sm:$0xff] %v3560
        %3625 = vst [vmem:[%s528 + $0x100] sm:$0xff] %v3561
        %3626 = vst [vmem:[%s528 + $0x108] sm:$0xff] %v3562
        %3627 = vst [vmem:[%s528 + $0x110] sm:$0xff] %v3563
        %3628 = vst [vmem:[%s528 + $0x118] sm:$0xff] %v3564
        %3629 = vst [vmem:[%s528 + $0x120] sm:$0xff] %v3565
        %3630 = vst [vmem:[%s528 + $0x128] sm:$0xff] %v3566
        %3631 = vst [vmem:[%s528 + $0x130] sm:$0xff] %v3567
        %3632 = vst [vmem:[%s528 + $0x138] sm:$0xff] %v3568
        %3633 = vst [vmem:[%s528 + $0x140] sm:$0xff] %v3569
        %3634 = vst [vmem:[%s528 + $0x148] sm:$0xff] %v3570
        %3635 = vst [vmem:[%s528 + $0x150] sm:$0xff] %v3571
        %3636 = vst [vmem:[%s528 + $0x158] sm:$0xff] %v3572
        %3637 = vst [vmem:[%s528 + $0x160] sm:$0xff] %v3573
        %3638 = vst [vmem:[%s528 + $0x168] sm:$0xff] %v3574
        %3639 = vst [vmem:[%s528 + $0x170] sm:$0xff] %v3575
        %3640 = vst [vmem:[%s528 + $0x178] sm:$0xff] %v3576
        %3641 = vst [vmem:[%s528 + $0x180] sm:$0xff] %v3577
        %3642 = vst [vmem:[%s528 + $0x188] sm:$0xff] %v3578
        %3643 = vst [vmem:[%s528 + $0x190] sm:$0xff] %v3579
        %3644 = vst [vmem:[%s528 + $0x198] sm:$0xff] %v3580
        %3645 = vst [vmem:[%s528 + $0x1a0] sm:$0xff] %v3581
        %3646 = vst [vmem:[%s528 + $0x1a8] sm:$0xff] %v3582
        %3647 = vst [vmem:[%s528 + $0x1b0] sm:$0xff] %v3583
        %3648 = vst [vmem:[%s528 + $0x1b8] sm:$0xff] %v3584
        %3649 = vst [vmem:[%s528 + $0x1c0] sm:$0xff] %v3585
        %3650 = vst [vmem:[%s528 + $0x1c8] sm:$0xff] %v3586
        %3651 = vst [vmem:[%s528 + $0x1d0] sm:$0xff] %v3587
        %3652 = vst [vmem:[%s528 + $0x1d8] sm:$0xff] %v3588
        %3653 = vst [vmem:[%s528 + $0x1e0] sm:$0xff] %v3589
        %3654 = vst [vmem:[%s528 + $0x1e8] sm:$0xff] %v3590
        %3655 = vst [vmem:[%s528 + $0x1f0] sm:$0xff] %v3591
        %3656 = vst [vmem:[%s528 + $0x1f8] sm:$0xff] %v3592
        %v3657 = vld [vmem:[#allocation5] sm:$0xff]
        %v3658 = vld [vmem:[#allocation5 + $0x8] sm:$0xff]
        %v3659 = vld [vmem:[#allocation5 + $0x10] sm:$0xff]
        %v3660 = vld [vmem:[#allocation5 + $0x18] sm:$0xff]
        %v3661 = vld [vmem:[#allocation5 + $0x20] sm:$0xff]
        %v3662 = vld [vmem:[#allocation5 + $0x28] sm:$0xff]
        %v3663 = vld [vmem:[#allocation5 + $0x30] sm:$0xff]
        %v3664 = vld [vmem:[#allocation5 + $0x38] sm:$0xff]
        %v3665 = vld [vmem:[#allocation5 + $0x40] sm:$0xff]
        %v3666 = vld [vmem:[#allocation5 + $0x48] sm:$0xff]
        %v3667 = vld [vmem:[#allocation5 + $0x50] sm:$0xff]
        %v3668 = vld [vmem:[#allocation5 + $0x58] sm:$0xff]
        %v3669 = vld [vmem:[#allocation5 + $0x60] sm:$0xff]
        %v3670 = vld [vmem:[#allocation5 + $0x68] sm:$0xff]
        %v3671 = vld [vmem:[#allocation5 + $0x70] sm:$0xff]
        %v3672 = vld [vmem:[#allocation5 + $0x78] sm:$0xff]
        %v3673 = vpack.c.bf16 %v3466, %v3465
        %v3674 = vpack.c.bf16 %v3468, %v3467
        %v3675 = vpack.c.bf16 %v3470, %v3469
        %v3676 = vpack.c.bf16 %v3472, %v3471
        %v3677 = vpack.c.bf16 %v3474, %v3473
        %v3678 = vpack.c.bf16 %v3476, %v3475
        %v3679 = vpack.c.bf16 %v3478, %v3477
        %v3680 = vpack.c.bf16 %v3480, %v3479
        %v3681 = vpack.c.bf16 %v3482, %v3481
        %v3682 = vpack.c.bf16 %v3484, %v3483
        %v3683 = vpack.c.bf16 %v3486, %v3485
        %v3684 = vpack.c.bf16 %v3488, %v3487
        %v3685 = vpack.c.bf16 %v3490, %v3489
        %v3686 = vpack.c.bf16 %v3492, %v3491
        %v3687 = vpack.c.bf16 %v3494, %v3493
        %v3688 = vpack.c.bf16 %v3496, %v3495
        %v3689 = vpack.c.bf16 %v3498, %v3497
        %v3690 = vpack.c.bf16 %v3500, %v3499
        %v3691 = vpack.c.bf16 %v3502, %v3501
        %v3692 = vpack.c.bf16 %v3504, %v3503
        %v3693 = vpack.c.bf16 %v3506, %v3505
        %v3694 = vpack.c.bf16 %v3508, %v3507
        %v3695 = vpack.c.bf16 %v3510, %v3509
        %v3696 = vpack.c.bf16 %v3512, %v3511
        %v3697 = vpack.c.bf16 %v3514, %v3513
        %v3698 = vpack.c.bf16 %v3516, %v3515
        %v3699 = vpack.c.bf16 %v3518, %v3517
        %v3700 = vpack.c.bf16 %v3520, %v3519
        %v3701 = vpack.c.bf16 %v3522, %v3521
        %v3702 = vpack.c.bf16 %v3524, %v3523
        %v3703 = vpack.c.bf16 %v3526, %v3525
        %v3704 = vpack.c.bf16 %v3528, %v3527
        %3705 = vmatprep.subr.bf16.mxu0 0
        %3706 = vmatpush1.bf16.msra.mxu0 %v3673
        %3707 = vmatprep.subr.bf16.mxu0 0
        %3708 = vmatpush1.bf16.msra.mxu0 %v3674
        %3709 = vmatprep.subr.bf16.mxu0 0
        %3710 = vmatpush1.bf16.msra.mxu0 %v3675
        %3711 = vmatprep.subr.bf16.mxu0 0
        %3712 = vmatpush1.bf16.msra.mxu0 %v3676
        %3713 = vmatprep.subr.bf16.mxu0 0
        %3714 = vmatpush1.bf16.msra.mxu0 %v3677
        %3715 = vmatprep.subr.bf16.mxu0 0
        %3716 = vmatpush1.bf16.msra.mxu0 %v3678
        %3717 = vmatprep.subr.bf16.mxu0 0
        %3718 = vmatpush1.bf16.msra.mxu0 %v3679
        %3719 = vmatprep.subr.bf16.mxu0 0
        %3720 = vmatpush1.bf16.msra.mxu0 %v3680
        %3721 = vmatprep.subr.bf16.mxu0 0
        %3722 = vmatpush1.bf16.msra.mxu0 %v3681
        %3723 = vmatprep.subr.bf16.mxu0 0
        %3724 = vmatpush1.bf16.msra.mxu0 %v3682
        %3725 = vmatprep.subr.bf16.mxu0 0
        %3726 = vmatpush1.bf16.msra.mxu0 %v3683
        %3727 = vmatprep.subr.bf16.mxu0 0
        %3728 = vmatpush1.bf16.msra.mxu0 %v3684
        %3729 = vmatprep.subr.bf16.mxu0 0
        %3730 = vmatpush1.bf16.msra.mxu0 %v3685
        %3731 = vmatprep.subr.bf16.mxu0 0
        %3732 = vmatpush1.bf16.msra.mxu0 %v3686
        %3733 = vmatprep.subr.bf16.mxu0 0
        %3734 = vmatpush1.bf16.msra.mxu0 %v3687
        %3735 = vmatprep.subr.bf16.mxu0 0
        %3736 = vmatpush1.bf16.msra.mxu0 %v3688
        %3737 = vmatprep.mubr.bf16.mxu0 %v1583
        %3738 = vmatmul.mubr.bf16.gmra.mrb[0].mxu0 %v1582
        %v3739 = vpop.f32.mrb[0].mxu0
        %v3740 = vadd.f32 0.0, %v3739
        %v3741 = vpop.f32.mrb[0].mxu0
        %v3742 = vpop.f32.mrb[0].mxu0
        %v3743 = vadd.f32 0.0, %v3742
        %v3744 = vpop.f32.mrb[0].mxu0
        %3745 = vmatprep.mubr.bf16.mxu0 %v1587
        %3746 = vmatmul.mubr.bf16.gmra.mrb[0].mxu0 %v1586
        %v3747 = vpop.f32.mrb[0].mxu0
        %v3748 = vadd.f32 0.0, %v3747
        %v3749 = vpop.f32.mrb[0].mxu0
        %v3750 = vpop.f32.mrb[0].mxu0
        %v3751 = vadd.f32 0.0, %v3750
        %v3752 = vpop.f32.mrb[0].mxu0
        %3753 = vmatprep.mubr.bf16.mxu0 %v1591
        %3754 = vmatmul.mubr.bf16.gmra.mrb[0].mxu0 %v1590
        %v3755 = vpop.f32.mrb[0].mxu0
        %v3756 = vadd.f32 0.0, %v3755
        %v3757 = vpop.f32.mrb[0].mxu0
        %v3758 = vpop.f32.mrb[0].mxu0
        %v3759 = vadd.f32 0.0, %v3758
        %v3760 = vpop.f32.mrb[0].mxu0
        %3761 = vmatprep.mubr.bf16.mxu0 %v1595
        %3762 = vmatmul.mubr.bf16.gmra.mrb[0].mxu0 %v1594
        %v3763 = vpop.f32.mrb[0].mxu0
        %v3764 = vadd.f32 0.0, %v3763
        %v3765 = vpop.f32.mrb[0].mxu0
        %v3766 = vpop.f32.mrb[0].mxu0
        %v3767 = vadd.f32 0.0, %v3766
        %v3768 = vpop.f32.mrb[0].mxu0
        %3769 = vmatprep.mubr.bf16.mxu0 %v1599
        %3770 = vmatmul.mubr.bf16.gmra.mrb[0].mxu0 %v1598
        %v3771 = vpop.f32.mrb[0].mxu0
        %v3772 = vadd.f32 0.0, %v3771
        %v3773 = vpop.f32.mrb[0].mxu0
        %v3774 = vpop.f32.mrb[0].mxu0
        %v3775 = vadd.f32 0.0, %v3774
        %v3776 = vpop.f32.mrb[0].mxu0
        %3777 = vmatprep.mubr.bf16.mxu0 %v1603
        %3778 = vmatmul.mubr.bf16.gmra.mrb[0].mxu0 %v1602
        %v3779 = vpop.f32.mrb[0].mxu0
        %v3780 = vadd.f32 0.0, %v3779
        %v3781 = vpop.f32.mrb[0].mxu0
        %v3782 = vpop.f32.mrb[0].mxu0
        %v3783 = vadd.f32 0.0, %v3782
        %v3784 = vpop.f32.mrb[0].mxu0
        %3785 = vmatprep.mubr.bf16.mxu0 %v1607
        %3786 = vmatmul.mubr.bf16.gmra.mrb[0].mxu0 %v1606
        %v3787 = vpop.f32.mrb[0].mxu0
        %v3788 = vadd.f32 0.0, %v3787
        %v3789 = vpop.f32.mrb[0].mxu0
        %v3790 = vpop.f32.mrb[0].mxu0
        %v3791 = vadd.f32 0.0, %v3790
        %v3792 = vpop.f32.mrb[0].mxu0
        %3793 = vmatprep.mubr.bf16.mxu0 %v1611
        %3794 = vmatmul.mubr.bf16.gmra.mrb[0].mxu0 %v1610
        %v3795 = vpop.f32.mrb[0].mxu0
        %v3796 = vadd.f32 0.0, %v3795
        %v3797 = vpop.f32.mrb[0].mxu0
        %v3798 = vpop.f32.mrb[0].mxu0
        %v3799 = vadd.f32 0.0, %v3798
        %v3800 = vpop.f32.mrb[0].mxu0
        %3801 = vdwg.mxu0
        %3802 = vmatprep.subr.bf16.mxu0 0
        %3803 = vmatpush1.bf16.msra.mxu0 %v3689
        %3804 = vmatprep.subr.bf16.mxu0 0
        %3805 = vmatpush1.bf16.msra.mxu0 %v3690
        %3806 = vmatprep.subr.bf16.mxu0 0
        %3807 = vmatpush1.bf16.msra.mxu0 %v3691
        %3808 = vmatprep.subr.bf16.mxu0 0
        %3809 = vmatpush1.bf16.msra.mxu0 %v3692
        %3810 = vmatprep.subr.bf16.mxu0 0
        %3811 = vmatpush1.bf16.msra.mxu0 %v3693
        %3812 = vmatprep.subr.bf16.mxu0 0
        %3813 = vmatpush1.bf16.msra.mxu0 %v3694
        %3814 = vmatprep.subr.bf16.mxu0 0
        %3815 = vmatpush1.bf16.msra.mxu0 %v3695
        %3816 = vmatprep.subr.bf16.mxu0 0
        %3817 = vmatpush1.bf16.msra.mxu0 %v3696
        %3818 = vmatprep.subr.bf16.mxu0 0
        %3819 = vmatpush1.bf16.msra.mxu0 %v3697
        %3820 = vmatprep.subr.bf16.mxu0 0
        %3821 = vmatpush1.bf16.msra.mxu0 %v3698
        %3822 = vmatprep.subr.bf16.mxu0 0
        %3823 = vmatpush1.bf16.msra.mxu0 %v3699
        %3824 = vmatprep.subr.bf16.mxu0 0
        %3825 = vmatpush1.bf16.msra.mxu0 %v3700
        %3826 = vmatprep.subr.bf16.mxu0 0
        %3827 = vmatpush1.bf16.msra.mxu0 %v3701
        %3828 = vmatprep.subr.bf16.mxu0 0
        %3829 = vmatpush1.bf16.msra.mxu0 %v3702
        %3830 = vmatprep.subr.bf16.mxu0 0
        %3831 = vmatpush1.bf16.msra.mxu0 %v3703
        %3832 = vmatprep.subr.bf16.mxu0 0
        %3833 = vmatpush1.bf16.msra.mxu0 %v3704
        %3834 = vmatprep.mubr.bf16.mxu0 %v1585
        %3835 = vmatmul.mubr.bf16.gmra.mrb[0].mxu0 %v1584
        %v3836 = vpop.f32.mrb[0].mxu0
        %v3837 = vadd.f32 %v3740, %v3836
        %v3838 = vpop.f32.mrb[0].mxu0
        %v3839 = vpop.f32.mrb[0].mxu0
        %v3840 = vadd.f32 %v3743, %v3839
        %v3841 = vpop.f32.mrb[0].mxu0
        %3842 = vmatprep.mubr.bf16.mxu0 %v1589
        %3843 = vmatmul.mubr.bf16.gmra.mrb[0].mxu0 %v1588
        %v3844 = vpop.f32.mrb[0].mxu0
        %v3845 = vadd.f32 %v3748, %v3844
        %v3846 = vpop.f32.mrb[0].mxu0
        %v3847 = vpop.f32.mrb[0].mxu0
        %v3848 = vadd.f32 %v3751, %v3847
        %v3849 = vpop.f32.mrb[0].mxu0
        %3850 = vmatprep.mubr.bf16.mxu0 %v1593
        %3851 = vmatmul.mubr.bf16.gmra.mrb[0].mxu0 %v1592
        %v3852 = vpop.f32.mrb[0].mxu0
        %v3853 = vadd.f32 %v3756, %v3852
        %v3854 = vpop.f32.mrb[0].mxu0
        %v3855 = vpop.f32.mrb[0].mxu0
        %v3856 = vadd.f32 %v3759, %v3855
        %v3857 = vpop.f32.mrb[0].mxu0
        %3858 = vmatprep.mubr.bf16.mxu0 %v1597
        %3859 = vmatmul.mubr.bf16.gmra.mrb[0].mxu0 %v1596
        %v3860 = vpop.f32.mrb[0].mxu0
        %v3861 = vadd.f32 %v3764, %v3860
        %v3862 = vpop.f32.mrb[0].mxu0
        %v3863 = vpop.f32.mrb[0].mxu0
        %v3864 = vadd.f32 %v3767, %v3863
        %v3865 = vpop.f32.mrb[0].mxu0
        %3866 = vmatprep.mubr.bf16.mxu0 %v1601
        %3867 = vmatmul.mubr.bf16.gmra.mrb[0].mxu0 %v1600
        %v3868 = vpop.f32.mrb[0].mxu0
        %v3869 = vadd.f32 %v3772, %v3868
        %v3870 = vpop.f32.mrb[0].mxu0
        %v3871 = vpop.f32.mrb[0].mxu0
        %v3872 = vadd.f32 %v3775, %v3871
        %v3873 = vpop.f32.mrb[0].mxu0
        %3874 = vmatprep.mubr.bf16.mxu0 %v1605
        %3875 = vmatmul.mubr.bf16.gmra.mrb[0].mxu0 %v1604
        %v3876 = vpop.f32.mrb[0].mxu0
        %v3877 = vadd.f32 %v3780, %v3876
        %v3878 = vpop.f32.mrb[0].mxu0
        %v3879 = vpop.f32.mrb[0].mxu0
        %v3880 = vadd.f32 %v3783, %v3879
        %v3881 = vpop.f32.mrb[0].mxu0
        %3882 = vmatprep.mubr.bf16.mxu0 %v1609
        %3883 = vmatmul.mubr.bf16.gmra.mrb[0].mxu0 %v1608
        %v3884 = vpop.f32.mrb[0].mxu0
        %v3885 = vadd.f32 %v3788, %v3884
        %v3886 = vpop.f32.mrb[0].mxu0
        %v3887 = vpop.f32.mrb[0].mxu0
        %v3888 = vadd.f32 %v3791, %v3887
        %v3889 = vpop.f32.mrb[0].mxu0
        %3890 = vmatprep.mubr.bf16.mxu0 %v1613
        %3891 = vmatmul.mubr.bf16.gmra.mrb[0].mxu0 %v1612
        %v3892 = vpop.f32.mrb[0].mxu0
        %v3893 = vadd.f32 %v3796, %v3892
        %v3894 = vpop.f32.mrb[0].mxu0
        %v3895 = vpop.f32.mrb[0].mxu0
        %v3896 = vadd.f32 %v3799, %v3895
        %v3897 = vpop.f32.mrb[0].mxu0
        %3898 = vdwg.mxu0
        %v3899 = vadd.f32 %v3657, %v3837
        %v3900 = vadd.f32 %v3658, %v3840
        %v3901 = vadd.f32 %v3659, %v3845
        %v3902 = vadd.f32 %v3660, %v3848
        %v3903 = vadd.f32 %v3661, %v3853
        %v3904 = vadd.f32 %v3662, %v3856
        %v3905 = vadd.f32 %v3663, %v3861
        %v3906 = vadd.f32 %v3664, %v3864
        %v3907 = vadd.f32 %v3665, %v3869
        %v3908 = vadd.f32 %v3666, %v3872
        %v3909 = vadd.f32 %v3667, %v3877
        %v3910 = vadd.f32 %v3668, %v3880
        %v3911 = vadd.f32 %v3669, %v3885
        %v3912 = vadd.f32 %v3670, %v3888
        %v3913 = vadd.f32 %v3671, %v3893
        %v3914 = vadd.f32 %v3672, %v3896
        %3915 = vst [vmem:[#allocation5] sm:$0xff] %v3899
        %3916 = vst [vmem:[#allocation5 + $0x8] sm:$0xff] %v3900
        %3917 = vst [vmem:[#allocation5 + $0x10] sm:$0xff] %v3901
        %3918 = vst [vmem:[#allocation5 + $0x18] sm:$0xff] %v3902
        %3919 = vst [vmem:[#allocation5 + $0x20] sm:$0xff] %v3903
        %3920 = vst [vmem:[#allocation5 + $0x28] sm:$0xff] %v3904
        %3921 = vst [vmem:[#allocation5 + $0x30] sm:$0xff] %v3905
        %3922 = vst [vmem:[#allocation5 + $0x38] sm:$0xff] %v3906
        %3923 = vst [vmem:[#allocation5 + $0x40] sm:$0xff] %v3907
        %3924 = vst [vmem:[#allocation5 + $0x48] sm:$0xff] %v3908
        %3925 = vst [vmem:[#allocation5 + $0x50] sm:$0xff] %v3909
        %3926 = vst [vmem:[#allocation5 + $0x58] sm:$0xff] %v3910
        %3927 = vst [vmem:[#allocation5 + $0x60] sm:$0xff] %v3911
        %3928 = vst [vmem:[#allocation5 + $0x68] sm:$0xff] %v3912
        %3929 = vst [vmem:[#allocation5 + $0x70] sm:$0xff] %v3913
        %3930 = vst [vmem:[#allocation5 + $0x78] sm:$0xff] %v3914
        %p3931 = scmp.eq.s32.totalorder %s33, 1
        // Predicated region
        $region81: #{tpu_custom_call.1} parent=71 // pred_check
          %p3932 = pneg %p3931
        $region82: #{tpu_custom_call.1} parent=71 // pred_check_branch
          %3934 = sbr.rel (%p3932) target = $region84
        $region83: #{tpu_custom_call.1} parent=71 // pred_region
          %v3935 = vld [vmem:[#allocation4] sm:$0xff]
          %v3936 = vld [vmem:[#allocation4 + $0x8] sm:$0xff]
          %v3937 = vld [vmem:[#allocation4 + $0x10] sm:$0xff]
          %v3938 = vld [vmem:[#allocation4 + $0x18] sm:$0xff]
          %v3939 = vld [vmem:[#allocation4 + $0x20] sm:$0xff]
          %v3940 = vld [vmem:[#allocation4 + $0x28] sm:$0xff]
          %v3941 = vld [vmem:[#allocation4 + $0x30] sm:$0xff]
          %v3942 = vld [vmem:[#allocation4 + $0x38] sm:$0xff]
          %v3943 = vld [vmem:[#allocation4 + $0x40] sm:$0xff]
          %v3944 = vld [vmem:[#allocation4 + $0x48] sm:$0xff]
          %v3945 = vld [vmem:[#allocation4 + $0x50] sm:$0xff]
          %v3946 = vld [vmem:[#allocation4 + $0x58] sm:$0xff]
          %v3947 = vld [vmem:[#allocation4 + $0x60] sm:$0xff]
          %v3948 = vld [vmem:[#allocation4 + $0x68] sm:$0xff]
          %v3949 = vld [vmem:[#allocation4 + $0x70] sm:$0xff]
          %v3950 = vld [vmem:[#allocation4 + $0x78] sm:$0xff]
          %v3951 = vld [vmem:[#allocation5] sm:$0xff]
          %v3952 = vld [vmem:[#allocation5 + $0x8] sm:$0xff]
          %v3953 = vld [vmem:[#allocation5 + $0x10] sm:$0xff]
          %v3954 = vld [vmem:[#allocation5 + $0x18] sm:$0xff]
          %v3955 = vld [vmem:[#allocation5 + $0x20] sm:$0xff]
          %v3956 = vld [vmem:[#allocation5 + $0x28] sm:$0xff]
          %v3957 = vld [vmem:[#allocation5 + $0x30] sm:$0xff]
          %v3958 = vld [vmem:[#allocation5 + $0x38] sm:$0xff]
          %v3959 = vld [vmem:[#allocation5 + $0x40] sm:$0xff]
          %v3960 = vld [vmem:[#allocation5 + $0x48] sm:$0xff]
          %v3961 = vld [vmem:[#allocation5 + $0x50] sm:$0xff]
          %v3962 = vld [vmem:[#allocation5 + $0x58] sm:$0xff]
          %v3963 = vld [vmem:[#allocation5 + $0x60] sm:$0xff]
          %v3964 = vld [vmem:[#allocation5 + $0x68] sm:$0xff]
          %v3965 = vld [vmem:[#allocation5 + $0x70] sm:$0xff]
          %v3966 = vld [vmem:[#allocation5 + $0x78] sm:$0xff]
          %v3967 = vld [vmem:[%s11] sm:$0xff]
          %v3968 = vld [vmem:[%s11 + $0x8] sm:$0xff]
          %v3969 = vld [vmem:[%s11 + $0x10] sm:$0xff]
          %v3970 = vld [vmem:[%s11 + $0x18] sm:$0xff]
          %v3971 = vld [vmem:[%s11 + $0x20] sm:$0xff]
          %v3972 = vld [vmem:[%s11 + $0x28] sm:$0xff]
          %v3973 = vld [vmem:[%s11 + $0x30] sm:$0xff]
          %v3974 = vld [vmem:[%s11 + $0x38] sm:$0xff]
          %v3975 = vld [vmem:[%s11 + $0x40] sm:$0xff]
          %v3976 = vld [vmem:[%s11 + $0x48] sm:$0xff]
          %v3977 = vld [vmem:[%s11 + $0x50] sm:$0xff]
          %v3978 = vld [vmem:[%s11 + $0x58] sm:$0xff]
          %v3979 = vld [vmem:[%s11 + $0x60] sm:$0xff]
          %v3980 = vld [vmem:[%s11 + $0x68] sm:$0xff]
          %v3981 = vld [vmem:[%s11 + $0x70] sm:$0xff]
          %v3982 = vld [vmem:[%s11 + $0x78] sm:$0xff]
          %3983 = vmatprep.subr.mxu0 0.0
          %3984 = vmatpush1.msra.mxu0 %v3967
          %3985 = vmatprep.subr.mxu0 0.0
          %3986 = vmatpush1.msra.mxu0 %v3968
          %3987 = vmatprep.subr.mxu0 0.0
          %3988 = vmatpush1.msra.mxu0 %v3969
          %3989 = vmatprep.subr.mxu0 0.0
          %3990 = vmatpush1.msra.mxu0 %v3970
          %3991 = vmatprep.subr.mxu0 0.0
          %3992 = vmatpush1.msra.mxu0 %v3971
          %3993 = vmatprep.subr.mxu0 0.0
          %3994 = vmatpush1.msra.mxu0 %v3972
          %3995 = vmatprep.subr.mxu0 0.0
          %3996 = vmatpush1.msra.mxu0 %v3973
          %3997 = vmatprep.subr.mxu0 0.0
          %3998 = vmatpush1.msra.mxu0 %v3974
          %3999 = vmatprep.subr.mxu0 0.0
          %4000 = vmatpush1.msra.mxu0 %v3975
          %4001 = vmatprep.subr.mxu0 0.0
          %4002 = vmatpush1.msra.mxu0 %v3976
          %4003 = vmatprep.subr.mxu0 0.0
          %4004 = vmatpush1.msra.mxu0 %v3977
          %4005 = vmatprep.subr.mxu0 0.0
          %4006 = vmatpush1.msra.mxu0 %v3978
          %4007 = vmatprep.subr.mxu0 0.0
          %4008 = vmatpush1.msra.mxu0 %v3979
          %4009 = vmatprep.subr.mxu0 0.0
          %4010 = vmatpush1.msra.mxu0 %v3980
          %4011 = vmatprep.subr.mxu0 0.0
          %4012 = vmatpush1.msra.mxu0 %v3981
          %4013 = vmatprep.subr.mxu0 0.0
          %4014 = vmatpush1.msra.mxu0 %v3982
          %4015 = vmatprep.subr.mxu0 0.0
          %4016 = vmatpush1.msra.mxu0 0.0
          %4017 = vmatprep.subr.mxu0 0.0
          %4018 = vmatpush1.msra.mxu0 0.0
          %4019 = vmatprep.subr.mxu0 0.0
          %4020 = vmatpush1.msra.mxu0 0.0
          %4021 = vmatprep.subr.mxu0 0.0
          %4022 = vmatpush1.msra.mxu0 0.0
          %4023 = vmatprep.subr.mxu0 0.0
          %4024 = vmatpush1.msra.mxu0 0.0
          %4025 = vmatprep.subr.mxu0 0.0
          %4026 = vmatpush1.msra.mxu0 0.0
          %4027 = vmatprep.subr.mxu0 0.0
          %4028 = vmatpush1.msra.mxu0 0.0
          %4029 = vmatprep.subr.mxu0 0.0
          %4030 = vmatpush1.msra.mxu0 0.0
          %4031 = vmatprep.subr.mxu0 0.0
          %4032 = vmatpush1.msra.mxu0 0.0
          %4033 = vmatprep.subr.mxu0 0.0
          %4034 = vmatpush1.msra.mxu0 0.0
          %4035 = vmatprep.subr.mxu0 0.0
          %4036 = vmatpush1.msra.mxu0 0.0
          %4037 = vmatprep.subr.mxu0 0.0
          %4038 = vmatpush1.msra.mxu0 0.0
          %4039 = vmatprep.subr.mxu0 0.0
          %4040 = vmatpush1.msra.mxu0 0.0
          %4041 = vmatprep.subr.mxu0 0.0
          %4042 = vmatpush1.msra.mxu0 0.0
          %4043 = vmatprep.subr.mxu0 0.0
          %4044 = vmatpush1.msra.mxu0 0.0
          %4045 = vmatprep.subr.mxu0 0.0
          %4046 = vmatpush1.msra.mxu0 0.0
          %4047 = vmatprep.mubr.f32.mxu0 0.0
          %4048 = vmatmul.mubr.f32.gmra.mrb[0].mxu0 %v3951
          %v4049 = vpop.f32.mrb[0].mxu0
          %v4050 = vadd.f32 0.0, %v4049
          %v4051 = vpop.f32.mrb[0].mxu0
          %4052 = vmatprep.mubr.f32.mxu0 0.0
          %4053 = vmatmul.mubr.f32.gmra.mrb[0].mxu0 %v3952
          %v4054 = vpop.f32.mrb[0].mxu0
          %v4055 = vadd.f32 0.0, %v4054
          %v4056 = vpop.f32.mrb[0].mxu0
          %4057 = vmatprep.mubr.f32.mxu0 0.0
          %4058 = vmatmul.mubr.f32.gmra.mrb[0].mxu0 %v3953
          %v4059 = vpop.f32.mrb[0].mxu0
          %v4060 = vadd.f32 0.0, %v4059
          %v4061 = vpop.f32.mrb[0].mxu0
          %4062 = vmatprep.mubr.f32.mxu0 0.0
          %4063 = vmatmul.mubr.f32.gmra.mrb[0].mxu0 %v3954
          %v4064 = vpop.f32.mrb[0].mxu0
          %v4065 = vadd.f32 0.0, %v4064
          %v4066 = vpop.f32.mrb[0].mxu0
          %4067 = vmatprep.mubr.f32.mxu0 0.0
          %4068 = vmatmul.mubr.f32.gmra.mrb[0].mxu0 %v3955
          %v4069 = vpop.f32.mrb[0].mxu0
          %v4070 = vadd.f32 0.0, %v4069
          %v4071 = vpop.f32.mrb[0].mxu0
          %4072 = vmatprep.mubr.f32.mxu0 0.0
          %4073 = vmatmul.mubr.f32.gmra.mrb[0].mxu0 %v3956
          %v4074 = vpop.f32.mrb[0].mxu0
          %v4075 = vadd.f32 0.0, %v4074
          %v4076 = vpop.f32.mrb[0].mxu0
          %4077 = vmatprep.mubr.f32.mxu0 0.0
          %4078 = vmatmul.mubr.f32.gmra.mrb[0].mxu0 %v3957
          %v4079 = vpop.f32.mrb[0].mxu0
          %v4080 = vadd.f32 0.0, %v4079
          %v4081 = vpop.f32.mrb[0].mxu0
          %4082 = vmatprep.mubr.f32.mxu0 0.0
          %4083 = vmatmul.mubr.f32.gmra.mrb[0].mxu0 %v3958
          %v4084 = vpop.f32.mrb[0].mxu0
          %v4085 = vadd.f32 0.0, %v4084
          %v4086 = vpop.f32.mrb[0].mxu0
          %4087 = vmatprep.mubr.f32.mxu0 0.0
          %4088 = vmatmul.mubr.f32.gmra.mrb[0].mxu0 %v3959
          %v4089 = vpop.f32.mrb[0].mxu0
          %v4090 = vadd.f32 0.0, %v4089
          %v4091 = vpop.f32.mrb[0].mxu0
          %4092 = vmatprep.mubr.f32.mxu0 0.0
          %4093 = vmatmul.mubr.f32.gmra.mrb[0].mxu0 %v3960
          %v4094 = vpop.f32.mrb[0].mxu0
          %v4095 = vadd.f32 0.0, %v4094
          %v4096 = vpop.f32.mrb[0].mxu0
          %4097 = vmatprep.mubr.f32.mxu0 0.0
          %4098 = vmatmul.mubr.f32.gmra.mrb[0].mxu0 %v3961
          %v4099 = vpop.f32.mrb[0].mxu0
          %v4100 = vadd.f32 0.0, %v4099
          %v4101 = vpop.f32.mrb[0].mxu0
          %4102 = vmatprep.mubr.f32.mxu0 0.0
          %4103 = vmatmul.mubr.f32.gmra.mrb[0].mxu0 %v3962
          %v4104 = vpop.f32.mrb[0].mxu0
          %v4105 = vadd.f32 0.0, %v4104
          %v4106 = vpop.f32.mrb[0].mxu0
          %4107 = vmatprep.mubr.f32.mxu0 0.0
          %4108 = vmatmul.mubr.f32.gmra.mrb[0].mxu0 %v3963
          %v4109 = vpop.f32.mrb[0].mxu0
          %v4110 = vadd.f32 0.0, %v4109
          %v4111 = vpop.f32.mrb[0].mxu0
          %4112 = vmatprep.mubr.f32.mxu0 0.0
          %4113 = vmatmul.mubr.f32.gmra.mrb[0].mxu0 %v3964
          %v4114 = vpop.f32.mrb[0].mxu0
          %v4115 = vadd.f32 0.0, %v4114
          %v4116 = vpop.f32.mrb[0].mxu0
          %4117 = vmatprep.mubr.f32.mxu0 0.0
          %4118 = vmatmul.mubr.f32.gmra.mrb[0].mxu0 %v3965
          %v4119 = vpop.f32.mrb[0].mxu0
          %v4120 = vadd.f32 0.0, %v4119
          %v4121 = vpop.f32.mrb[0].mxu0
          %4122 = vmatprep.mubr.f32.mxu0 0.0
          %4123 = vmatmul.mubr.f32.gmra.mrb[0].mxu0 %v3966
          %v4124 = vpop.f32.mrb[0].mxu0
          %v4125 = vadd.f32 0.0, %v4124
          %v4126 = vpop.f32.mrb[0].mxu0
          %4127 = vdwg.mxu0
          %v4128 = vadd.f32 %v3935, %v4050
          %v4129 = vadd.f32 %v3936, %v4055
          %v4130 = vadd.f32 %v3937, %v4060
          %v4131 = vadd.f32 %v3938, %v4065
          %v4132 = vadd.f32 %v3939, %v4070
          %v4133 = vadd.f32 %v3940, %v4075
          %v4134 = vadd.f32 %v3941, %v4080
          %v4135 = vadd.f32 %v3942, %v4085
          %v4136 = vadd.f32 %v3943, %v4090
          %v4137 = vadd.f32 %v3944, %v4095
          %v4138 = vadd.f32 %v3945, %v4100
          %v4139 = vadd.f32 %v3946, %v4105
          %v4140 = vadd.f32 %v3947, %v4110
          %v4141 = vadd.f32 %v3948, %v4115
          %v4142 = vadd.f32 %v3949, %v4120
          %v4143 = vadd.f32 %v3950, %v4125
          %v4144 = vld [vmem:[%s12] sm:$0x1]
          %v4146 = vlaneseq
          %v4147 = vshrl.u32 %v4146, 7
          %v4148 = vsub.s32 0, %v4147
          %v4149 = vrot.slane %v4144, %v4148
          %v4151 = vadd.f32 %v4128, %v4149
          %v4152 = vadd.f32 %v4129, %v4149
          %v4153 = vadd.f32 %v4130, %v4149
          %v4154 = vadd.f32 %v4131, %v4149
          %v4155 = vadd.f32 %v4132, %v4149
          %v4156 = vadd.f32 %v4133, %v4149
          %v4157 = vadd.f32 %v4134, %v4149
          %v4158 = vadd.f32 %v4135, %v4149
          %v4159 = vadd.f32 %v4136, %v4149
          %v4160 = vadd.f32 %v4137, %v4149
          %v4161 = vadd.f32 %v4138, %v4149
          %v4162 = vadd.f32 %v4139, %v4149
          %v4163 = vadd.f32 %v4140, %v4149
          %v4164 = vadd.f32 %v4141, %v4149
          %v4165 = vadd.f32 %v4142, %v4149
          %v4166 = vadd.f32 %v4143, %v4149
          %v4167 = vld [vmem:[%s0] sm:$0xff]
          %v4168 = vld [vmem:[%s0 + $0x8] sm:$0xff]
          %v4169 = vld [vmem:[%s0 + $0x10] sm:$0xff]
          %v4170 = vld [vmem:[%s0 + $0x18] sm:$0xff]
          %v4171 = vld [vmem:[%s0 + $0x20] sm:$0xff]
          %v4172 = vld [vmem:[%s0 + $0x28] sm:$0xff]
          %v4173 = vld [vmem:[%s0 + $0x30] sm:$0xff]
          %v4174 = vld [vmem:[%s0 + $0x38] sm:$0xff]
          %v4175 = vld [vmem:[%s0 + $0x40] sm:$0xff]
          %v4176 = vld [vmem:[%s0 + $0x48] sm:$0xff]
          %v4177 = vld [vmem:[%s0 + $0x50] sm:$0xff]
          %v4178 = vld [vmem:[%s0 + $0x58] sm:$0xff]
          %v4179 = vld [vmem:[%s0 + $0x60] sm:$0xff]
          %v4180 = vld [vmem:[%s0 + $0x68] sm:$0xff]
          %v4181 = vld [vmem:[%s0 + $0x70] sm:$0xff]
          %v4182 = vld [vmem:[%s0 + $0x78] sm:$0xff]
          %v4183 = vmax.f32 %v4151, 0.0
          %v4184 = vmax.f32 %v4152, 0.0
          %v4185 = vmax.f32 %v4153, 0.0
          %v4186 = vmax.f32 %v4154, 0.0
          %v4187 = vmax.f32 %v4155, 0.0
          %v4188 = vmax.f32 %v4156, 0.0
          %v4189 = vmax.f32 %v4157, 0.0
          %v4190 = vmax.f32 %v4158, 0.0
          %v4191 = vmax.f32 %v4159, 0.0
          %v4192 = vmax.f32 %v4160, 0.0
          %v4193 = vmax.f32 %v4161, 0.0
          %v4194 = vmax.f32 %v4162, 0.0
          %v4195 = vmax.f32 %v4163, 0.0
          %v4196 = vmax.f32 %v4164, 0.0
          %v4197 = vmax.f32 %v4165, 0.0
          %v4198 = vmax.f32 %v4166, 0.0
          %v4199 = vadd.f32 %v4167, %v4183
          %v4200 = vadd.f32 %v4168, %v4184
          %v4201 = vadd.f32 %v4169, %v4185
          %v4202 = vadd.f32 %v4170, %v4186
          %v4203 = vadd.f32 %v4171, %v4187
          %v4204 = vadd.f32 %v4172, %v4188
          %v4205 = vadd.f32 %v4173, %v4189
          %v4206 = vadd.f32 %v4174, %v4190
          %v4207 = vadd.f32 %v4175, %v4191
          %v4208 = vadd.f32 %v4176, %v4192
          %v4209 = vadd.f32 %v4177, %v4193
          %v4210 = vadd.f32 %v4178, %v4194
          %v4211 = vadd.f32 %v4179, %v4195
          %v4212 = vadd.f32 %v4180, %v4196
          %v4213 = vadd.f32 %v4181, %v4197
          %v4214 = vadd.f32 %v4182, %v4198
          %4215 = vst [vmem:[#allocation9] sm:$0xff] %v4199
          %4216 = vst [vmem:[#allocation9 + $0x8] sm:$0xff] %v4200
          %4217 = vst [vmem:[#allocation9 + $0x10] sm:$0xff] %v4201
          %4218 = vst [vmem:[#allocation9 + $0x18] sm:$0xff] %v4202
          %4219 = vst [vmem:[#allocation9 + $0x20] sm:$0xff] %v4203
          %4220 = vst [vmem:[#allocation9 + $0x28] sm:$0xff] %v4204
          %4221 = vst [vmem:[#allocation9 + $0x30] sm:$0xff] %v4205
          %4222 = vst [vmem:[#allocation9 + $0x38] sm:$0xff] %v4206
          %4223 = vst [vmem:[#allocation9 + $0x40] sm:$0xff] %v4207
          %4224 = vst [vmem:[#allocation9 + $0x48] sm:$0xff] %v4208
          %4225 = vst [vmem:[#allocation9 + $0x50] sm:$0xff] %v4209
          %4226 = vst [vmem:[#allocation9 + $0x58] sm:$0xff] %v4210
          %4227 = vst [vmem:[#allocation9 + $0x60] sm:$0xff] %v4211
          %4228 = vst [vmem:[#allocation9 + $0x68] sm:$0xff] %v4212
          %4229 = vst [vmem:[#allocation9 + $0x70] sm:$0xff] %v4213
          %4230 = vst [vmem:[#allocation9 + $0x78] sm:$0xff] %v4214
        $region84: #{tpu_custom_call.1} parent=71 // pred_fallthru
          _
        %s4231 = sand.u32 %s355, 1
        %s4232 = scalar_lea.sflag [#allocation11], %s4231
        %s4233 = sand.u32 %s355, 1
        %s4234 = smul.addr %s4233, 512
        %s4235 = scalar_lea.vmem [#allocation10], %s4234
        // Predicated region
        $region85: #{tpu_custom_call.1} parent=71 // pred_check
          %p4236 = pneg %p339
        $region86: #{tpu_custom_call.1} parent=71 // pred_check_branch
          %4238 = sbr.rel (%p4236) target = $region88
        $region87: #{tpu_custom_call.1} parent=71 // pred_region
          %s4240 = ssub.s32 2048, 2048
          %4241 = vsyncadd [#allocation8], %s4240
          %s4242 = sshll.u32 [#allocation9], 4
          %s4243 = int_to_ptr.vmem [resolvable:$true] %s4242
          %4248 = dma.vmem_to_hbm [thread:$0]  %s4243, 2048, %s13, [#allocation8], 128, 128, 8
        $region88: #{tpu_custom_call.1} parent=71 // pred_fallthru
          _
        // Predicated region
        $region89: #{tpu_custom_call.1} parent=71 // pred_check
          %p4249 = pneg %p365
        $region90: #{tpu_custom_call.1} parent=71 // pred_check_branch
          %4251 = sbr.rel (%p4249) target = $region92
        $region91: #{tpu_custom_call.1} parent=71 // pred_region
          %s4252 = smul.u32 64, %s33
          %s4254 = ssub.s32 8192, 8192
          %4255 = vsyncadd %s4232, %s4254
          %s4256 = smul.addr %s4252, 128
          %s4257 = scalar_lea.hbm %s14, %s4256
          %s4258 = sshll.u32 %s4235, 4
          %s4259 = int_to_ptr.vmem [resolvable:$true] %s4258
          %4264 = dma.vmem_to_hbm [thread:$0]  %s4259, 8192, %s4257, %s4232, 128, 128, 8
        $region92: #{tpu_custom_call.1} parent=71 // pred_fallthru
          _
        // Predicated region
        $region93: #{tpu_custom_call.1} parent=71 // pred_check
          %p4265 = pneg %p339
        $region94: #{tpu_custom_call.1} parent=71 // pred_check_branch
          %4267 = sbr.rel (%p4265) target = $region96
        $region95: #{tpu_custom_call.1} parent=71 // pred_region
          %4268 = dma.done [#allocation8], 2048
        $region96: #{tpu_custom_call.1} parent=71 // pred_fallthru
          _
      $region72: #{tpu_custom_call.1} parent=5 // pred_fallthru
        _
      %p4269 = scmp.le.s32.totalorder 2, %s28
      // Predicated region
      $region97: #{tpu_custom_call.1} parent=5 // pred_check
        %p4270 = pneg %p4269
      $region98: #{tpu_custom_call.1} parent=5 // pred_check_branch
        %4272 = sbr.rel (%p4270) target = $region100
      $region99: #{tpu_custom_call.1} parent=5 // pred_region
        %s4273 = ssub.s32 %s28, 2
        // Predicated region
        $region101: #{tpu_custom_call.1} parent=99 // pred_check
          %p4274 = pneg %p371
        $region102: #{tpu_custom_call.1} parent=99 // pred_check_branch
          %4276 = sbr.rel (%p4274) target = $region104
        $region103: #{tpu_custom_call.1} parent=99 // pred_region
          %s4277 = sand.u32 %s356, 1
          %s4278 = scalar_lea.sflag [#allocation11], %s4277
          %s4279 = sand.u32 %s356, 1
          %s4280 = smul.addr %s4279, 512
          %s4281 = scalar_lea.vmem [#allocation10], %s4280
          %4282 = dma.done %s4278, 8192
        $region104: #{tpu_custom_call.1} parent=99 // pred_fallthru
          _
      $region100: #{tpu_custom_call.1} parent=5 // pred_fallthru
        _
    $region6: #{tpu_custom_call.1} parent=1 // loop_footer
      %s32 = sadd.s32 1, %s28
    $region7: #{tpu_custom_call.1} parent=1 // loop_footer_branch
      %27 = sbr.rel target = $region3
    $region8: #{tpu_custom_call.1} parent=1 // loop_exit
      _
    %4283 = vsyncpa [#allocation7], 1
    %s4284 = scalar_lea.sflag [#allocation7], 1
    %4285 = vsyncpa %s4284, 1
    %4286 = vsyncpa [#allocation8], 1
    %s4287 = scalar_lea.sflag [#allocation8], 1
    %4288 = vsyncpa %s4287, 1
    %4289 = vsyncpa [#allocation11], 1
    %s4290 = scalar_lea.sflag [#allocation11], 1
    %4291 = vsyncpa %s4290, 1

</llo_original>
